<compile_context>
chip_gen: v7x
topology: tpu7x:2x2x1
jax: 0.10.0
libtpu: 0.0.40
codegen_flags: <defaults>
</compile_context>

<pallas_src>
import numpy as np
import jax
import jax.numpy as jnp
from jax import lax
from jax.experimental import pallas as pl
from jax.experimental.pallas import tpu as pltpu

EPS = 1e-7
BIG = 1e9


# ----------------------------- in-kernel helpers -----------------------------
def _recip_newton(x):
    """1/x for strictly-positive x: EUP approx reciprocal + one Newton step."""
    r = pl.reciprocal(x, approx=True)
    return r * (2.0 - x * r)


def _pseudo_angle(dx, dy):
    """Monotonic surrogate for atan2(dy, dx); only the ordering matters, so the
    raw approximate (EUP) reciprocal is fine here."""
    denom = jnp.maximum(jnp.abs(dx) + jnp.abs(dy), EPS)
    t = dy * pl.reciprocal(denom, approx=True)
    return jnp.where(dx >= 0.0, t, jnp.where(dy >= 0.0, 2.0 - t, -2.0 - t))


def _roll_rows(v):
    """v[i, :] -> v[(i+1) mod n, :] along the sublane (vertex) axis."""
    return jnp.concatenate([v[1:], v[:1]], axis=0)


def _sort_by_key(key, values):
    """Per-lane stable ascending sort of each (C, B) array in `values` by the
    (C, B) `key`, via integer rank + one-hot permutation.  All O(C^2) sums run
    over the LEADING axis (axis=0) so they lower to plain VPU accumulate-adds
    across vreg tiles rather than XLU cross-sublane reduces."""
    C, B = key.shape
    idx = lax.broadcasted_iota(jnp.int32, (C, B), 0)
    kj, ki = key[:, None, :], key[None, :, :]                 # (C,1,B), (1,C,B)
    ij, ii = idx[:, None, :], idx[None, :, :]
    # less[j, i, b]: element j orders strictly before element i
    less = (kj < ki) | ((kj == ki) & (ij < ii))               # (C, C, B) bool
    rank = jnp.sum(less.astype(jnp.int32), axis=0)            # (C, B) final pos
    sel = rank[:, None, :] == idx[None, :, :]                 # (C_in, C_out, B)
    return [jnp.sum(jnp.where(sel, v[:, None, :], 0.0), axis=0) for v in values]


def _shoelace(x, y):
    """0.5 * |sum cross(p_i, p_{i+1})| along the vertex (sublane) axis."""
    xn, yn = _roll_rows(x), _roll_rows(y)
    return 0.5 * jnp.abs(jnp.sum(x * yn - xn * y, axis=0, keepdims=True))


def _sort_poly(x, y):
    """sort_poly: order vertices CCW around the centroid.  x, y: (N, B)."""
    cx = jnp.mean(x, axis=0, keepdims=True)
    cy = jnp.mean(y, axis=0, keepdims=True)
    ang = _pseudo_angle(x - cx, y - cy)
    return _sort_by_key(ang, [x, y])


def _inside_count(qx, qy, px, py):
    """int32 (Q, B): number of polygon edges whose cross product puts the query
    on the inside (polygon CCW, rows of px/py).  Single broadcast (E, Q, B)
    block, reduced over the leading axis (VPU accumulate)."""
    pxn, pyn = _roll_rows(px), _roll_rows(py)
    ex = (pxn - px)[:, None, :]                   # (E, 1, B) edge vectors
    ey = (pyn - py)[:, None, :]
    dx = qx[None, :, :] - px[:, None, :]          # (E, Q, B)
    dy = qy[None, :, :] - py[:, None, :]
    cr = ex * dy - ey * dx                        # (E, Q, B)
    # TODO(synk): absolute epsilons are not scale-invariant (fine for unit-box inputs)
    return jnp.sum((cr >= -1e-6).astype(jnp.int32), axis=0)   # (Q, B)


def _edge_intersections(ax, ay, bx, by):
    """All pairwise segment intersections of A edges with B edges as one
    straight-line broadcast block.  ax..by: (N, B).
    Returns xs, ys: (N, N, B) float32 and valid: (N, N, B) int32 (0/1);
    leading axis = B-edge index j, middle axis = A-edge index i."""
    axn, ayn = _roll_rows(ax), _roll_rows(ay)
    bxn, byn = _roll_rows(bx), _roll_rows(by)
    rx, ry = axn - ax, ayn - ay                   # A edge vectors (N, B)
    sx, sy = bxn - bx, byn - by                   # B edge vectors (N, B)

    rx3, ry3 = rx[None, :, :], ry[None, :, :]     # (1, N, B)
    ax3, ay3 = ax[None, :, :], ay[None, :, :]
    sx3, sy3 = sx[:, None, :], sy[:, None, :]     # (N, 1, B)
    qpx = bx[:, None, :] - ax3                    # (N, N, B)
    qpy = by[:, None, :] - ay3

    rxs = rx3 * sy3 - ry3 * sx3                   # (N, N, B)
    abs_rxs = jnp.abs(rxs)
    par = abs_rxs < 1e-9
    denom = jnp.where(par, 1.0, abs_rxs)          # strictly positive
    sgn = jnp.where(rxs >= 0.0, 1.0, -1.0)
    inv = _recip_newton(denom) * sgn              # one shared recip for t and u
    t = (qpx * sy3 - qpy * sx3) * inv
    u = (qpx * ry3 - qpy * rx3) * inv
    valid = ((~par) & (t >= -1e-6) & (t <= 1.0 + 1e-6)
             & (u >= -1e-6) & (u <= 1.0 + 1e-6))
    xs = ax3 + t * rx3
    ys = ay3 + t * ry3
    return xs, ys, valid.astype(jnp.int32)


# --------------------------------- the kernel --------------------------------
def _iou_kernel(xy_ref, iou_ref):
    xy = xy_ref[...]                              # (4N, TB) packed planes
    n4, TB = xy.shape
    N = n4 // 4
    px, py = xy[0 * N:1 * N], xy[1 * N:2 * N]
    tx, ty = xy[2 * N:3 * N], xy[3 * N:4 * N]

    # Fused sort_poly + area for pred & target: stack the two polygons along
    # lanes -> one sort / one shoelace on (N, 2*TB).
    xs = jnp.concatenate([px, tx], axis=1)
    ys = jnp.concatenate([py, ty], axis=1)
    sx, sy = _sort_poly(xs, ys)                   # CCW polygons
    areas = _shoelace(sx, sy)                     # (1, 2*TB)
    ax, ay = sx[:, :TB], sy[:, :TB]
    bx, by = sx[:, TB:], sy[:, TB:]
    area_a, area_b = areas[:, :TB], areas[:, TB:]

    # Fused point-in-convex: queries [A | B] against polygons [B | A].
    ox = jnp.concatenate([bx, ax], axis=1)
    oy = jnp.concatenate([by, ay], axis=1)
    cnt_in = _inside_count(sx, sy, ox, oy)        # (N, 2*TB) int32
    a_in_b_i = (cnt_in[:, :TB] == N).astype(jnp.int32)   # (N, TB) 0/1
    b_in_a_i = (cnt_in[:, TB:] == N).astype(jnp.int32)

    # A-edge x B-edge intersections (one broadcast block).
    ex3, ey3, ev3i = _edge_intersections(ax, ay, bx, by)    # (N, N, TB)

    # Candidate vertices of the (convex) intersection polygon.
    cx_ = jnp.concatenate([ax, bx] + [ex3[j] for j in range(N)], axis=0)  # (C, TB)
    cy_ = jnp.concatenate([ay, by] + [ey3[j] for j in range(N)], axis=0)
    valid_i32 = jnp.concatenate(
        [a_in_b_i, b_in_a_i] + [ev3i[j] for j in range(N)], axis=0)       # (C, TB)
    valid = valid_i32 > 0
    C = cx_.shape[0]                              # 2N + N*N
    K = 2 * N                                     # convex case: at most 2N valid

    cnt = jnp.sum(valid_i32, axis=0, keepdims=True)          # (1, TB) #valid

    # Compact valid candidates into K rows: exclusive prefix rank (stable by
    # candidate index) + one-hot scatter.  Both big sums run over axis 0 (VPU).
    idx_c = lax.broadcasted_iota(jnp.int32, (C, TB), 0)
    tri = idx_c[:, None, :] < idx_c[None, :, :]              # (C, C, TB) j<i
    crank = jnp.sum(jnp.where(tri, valid_i32[:, None, :], 0), axis=0)     # (C, TB)
    crank = jnp.where(valid, crank, C)            # invalid -> never selected
    # TODO(synk): degenerate touching configs with > 2N coincident valid
    # candidates drop the duplicates here (area is unaffected in practice).
    pos_k = lax.broadcasted_iota(jnp.int32, (K, TB), 0)
    sel = crank[:, None, :] == pos_k[None, :, :]             # (C, K, TB)
    compx = jnp.sum(jnp.where(sel, cx_[:, None, :], 0.0), axis=0)   # (K, TB)
    compy = jnp.sum(jnp.where(sel, cy_[:, None, :], 0.0), axis=0)

    # Centroid of the valid candidates (tail rows are zero, so a plain sum).
    kf = cnt.astype(jnp.float32)
    inv_k = pl.reciprocal(jnp.maximum(kf, 1.0), approx=True)
    ccx = jnp.sum(compx, axis=0, keepdims=True) * inv_k      # (1, TB)
    ccy = jnp.sum(compy, axis=0, keepdims=True) * inv_k

    # Angle-sort the compacted candidates; unfilled rows go to the tail.
    filled = pos_k < cnt                                     # (K, TB) bool
    key = jnp.where(filled, _pseudo_angle(compx - ccx, compy - ccy), BIG)
    rsx, rsy = _sort_by_key(key, [compx, compy])
    qx = jnp.where(filled, rsx, rsx[0:1, :])      # pad tail with first vertex
    qy = jnp.where(filled, rsy, rsy[0:1, :])
    inter = _shoelace(qx, qy)                                # (1, TB)
    inter = jnp.where(cnt >= 3, inter, 0.0)

    union = area_a + area_b - inter
    # Exact divide for the final ratio (tiny array; keeps accuracy margin).
    iou = jnp.where(union > 1e-9, inter / jnp.maximum(union, 1e-9), 0.0)
    iou_ref[...] = iou


# --------------------------------- wrapper ------------------------------------
def _pick_block(B, block_b):
    """Lane block: multiple of 128, as wide as reasonable to amortize the
    ~0.35us grid-step overhead, but keep >= 2 grid steps when the padded batch
    allows it so the 'parallel' axis can shard across both v7x TensorCores."""
    b128 = ((max(B, 1) + 127) // 128) * 128
    blk = max(128, min((block_b // 128) * 128, b128))
    if b128 // blk < 2 and b128 >= 256:
        blk = max(128, ((b128 // 2) // 128) * 128)
    return blk


def iou_pallas(pred, target, *, block_b=512):
    """pred, target: (B, N, 2) float32 polygons.  Returns scalar mean IoU."""
    pred = jnp.asarray(pred, jnp.float32)
    target = jnp.asarray(target, jnp.float32)
    B, N, _ = pred.shape

    blk = _pick_block(B, block_b)
    b_pad = ((B + blk - 1) // blk) * blk

    # Pack the four coordinate planes into one (4N, b_pad) array, batch on lanes.
    px = jnp.transpose(pred[..., 0])              # (N, B)
    py = jnp.transpose(pred[..., 1])
    tx = jnp.transpose(target[..., 0])
    ty = jnp.transpose(target[..., 1])
    planes = jnp.concatenate([px, py, tx, ty], axis=0)        # (4N, B)
    planes = jnp.pad(planes, ((0, 0), (0, b_pad - B)))        # (4N, b_pad)

    grid = (b_pad // blk,)
    in_specs = [pl.BlockSpec((4 * N, blk), lambda i: (0, i))]
    out_specs = pl.BlockSpec((1, blk), lambda i: (0, i))

    C = 2 * N + N * N
    K = 2 * N
    cost = pl.CostEstimate(
        flops=int(b_pad * (4 * C * C + 8 * C * K + 10 * K * K
                           + 30 * N * N + 60 * N + 150)),
        transcendentals=int(b_pad * (2 * N + N * N + K + 4)),
        bytes_accessed=int(b_pad * (4 * N * 4 + 4)))

    iou_lanes = pl.pallas_call(
        _iou_kernel,
        out_shape=jax.ShapeDtypeStruct((1, b_pad), jnp.float32),
        grid=grid,
        in_specs=in_specs,
        out_specs=out_specs,
        compiler_params=pltpu.CompilerParams(
            dimension_semantics=("parallel",),
            vmem_limit_bytes=32 * 1024 * 1024),
        cost_estimate=cost,
    )(planes)

    # Padded lanes are sliced away so the mean uses the true B.
    return jnp.sum(iou_lanes[0, :B]) / B


# ------------------------- numpy reference (no shapely) ----------------------
def _np_sort_poly(p):
    c = p.mean(0)
    ang = np.arctan2(p[:, 1] - c[1], p[:, 0] - c[0])
    return p[np.argsort(ang)]


def _np_area(p):
    x, y = p[:, 0], p[:, 1]
    return 0.5 * abs(np.sum(x * np.roll(y, -1) - np.roll(x, -1) * y))


def _np_clip(subject, clip):
    """Sutherland-Hodgman: clip `subject` by convex CCW polygon `clip`."""
    out = [tuple(p) for p in subject]
    n = len(clip)
    for j in range(n):
        if not out:
            break
        a, b = clip[j], clip[(j + 1) % n]

        def inside(p):
            return ((b[0] - a[0]) * (p[1] - a[1])
                    - (b[1] - a[1]) * (p[0] - a[0])) >= -1e-12

        def line_inter(p, q):
            r = (q[0] - p[0], q[1] - p[1])
            s = (b[0] - a[0], b[1] - a[1])
            rxs = r[0] * s[1] - r[1] * s[0]
            t = ((a[0] - p[0]) * s[1] - (a[1] - p[1]) * s[0]) / rxs
            return (p[0] + t * r[0], p[1] + t * r[1])

        inp, out = out, []
        for i in range(len(inp)):
            cur, prev = inp[i], inp[i - 1]
            if inside(cur):
                if not inside(prev):
                    out.append(line_inter(prev, cur))
                out.append(cur)
            elif inside(prev):
                out.append(line_inter(prev, cur))
    return np.array(out, np.float64) if len(out) >= 3 else np.zeros((0, 2))


def iou_reference(pred, target):
    total = 0.0
    for i in range(pred.shape[0]):
        a = _np_sort_poly(np.asarray(pred[i], np.float64))
        b = _np_sort_poly(np.asarray(target[i], np.float64))
        clipped = _np_clip(a, b)
        inter = _np_area(clipped) if len(clipped) >= 3 else 0.0
        union = _np_area(a) + _np_area(b) - inter
        total += inter / union if union > 0 else 0.0
    return total / pred.shape[0]


# ------------------------------------ main ------------------------------------
if __name__ == "__main__":
    B, N = 8, 4
    key = jax.random.PRNGKey(0)
    k1, k2 = jax.random.split(key)

    def make_quads(k):
        # random rotated rectangles (always convex, like the reference expects)
        kc, ks, kt = jax.random.split(k, 3)
        centers = jax.random.uniform(kc, (B, 1, 2), minval=0.35, maxval=0.65)
        half = jax.random.uniform(ks, (B, 1, 2), minval=0.15, maxval=0.30)
        theta = jax.random.uniform(kt, (B, 1), minval=0.0, maxval=jnp.pi)
        corners = jnp.array([[-1., -1.], [1., -1.], [1., 1.], [-1., 1.]])
        pts = corners[None] * half                         # (B, 4, 2)
        c, s = jnp.cos(theta), jnp.sin(theta)
        rx = pts[..., 0] * c - pts[..., 1] * s
        ry = pts[..., 0] * s + pts[..., 1] * c
        return (centers + jnp.stack([rx, ry], axis=-1)).astype(jnp.float32)

    pred = make_quads(k1)
    target = make_quads(k2)

    result = jax.block_until_ready(iou_pallas(pred, target))
    ref = iou_reference(np.asarray(pred), np.asarray(target))

    assert np.isfinite(float(result)), result
    assert abs(float(result) - ref) < 2e-3, (float(result), ref)
    print("KERNEL_OK")
</pallas_src>

<mosaic_0001>
module attributes {stable_mosaic.version = 11 : i64} {
  func.func @_iou_kernel(%arg0: i32, %arg1: memref<16x128xf32, #tpu.memory_space<vmem>>, %arg2: memref<1x128xf32, #tpu.memory_space<vmem>>) attributes {dimension_semantics = [#tpu.dimension_semantics<parallel>], iteration_bounds = array<i64: 1>, scalar_prefetch = 0 : i64, scratch_operands = 0 : i64, tpu.core_type = #tpu.core_type<tc>, window_params = [{transform_indices = @transform_0, window_bounds = array<i64: 16, 128>}, {transform_indices = @transform_1, window_bounds = array<i64: 1, 128>}]} {
    %c0 = arith.constant 0 : index
    %c0_0 = arith.constant 0 : index
    %0 = vector.load %arg1[%c0, %c0_0] : memref<16x128xf32, #tpu.memory_space<vmem>>, vector<16x128xf32>
    %1 = vector.extract_strided_slice %0 {offsets = [0, 0], sizes = [4, 128], strides = [1, 1]} : vector<16x128xf32> to vector<4x128xf32>
    %2 = vector.extract_strided_slice %0 {offsets = [4, 0], sizes = [4, 128], strides = [1, 1]} : vector<16x128xf32> to vector<4x128xf32>
    %3 = vector.extract_strided_slice %0 {offsets = [8, 0], sizes = [4, 128], strides = [1, 1]} : vector<16x128xf32> to vector<4x128xf32>
    %4 = vector.extract_strided_slice %0 {offsets = [12, 0], sizes = [4, 128], strides = [1, 1]} : vector<16x128xf32> to vector<4x128xf32>
    %5 = tpu.concatenate %1, %3 in 1 : vector<4x128xf32>, vector<4x128xf32> -> vector<4x256xf32>
    %6 = tpu.concatenate %2, %4 in 1 : vector<4x128xf32>, vector<4x128xf32> -> vector<4x256xf32>
    %cst = arith.constant dense<0.000000e+00> : vector<256xf32>
    %7 = vector.multi_reduction <add>, %5, %cst [0] : vector<4x256xf32> to vector<256xf32>
    %8 = vector.shape_cast %7 : vector<256xf32> to vector<1x256xf32>
    %cst_1 = arith.constant 4.000000e+00 : f32
    %9 = vector.broadcast %cst_1 : f32 to vector<1x256xf32>
    %10 = arith.divf %8, %9 : vector<1x256xf32>
    %cst_2 = arith.constant dense<0.000000e+00> : vector<256xf32>
    %11 = vector.multi_reduction <add>, %6, %cst_2 [0] : vector<4x256xf32> to vector<256xf32>
    %12 = vector.shape_cast %11 : vector<256xf32> to vector<1x256xf32>
    %cst_3 = arith.constant 4.000000e+00 : f32
    %13 = vector.broadcast %cst_3 : f32 to vector<1x256xf32>
    %14 = arith.divf %12, %13 : vector<1x256xf32>
    %15 = vector.broadcast %10 : vector<1x256xf32> to vector<4x256xf32>
    %16 = arith.subf %5, %15 : vector<4x256xf32>
    %17 = vector.broadcast %14 : vector<1x256xf32> to vector<4x256xf32>
    %18 = arith.subf %6, %17 : vector<4x256xf32>
    %19 = math.absf %16 : vector<4x256xf32>
    %20 = math.absf %18 : vector<4x256xf32>
    %21 = arith.addf %19, %20 : vector<4x256xf32>
    %cst_4 = arith.constant 1.000000e-07 : f32
    %22 = vector.broadcast %cst_4 : f32 to vector<4x256xf32>
    %23 = arith.maximumf %21, %22 : vector<4x256xf32>
    %24 = tpu.reciprocal %23 {approx = true} : vector<4x256xf32> -> vector<4x256xf32>
    %25 = arith.mulf %18, %24 : vector<4x256xf32>
    %cst_5 = arith.constant 0.000000e+00 : f32
    %26 = vector.broadcast %cst_5 : f32 to vector<4x256xf32>
    %27 = arith.cmpf oge, %16, %26 : vector<4x256xf32>
    %cst_6 = arith.constant 0.000000e+00 : f32
    %28 = vector.broadcast %cst_6 : f32 to vector<4x256xf32>
    %29 = arith.cmpf oge, %18, %28 : vector<4x256xf32>
    %cst_7 = arith.constant 2.000000e+00 : f32
    %30 = vector.broadcast %cst_7 : f32 to vector<4x256xf32>
    %31 = arith.subf %30, %25 : vector<4x256xf32>
    %cst_8 = arith.constant -2.000000e+00 : f32
    %32 = vector.broadcast %cst_8 : f32 to vector<4x256xf32>
    %33 = arith.subf %32, %25 : vector<4x256xf32>
    %34 = arith.select %29, %31, %33 : vector<4x256xi1>, vector<4x256xf32>
    %35 = arith.select %27, %25, %34 : vector<4x256xi1>, vector<4x256xf32>
    %36 = tpu.iota {dimensions = array<i32: 0>} : vector<4x256xi32>
    %37 = vector.shape_cast %35 : vector<4x256xf32> to vector<4x1x256xf32>
    %38 = vector.shape_cast %35 : vector<4x256xf32> to vector<1x4x256xf32>
    %39 = vector.shape_cast %36 : vector<4x256xi32> to vector<4x1x256xi32>
    %40 = vector.shape_cast %36 : vector<4x256xi32> to vector<1x4x256xi32>
    %41 = vector.broadcast %37 : vector<4x1x256xf32> to vector<4x4x256xf32>
    %42 = vector.broadcast %38 : vector<1x4x256xf32> to vector<4x4x256xf32>
    %43 = arith.cmpf olt, %41, %42 : vector<4x4x256xf32>
    %44 = vector.broadcast %37 : vector<4x1x256xf32> to vector<4x4x256xf32>
    %45 = vector.broadcast %38 : vector<1x4x256xf32> to vector<4x4x256xf32>
    %46 = arith.cmpf oeq, %44, %45 : vector<4x4x256xf32>
    %47 = vector.broadcast %39 : vector<4x1x256xi32> to vector<4x4x256xi32>
    %48 = vector.broadcast %40 : vector<1x4x256xi32> to vector<4x4x256xi32>
    %49 = arith.cmpi slt, %47, %48 : vector<4x4x256xi32>
    %50 = arith.andi %46, %49 : vector<4x4x256xi1>
    %51 = arith.ori %43, %50 : vector<4x4x256xi1>
    %52 = arith.extui %51 : vector<4x4x256xi1> to vector<4x4x256xi32>
    %cst_9 = arith.constant dense<0> : vector<4x256xi32>
    %53 = vector.multi_reduction <add>, %52, %cst_9 [0] : vector<4x4x256xi32> to vector<4x256xi32>
    %54 = vector.shape_cast %53 : vector<4x256xi32> to vector<4x1x256xi32>
    %55 = vector.shape_cast %36 : vector<4x256xi32> to vector<1x4x256xi32>
    %56 = vector.broadcast %54 : vector<4x1x256xi32> to vector<4x4x256xi32>
    %57 = vector.broadcast %55 : vector<1x4x256xi32> to vector<4x4x256xi32>
    %58 = arith.cmpi eq, %56, %57 : vector<4x4x256xi32>
    %59 = vector.shape_cast %5 : vector<4x256xf32> to vector<4x1x256xf32>
    %cst_10 = arith.constant 0.000000e+00 : f32
    %60 = vector.shape_cast %59 : vector<4x1x256xf32> to vector<4x1x256xf32>
    %61 = vector.broadcast %60 : vector<4x1x256xf32> to vector<4x4x256xf32>
    %62 = vector.broadcast %cst_10 : f32 to vector<4x4x256xf32>
    %63 = arith.select %58, %61, %62 : vector<4x4x256xi1>, vector<4x4x256xf32>
    %cst_11 = arith.constant dense<0.000000e+00> : vector<4x256xf32>
    %64 = vector.multi_reduction <add>, %63, %cst_11 [0] : vector<4x4x256xf32> to vector<4x256xf32>
    %65 = vector.shape_cast %6 : vector<4x256xf32> to vector<4x1x256xf32>
    %cst_12 = arith.constant 0.000000e+00 : f32
    %66 = vector.shape_cast %65 : vector<4x1x256xf32> to vector<4x1x256xf32>
    %67 = vector.broadcast %66 : vector<4x1x256xf32> to vector<4x4x256xf32>
    %68 = vector.broadcast %cst_12 : f32 to vector<4x4x256xf32>
    %69 = arith.select %58, %67, %68 : vector<4x4x256xi1>, vector<4x4x256xf32>
    %cst_13 = arith.constant dense<0.000000e+00> : vector<4x256xf32>
    %70 = vector.multi_reduction <add>, %69, %cst_13 [0] : vector<4x4x256xf32> to vector<4x256xf32>
    %71 = vector.extract_strided_slice %64 {offsets = [1, 0], sizes = [3, 256], strides = [1, 1]} : vector<4x256xf32> to vector<3x256xf32>
    %72 = vector.extract_strided_slice %64 {offsets = [0, 0], sizes = [1, 256], strides = [1, 1]} : vector<4x256xf32> to vector<1x256xf32>
    %73 = tpu.concatenate %71, %72 in 0 : vector<3x256xf32>, vector<1x256xf32> -> vector<4x256xf32>
    %74 = vector.extract_strided_slice %70 {offsets = [1, 0], sizes = [3, 256], strides = [1, 1]} : vector<4x256xf32> to vector<3x256xf32>
    %75 = vector.extract_strided_slice %70 {offsets = [0, 0], sizes = [1, 256], strides = [1, 1]} : vector<4x256xf32> to vector<1x256xf32>
    %76 = tpu.concatenate %74, %75 in 0 : vector<3x256xf32>, vector<1x256xf32> -> vector<4x256xf32>
    %77 = arith.mulf %64, %76 : vector<4x256xf32>
    %78 = arith.mulf %73, %70 : vector<4x256xf32>
    %79 = arith.subf %77, %78 : vector<4x256xf32>
    %cst_14 = arith.constant dense<0.000000e+00> : vector<256xf32>
    %80 = vector.multi_reduction <add>, %79, %cst_14 [0] : vector<4x256xf32> to vector<256xf32>
    %81 = vector.shape_cast %80 : vector<256xf32> to vector<1x256xf32>
    %82 = math.absf %81 : vector<1x256xf32>
    %cst_15 = arith.constant 5.000000e-01 : f32
    %83 = vector.broadcast %cst_15 : f32 to vector<1x256xf32>
    %84 = arith.mulf %83, %82 : vector<1x256xf32>
    %85 = vector.extract_strided_slice %64 {offsets = [0, 0], sizes = [4, 128], strides = [1, 1]} : vector<4x256xf32> to vector<4x128xf32>
    %86 = vector.extract_strided_slice %70 {offsets = [0, 0], sizes = [4, 128], strides = [1, 1]} : vector<4x256xf32> to vector<4x128xf32>
    %87 = vector.extract_strided_slice %64 {offsets = [0, 128], sizes = [4, 128], strides = [1, 1]} : vector<4x256xf32> to vector<4x128xf32>
    %88 = vector.extract_strided_slice %70 {offsets = [0, 128], sizes = [4, 128], strides = [1, 1]} : vector<4x256xf32> to vector<4x128xf32>
    %89 = vector.extract_strided_slice %84 {offsets = [0, 0], sizes = [1, 128], strides = [1, 1]} : vector<1x256xf32> to vector<1x128xf32>
    %90 = vector.extract_strided_slice %84 {offsets = [0, 128], sizes = [1, 128], strides = [1, 1]} : vector<1x256xf32> to vector<1x128xf32>
    %91 = tpu.concatenate %87, %85 in 1 : vector<4x128xf32>, vector<4x128xf32> -> vector<4x256xf32>
    %92 = tpu.concatenate %88, %86 in 1 : vector<4x128xf32>, vector<4x128xf32> -> vector<4x256xf32>
    %93 = vector.extract_strided_slice %91 {offsets = [1, 0], sizes = [3, 256], strides = [1, 1]} : vector<4x256xf32> to vector<3x256xf32>
    %94 = vector.extract_strided_slice %91 {offsets = [0, 0], sizes = [1, 256], strides = [1, 1]} : vector<4x256xf32> to vector<1x256xf32>
    %95 = tpu.concatenate %93, %94 in 0 : vector<3x256xf32>, vector<1x256xf32> -> vector<4x256xf32>
    %96 = vector.extract_strided_slice %92 {offsets = [1, 0], sizes = [3, 256], strides = [1, 1]} : vector<4x256xf32> to vector<3x256xf32>
    %97 = vector.extract_strided_slice %92 {offsets = [0, 0], sizes = [1, 256], strides = [1, 1]} : vector<4x256xf32> to vector<1x256xf32>
    %98 = tpu.concatenate %96, %97 in 0 : vector<3x256xf32>, vector<1x256xf32> -> vector<4x256xf32>
    %99 = arith.subf %95, %91 : vector<4x256xf32>
    %100 = vector.shape_cast %99 : vector<4x256xf32> to vector<4x1x256xf32>
    %101 = arith.subf %98, %92 : vector<4x256xf32>
    %102 = vector.shape_cast %101 : vector<4x256xf32> to vector<4x1x256xf32>
    %103 = vector.shape_cast %64 : vector<4x256xf32> to vector<1x4x256xf32>
    %104 = vector.shape_cast %91 : vector<4x256xf32> to vector<4x1x256xf32>
    %105 = vector.broadcast %103 : vector<1x4x256xf32> to vector<4x4x256xf32>
    %106 = vector.broadcast %104 : vector<4x1x256xf32> to vector<4x4x256xf32>
    %107 = arith.subf %105, %106 : vector<4x4x256xf32>
    %108 = vector.shape_cast %70 : vector<4x256xf32> to vector<1x4x256xf32>
    %109 = vector.shape_cast %92 : vector<4x256xf32> to vector<4x1x256xf32>
    %110 = vector.broadcast %108 : vector<1x4x256xf32> to vector<4x4x256xf32>
    %111 = vector.broadcast %109 : vector<4x1x256xf32> to vector<4x4x256xf32>
    %112 = arith.subf %110, %111 : vector<4x4x256xf32>
    %113 = vector.broadcast %100 : vector<4x1x256xf32> to vector<4x4x256xf32>
    %114 = arith.mulf %113, %112 : vector<4x4x256xf32>
    %115 = vector.broadcast %102 : vector<4x1x256xf32> to vector<4x4x256xf32>
    %116 = arith.mulf %115, %107 : vector<4x4x256xf32>
    %117 = arith.subf %114, %116 : vector<4x4x256xf32>
    %cst_16 = arith.constant -9.99999997E-7 : f32
    %118 = vector.broadcast %cst_16 : f32 to vector<4x4x256xf32>
    %119 = arith.cmpf oge, %117, %118 : vector<4x4x256xf32>
    %120 = arith.extui %119 : vector<4x4x256xi1> to vector<4x4x256xi32>
    %cst_17 = arith.constant dense<0> : vector<4x256xi32>
    %121 = vector.multi_reduction <add>, %120, %cst_17 [0] : vector<4x4x256xi32> to vector<4x256xi32>
    %122 = vector.extract_strided_slice %121 {offsets = [0, 0], sizes = [4, 128], strides = [1, 1]} : vector<4x256xi32> to vector<4x128xi32>
    %c4_i32 = arith.constant 4 : i32
    %123 = vector.broadcast %c4_i32 : i32 to vector<4x128xi32>
    %124 = arith.cmpi eq, %122, %123 : vector<4x128xi32>
    %125 = arith.extui %124 : vector<4x128xi1> to vector<4x128xi32>
    %126 = vector.extract_strided_slice %121 {offsets = [0, 128], sizes = [4, 128], strides = [1, 1]} : vector<4x256xi32> to vector<4x128xi32>
    %c4_i32_18 = arith.constant 4 : i32
    %127 = vector.broadcast %c4_i32_18 : i32 to vector<4x128xi32>
    %128 = arith.cmpi eq, %126, %127 : vector<4x128xi32>
    %129 = arith.extui %128 : vector<4x128xi1> to vector<4x128xi32>
    %130 = vector.extract_strided_slice %85 {offsets = [1, 0], sizes = [3, 128], strides = [1, 1]} : vector<4x128xf32> to vector<3x128xf32>
    %131 = vector.extract_strided_slice %85 {offsets = [0, 0], sizes = [1, 128], strides = [1, 1]} : vector<4x128xf32> to vector<1x128xf32>
    %132 = tpu.concatenate %130, %131 in 0 : vector<3x128xf32>, vector<1x128xf32> -> vector<4x128xf32>
    %133 = vector.extract_strided_slice %86 {offsets = [1, 0], sizes = [3, 128], strides = [1, 1]} : vector<4x128xf32> to vector<3x128xf32>
    %134 = vector.extract_strided_slice %86 {offsets = [0, 0], sizes = [1, 128], strides = [1, 1]} : vector<4x128xf32> to vector<1x128xf32>
    %135 = tpu.concatenate %133, %134 in 0 : vector<3x128xf32>, vector<1x128xf32> -> vector<4x128xf32>
    %136 = vector.extract_strided_slice %87 {offsets = [1, 0], sizes = [3, 128], strides = [1, 1]} : vector<4x128xf32> to vector<3x128xf32>
    %137 = vector.extract_strided_slice %87 {offsets = [0, 0], sizes = [1, 128], strides = [1, 1]} : vector<4x128xf32> to vector<1x128xf32>
    %138 = tpu.concatenate %136, %137 in 0 : vector<3x128xf32>, vector<1x128xf32> -> vector<4x128xf32>
    %139 = vector.extract_strided_slice %88 {offsets = [1, 0], sizes = [3, 128], strides = [1, 1]} : vector<4x128xf32> to vector<3x128xf32>
    %140 = vector.extract_strided_slice %88 {offsets = [0, 0], sizes = [1, 128], strides = [1, 1]} : vector<4x128xf32> to vector<1x128xf32>
    %141 = tpu.concatenate %139, %140 in 0 : vector<3x128xf32>, vector<1x128xf32> -> vector<4x128xf32>
    %142 = arith.subf %132, %85 : vector<4x128xf32>
    %143 = arith.subf %135, %86 : vector<4x128xf32>
    %144 = arith.subf %138, %87 : vector<4x128xf32>
    %145 = arith.subf %141, %88 : vector<4x128xf32>
    %146 = vector.shape_cast %142 : vector<4x128xf32> to vector<1x4x128xf32>
    %147 = vector.shape_cast %143 : vector<4x128xf32> to vector<1x4x128xf32>
    %148 = vector.shape_cast %85 : vector<4x128xf32> to vector<1x4x128xf32>
    %149 = vector.shape_cast %86 : vector<4x128xf32> to vector<1x4x128xf32>
    %150 = vector.shape_cast %144 : vector<4x128xf32> to vector<4x1x128xf32>
    %151 = vector.shape_cast %145 : vector<4x128xf32> to vector<4x1x128xf32>
    %152 = vector.shape_cast %87 : vector<4x128xf32> to vector<4x1x128xf32>
    %153 = vector.broadcast %152 : vector<4x1x128xf32> to vector<4x4x128xf32>
    %154 = vector.broadcast %148 : vector<1x4x128xf32> to vector<4x4x128xf32>
    %155 = arith.subf %153, %154 : vector<4x4x128xf32>
    %156 = vector.shape_cast %88 : vector<4x128xf32> to vector<4x1x128xf32>
    %157 = vector.broadcast %156 : vector<4x1x128xf32> to vector<4x4x128xf32>
    %158 = vector.broadcast %149 : vector<1x4x128xf32> to vector<4x4x128xf32>
    %159 = arith.subf %157, %158 : vector<4x4x128xf32>
    %160 = vector.broadcast %146 : vector<1x4x128xf32> to vector<4x4x128xf32>
    %161 = vector.broadcast %151 : vector<4x1x128xf32> to vector<4x4x128xf32>
    %162 = arith.mulf %160, %161 : vector<4x4x128xf32>
    %163 = vector.broadcast %147 : vector<1x4x128xf32> to vector<4x4x128xf32>
    %164 = vector.broadcast %150 : vector<4x1x128xf32> to vector<4x4x128xf32>
    %165 = arith.mulf %163, %164 : vector<4x4x128xf32>
    %166 = arith.subf %162, %165 : vector<4x4x128xf32>
    %167 = math.absf %166 : vector<4x4x128xf32>
    %cst_19 = arith.constant 9.99999971E-10 : f32
    %168 = vector.broadcast %cst_19 : f32 to vector<4x4x128xf32>
    %169 = arith.cmpf olt, %167, %168 : vector<4x4x128xf32>
    %cst_20 = arith.constant 1.000000e+00 : f32
    %170 = vector.broadcast %cst_20 : f32 to vector<4x4x128xf32>
    %171 = arith.select %169, %170, %167 : vector<4x4x128xi1>, vector<4x4x128xf32>
    %cst_21 = arith.constant 0.000000e+00 : f32
    %172 = vector.broadcast %cst_21 : f32 to vector<4x4x128xf32>
    %173 = arith.cmpf oge, %166, %172 : vector<4x4x128xf32>
    %cst_22 = arith.constant 1.000000e+00 : f32
    %cst_23 = arith.constant -1.000000e+00 : f32
    %174 = vector.broadcast %cst_22 : f32 to vector<4x4x128xf32>
    %175 = vector.broadcast %cst_23 : f32 to vector<4x4x128xf32>
    %176 = arith.select %173, %174, %175 : vector<4x4x128xi1>, vector<4x4x128xf32>
    %177 = tpu.reciprocal %171 {approx = true} : vector<4x4x128xf32> -> vector<4x4x128xf32>
    %178 = arith.mulf %171, %177 : vector<4x4x128xf32>
    %cst_24 = arith.constant 2.000000e+00 : f32
    %179 = vector.broadcast %cst_24 : f32 to vector<4x4x128xf32>
    %180 = arith.subf %179, %178 : vector<4x4x128xf32>
    %181 = arith.mulf %177, %180 : vector<4x4x128xf32>
    %182 = arith.mulf %181, %176 : vector<4x4x128xf32>
    %183 = vector.broadcast %151 : vector<4x1x128xf32> to vector<4x4x128xf32>
    %184 = arith.mulf %155, %183 : vector<4x4x128xf32>
    %185 = vector.broadcast %150 : vector<4x1x128xf32> to vector<4x4x128xf32>
    %186 = arith.mulf %159, %185 : vector<4x4x128xf32>
    %187 = arith.subf %184, %186 : vector<4x4x128xf32>
    %188 = arith.mulf %187, %182 : vector<4x4x128xf32>
    %189 = vector.broadcast %147 : vector<1x4x128xf32> to vector<4x4x128xf32>
    %190 = arith.mulf %155, %189 : vector<4x4x128xf32>
    %191 = vector.broadcast %146 : vector<1x4x128xf32> to vector<4x4x128xf32>
    %192 = arith.mulf %159, %191 : vector<4x4x128xf32>
    %193 = arith.subf %190, %192 : vector<4x4x128xf32>
    %194 = arith.mulf %193, %182 : vector<4x4x128xf32>
    %cst_25 = arith.constant dense<true> : vector<4x4x128xi1>
    %195 = arith.xori %169, %cst_25 : vector<4x4x128xi1>
    %cst_26 = arith.constant -9.99999997E-7 : f32
    %196 = vector.broadcast %cst_26 : f32 to vector<4x4x128xf32>
    %197 = arith.cmpf oge, %188, %196 : vector<4x4x128xf32>
    %198 = arith.andi %195, %197 : vector<4x4x128xi1>
    %cst_27 = arith.constant 1.00000095 : f32
    %199 = vector.broadcast %cst_27 : f32 to vector<4x4x128xf32>
    %200 = arith.cmpf ole, %188, %199 : vector<4x4x128xf32>
    %201 = arith.andi %198, %200 : vector<4x4x128xi1>
    %cst_28 = arith.constant -9.99999997E-7 : f32
    %202 = vector.broadcast %cst_28 : f32 to vector<4x4x128xf32>
    %203 = arith.cmpf oge, %194, %202 : vector<4x4x128xf32>
    %204 = arith.andi %201, %203 : vector<4x4x128xi1>
    %cst_29 = arith.constant 1.00000095 : f32
    %205 = vector.broadcast %cst_29 : f32 to vector<4x4x128xf32>
    %206 = arith.cmpf ole, %194, %205 : vector<4x4x128xf32>
    %207 = arith.andi %204, %206 : vector<4x4x128xi1>
    %208 = vector.broadcast %146 : vector<1x4x128xf32> to vector<4x4x128xf32>
    %209 = arith.mulf %188, %208 : vector<4x4x128xf32>
    %210 = vector.broadcast %148 : vector<1x4x128xf32> to vector<4x4x128xf32>
    %211 = arith.addf %210, %209 : vector<4x4x128xf32>
    %212 = vector.broadcast %147 : vector<1x4x128xf32> to vector<4x4x128xf32>
    %213 = arith.mulf %188, %212 : vector<4x4x128xf32>
    %214 = vector.broadcast %149 : vector<1x4x128xf32> to vector<4x4x128xf32>
    %215 = arith.addf %214, %213 : vector<4x4x128xf32>
    %216 = arith.extui %207 : vector<4x4x128xi1> to vector<4x4x128xi32>
    %217 = vector.extract_strided_slice %211 {offsets = [0, 0, 0], sizes = [1, 4, 128], strides = [1, 1, 1]} : vector<4x4x128xf32> to vector<1x4x128xf32>
    %218 = vector.shape_cast %217 : vector<1x4x128xf32> to vector<4x128xf32>
    %219 = vector.extract_strided_slice %211 {offsets = [1, 0, 0], sizes = [1, 4, 128], strides = [1, 1, 1]} : vector<4x4x128xf32> to vector<1x4x128xf32>
    %220 = vector.shape_cast %219 : vector<1x4x128xf32> to vector<4x128xf32>
    %221 = vector.extract_strided_slice %211 {offsets = [2, 0, 0], sizes = [1, 4, 128], strides = [1, 1, 1]} : vector<4x4x128xf32> to vector<1x4x128xf32>
    %222 = vector.shape_cast %221 : vector<1x4x128xf32> to vector<4x128xf32>
    %223 = vector.extract_strided_slice %211 {offsets = [3, 0, 0], sizes = [1, 4, 128], strides = [1, 1, 1]} : vector<4x4x128xf32> to vector<1x4x128xf32>
    %224 = vector.shape_cast %223 : vector<1x4x128xf32> to vector<4x128xf32>
    %225 = tpu.concatenate %85, %87, %218, %220, %222, %224 in 0 : vector<4x128xf32>, vector<4x128xf32>, vector<4x128xf32>, vector<4x128xf32>, vector<4x128xf32>, vector<4x128xf32> -> vector<24x128xf32>
    %226 = vector.extract_strided_slice %215 {offsets = [0, 0, 0], sizes = [1, 4, 128], strides = [1, 1, 1]} : vector<4x4x128xf32> to vector<1x4x128xf32>
    %227 = vector.shape_cast %226 : vector<1x4x128xf32> to vector<4x128xf32>
    %228 = vector.extract_strided_slice %215 {offsets = [1, 0, 0], sizes = [1, 4, 128], strides = [1, 1, 1]} : vector<4x4x128xf32> to vector<1x4x128xf32>
    %229 = vector.shape_cast %228 : vector<1x4x128xf32> to vector<4x128xf32>
    %230 = vector.extract_strided_slice %215 {offsets = [2, 0, 0], sizes = [1, 4, 128], strides = [1, 1, 1]} : vector<4x4x128xf32> to vector<1x4x128xf32>
    %231 = vector.shape_cast %230 : vector<1x4x128xf32> to vector<4x128xf32>
    %232 = vector.extract_strided_slice %215 {offsets = [3, 0, 0], sizes = [1, 4, 128], strides = [1, 1, 1]} : vector<4x4x128xf32> to vector<1x4x128xf32>
    %233 = vector.shape_cast %232 : vector<1x4x128xf32> to vector<4x128xf32>
    %234 = tpu.concatenate %86, %88, %227, %229, %231, %233 in 0 : vector<4x128xf32>, vector<4x128xf32>, vector<4x128xf32>, vector<4x128xf32>, vector<4x128xf32>, vector<4x128xf32> -> vector<24x128xf32>
    %235 = vector.extract_strided_slice %216 {offsets = [0, 0, 0], sizes = [1, 4, 128], strides = [1, 1, 1]} : vector<4x4x128xi32> to vector<1x4x128xi32>
    %236 = vector.shape_cast %235 : vector<1x4x128xi32> to vector<4x128xi32>
    %237 = vector.extract_strided_slice %216 {offsets = [1, 0, 0], sizes = [1, 4, 128], strides = [1, 1, 1]} : vector<4x4x128xi32> to vector<1x4x128xi32>
    %238 = vector.shape_cast %237 : vector<1x4x128xi32> to vector<4x128xi32>
    %239 = vector.extract_strided_slice %216 {offsets = [2, 0, 0], sizes = [1, 4, 128], strides = [1, 1, 1]} : vector<4x4x128xi32> to vector<1x4x128xi32>
    %240 = vector.shape_cast %239 : vector<1x4x128xi32> to vector<4x128xi32>
    %241 = vector.extract_strided_slice %216 {offsets = [3, 0, 0], sizes = [1, 4, 128], strides = [1, 1, 1]} : vector<4x4x128xi32> to vector<1x4x128xi32>
    %242 = vector.shape_cast %241 : vector<1x4x128xi32> to vector<4x128xi32>
    %243 = tpu.concatenate %125, %129, %236, %238, %240, %242 in 0 : vector<4x128xi32>, vector<4x128xi32>, vector<4x128xi32>, vector<4x128xi32>, vector<4x128xi32>, vector<4x128xi32> -> vector<24x128xi32>
    %c0_i32 = arith.constant 0 : i32
    %244 = vector.broadcast %c0_i32 : i32 to vector<24x128xi32>
    %245 = arith.cmpi sgt, %243, %244 : vector<24x128xi32>
    %cst_30 = arith.constant dense<0> : vector<128xi32>
    %246 = vector.multi_reduction <add>, %243, %cst_30 [0] : vector<24x128xi32> to vector<128xi32>
    %247 = vector.shape_cast %246 : vector<128xi32> to vector<1x128xi32>
    %248 = tpu.iota {dimensions = array<i32: 0>} : vector<24x128xi32>
    %249 = vector.shape_cast %248 : vector<24x128xi32> to vector<24x1x128xi32>
    %250 = vector.shape_cast %248 : vector<24x128xi32> to vector<1x24x128xi32>
    %251 = vector.broadcast %249 : vector<24x1x128xi32> to vector<24x24x128xi32>
    %252 = vector.broadcast %250 : vector<1x24x128xi32> to vector<24x24x128xi32>
    %253 = arith.cmpi slt, %251, %252 : vector<24x24x128xi32>
    %254 = vector.shape_cast %243 : vector<24x128xi32> to vector<24x1x128xi32>
    %c0_i32_31 = arith.constant 0 : i32
    %255 = vector.shape_cast %254 : vector<24x1x128xi32> to vector<24x1x128xi32>
    %256 = vector.broadcast %255 : vector<24x1x128xi32> to vector<24x24x128xi32>
    %257 = vector.broadcast %c0_i32_31 : i32 to vector<24x24x128xi32>
    %258 = arith.select %253, %256, %257 : vector<24x24x128xi1>, vector<24x24x128xi32>
    %cst_32 = arith.constant dense<0> : vector<24x128xi32>
    %259 = vector.multi_reduction <add>, %258, %cst_32 [0] : vector<24x24x128xi32> to vector<24x128xi32>
    %c24_i32 = arith.constant 24 : i32
    %260 = vector.broadcast %c24_i32 : i32 to vector<24x128xi32>
    %261 = arith.select %245, %259, %260 : vector<24x128xi1>, vector<24x128xi32>
    %262 = tpu.iota {dimensions = array<i32: 0>} : vector<8x128xi32>
    %263 = vector.shape_cast %261 : vector<24x128xi32> to vector<24x1x128xi32>
    %264 = vector.shape_cast %262 : vector<8x128xi32> to vector<1x8x128xi32>
    %265 = vector.broadcast %263 : vector<24x1x128xi32> to vector<24x8x128xi32>
    %266 = vector.broadcast %264 : vector<1x8x128xi32> to vector<24x8x128xi32>
    %267 = arith.cmpi eq, %265, %266 : vector<24x8x128xi32>
    %268 = vector.shape_cast %225 : vector<24x128xf32> to vector<24x1x128xf32>
    %cst_33 = arith.constant 0.000000e+00 : f32
    %269 = vector.shape_cast %268 : vector<24x1x128xf32> to vector<24x1x128xf32>
    %270 = vector.broadcast %269 : vector<24x1x128xf32> to vector<24x8x128xf32>
    %271 = vector.broadcast %cst_33 : f32 to vector<24x8x128xf32>
    %272 = arith.select %267, %270, %271 : vector<24x8x128xi1>, vector<24x8x128xf32>
    %cst_34 = arith.constant dense<0.000000e+00> : vector<8x128xf32>
    %273 = vector.multi_reduction <add>, %272, %cst_34 [0] : vector<24x8x128xf32> to vector<8x128xf32>
    %274 = vector.shape_cast %234 : vector<24x128xf32> to vector<24x1x128xf32>
    %cst_35 = arith.constant 0.000000e+00 : f32
    %275 = vector.shape_cast %274 : vector<24x1x128xf32> to vector<24x1x128xf32>
    %276 = vector.broadcast %275 : vector<24x1x128xf32> to vector<24x8x128xf32>
    %277 = vector.broadcast %cst_35 : f32 to vector<24x8x128xf32>
    %278 = arith.select %267, %276, %277 : vector<24x8x128xi1>, vector<24x8x128xf32>
    %cst_36 = arith.constant dense<0.000000e+00> : vector<8x128xf32>
    %279 = vector.multi_reduction <add>, %278, %cst_36 [0] : vector<24x8x128xf32> to vector<8x128xf32>
    %280 = arith.sitofp %247 : vector<1x128xi32> to vector<1x128xf32>
    %cst_37 = arith.constant 1.000000e+00 : f32
    %281 = vector.broadcast %cst_37 : f32 to vector<1x128xf32>
    %282 = arith.maximumf %280, %281 : vector<1x128xf32>
    %283 = tpu.reciprocal %282 {approx = true} : vector<1x128xf32> -> vector<1x128xf32>
    %cst_38 = arith.constant dense<0.000000e+00> : vector<128xf32>
    %284 = vector.multi_reduction <add>, %273, %cst_38 [0] : vector<8x128xf32> to vector<128xf32>
    %285 = vector.shape_cast %284 : vector<128xf32> to vector<1x128xf32>
    %286 = arith.mulf %285, %283 : vector<1x128xf32>
    %cst_39 = arith.constant dense<0.000000e+00> : vector<128xf32>
    %287 = vector.multi_reduction <add>, %279, %cst_39 [0] : vector<8x128xf32> to vector<128xf32>
    %288 = vector.shape_cast %287 : vector<128xf32> to vector<1x128xf32>
    %289 = arith.mulf %288, %283 : vector<1x128xf32>
    %290 = vector.broadcast %247 : vector<1x128xi32> to vector<8x128xi32>
    %291 = arith.cmpi slt, %262, %290 : vector<8x128xi32>
    %292 = vector.broadcast %286 : vector<1x128xf32> to vector<8x128xf32>
    %293 = arith.subf %273, %292 : vector<8x128xf32>
    %294 = vector.broadcast %289 : vector<1x128xf32> to vector<8x128xf32>
    %295 = arith.subf %279, %294 : vector<8x128xf32>
    %296 = math.absf %293 : vector<8x128xf32>
    %297 = math.absf %295 : vector<8x128xf32>
    %298 = arith.addf %296, %297 : vector<8x128xf32>
    %cst_40 = arith.constant 1.000000e-07 : f32
    %299 = vector.broadcast %cst_40 : f32 to vector<8x128xf32>
    %300 = arith.maximumf %298, %299 : vector<8x128xf32>
    %301 = tpu.reciprocal %300 {approx = true} : vector<8x128xf32> -> vector<8x128xf32>
    %302 = arith.mulf %295, %301 : vector<8x128xf32>
    %cst_41 = arith.constant 0.000000e+00 : f32
    %303 = vector.broadcast %cst_41 : f32 to vector<8x128xf32>
    %304 = arith.cmpf oge, %293, %303 : vector<8x128xf32>
    %cst_42 = arith.constant 0.000000e+00 : f32
    %305 = vector.broadcast %cst_42 : f32 to vector<8x128xf32>
    %306 = arith.cmpf oge, %295, %305 : vector<8x128xf32>
    %cst_43 = arith.constant 2.000000e+00 : f32
    %307 = vector.broadcast %cst_43 : f32 to vector<8x128xf32>
    %308 = arith.subf %307, %302 : vector<8x128xf32>
    %cst_44 = arith.constant -2.000000e+00 : f32
    %309 = vector.broadcast %cst_44 : f32 to vector<8x128xf32>
    %310 = arith.subf %309, %302 : vector<8x128xf32>
    %311 = arith.select %306, %308, %310 : vector<8x128xi1>, vector<8x128xf32>
    %312 = arith.select %304, %302, %311 : vector<8x128xi1>, vector<8x128xf32>
    %cst_45 = arith.constant 1.000000e+09 : f32
    %313 = vector.broadcast %cst_45 : f32 to vector<8x128xf32>
    %314 = arith.select %291, %312, %313 : vector<8x128xi1>, vector<8x128xf32>
    %315 = tpu.iota {dimensions = array<i32: 0>} : vector<8x128xi32>
    %316 = vector.shape_cast %314 : vector<8x128xf32> to vector<8x1x128xf32>
    %317 = vector.shape_cast %314 : vector<8x128xf32> to vector<1x8x128xf32>
    %318 = vector.shape_cast %315 : vector<8x128xi32> to vector<8x1x128xi32>
    %319 = vector.shape_cast %315 : vector<8x128xi32> to vector<1x8x128xi32>
    %320 = vector.broadcast %316 : vector<8x1x128xf32> to vector<8x8x128xf32>
    %321 = vector.broadcast %317 : vector<1x8x128xf32> to vector<8x8x128xf32>
    %322 = arith.cmpf olt, %320, %321 : vector<8x8x128xf32>
    %323 = vector.broadcast %316 : vector<8x1x128xf32> to vector<8x8x128xf32>
    %324 = vector.broadcast %317 : vector<1x8x128xf32> to vector<8x8x128xf32>
    %325 = arith.cmpf oeq, %323, %324 : vector<8x8x128xf32>
    %326 = vector.broadcast %318 : vector<8x1x128xi32> to vector<8x8x128xi32>
    %327 = vector.broadcast %319 : vector<1x8x128xi32> to vector<8x8x128xi32>
    %328 = arith.cmpi slt, %326, %327 : vector<8x8x128xi32>
    %329 = arith.andi %325, %328 : vector<8x8x128xi1>
    %330 = arith.ori %322, %329 : vector<8x8x128xi1>
    %331 = arith.extui %330 : vector<8x8x128xi1> to vector<8x8x128xi32>
    %cst_46 = arith.constant dense<0> : vector<8x128xi32>
    %332 = vector.multi_reduction <add>, %331, %cst_46 [0] : vector<8x8x128xi32> to vector<8x128xi32>
    %333 = vector.shape_cast %332 : vector<8x128xi32> to vector<8x1x128xi32>
    %334 = vector.shape_cast %315 : vector<8x128xi32> to vector<1x8x128xi32>
    %335 = vector.broadcast %333 : vector<8x1x128xi32> to vector<8x8x128xi32>
    %336 = vector.broadcast %334 : vector<1x8x128xi32> to vector<8x8x128xi32>
    %337 = arith.cmpi eq, %335, %336 : vector<8x8x128xi32>
    %338 = vector.shape_cast %273 : vector<8x128xf32> to vector<8x1x128xf32>
    %cst_47 = arith.constant 0.000000e+00 : f32
    %339 = vector.shape_cast %338 : vector<8x1x128xf32> to vector<8x1x128xf32>
    %340 = vector.broadcast %339 : vector<8x1x128xf32> to vector<8x8x128xf32>
    %341 = vector.broadcast %cst_47 : f32 to vector<8x8x128xf32>
    %342 = arith.select %337, %340, %341 : vector<8x8x128xi1>, vector<8x8x128xf32>
    %cst_48 = arith.constant dense<0.000000e+00> : vector<8x128xf32>
    %343 = vector.multi_reduction <add>, %342, %cst_48 [0] : vector<8x8x128xf32> to vector<8x128xf32>
    %344 = vector.shape_cast %279 : vector<8x128xf32> to vector<8x1x128xf32>
    %cst_49 = arith.constant 0.000000e+00 : f32
    %345 = vector.shape_cast %344 : vector<8x1x128xf32> to vector<8x1x128xf32>
    %346 = vector.broadcast %345 : vector<8x1x128xf32> to vector<8x8x128xf32>
    %347 = vector.broadcast %cst_49 : f32 to vector<8x8x128xf32>
    %348 = arith.select %337, %346, %347 : vector<8x8x128xi1>, vector<8x8x128xf32>
    %cst_50 = arith.constant dense<0.000000e+00> : vector<8x128xf32>
    %349 = vector.multi_reduction <add>, %348, %cst_50 [0] : vector<8x8x128xf32> to vector<8x128xf32>
    %350 = vector.extract_strided_slice %343 {offsets = [0, 0], sizes = [1, 128], strides = [1, 1]} : vector<8x128xf32> to vector<1x128xf32>
    %351 = vector.shape_cast %350 : vector<1x128xf32> to vector<1x128xf32>
    %352 = vector.broadcast %351 : vector<1x128xf32> to vector<8x128xf32>
    %353 = arith.select %291, %343, %352 : vector<8x128xi1>, vector<8x128xf32>
    %354 = vector.extract_strided_slice %349 {offsets = [0, 0], sizes = [1, 128], strides = [1, 1]} : vector<8x128xf32> to vector<1x128xf32>
    %355 = vector.shape_cast %354 : vector<1x128xf32> to vector<1x128xf32>
    %356 = vector.broadcast %355 : vector<1x128xf32> to vector<8x128xf32>
    %357 = arith.select %291, %349, %356 : vector<8x128xi1>, vector<8x128xf32>
    %358 = vector.extract_strided_slice %353 {offsets = [1, 0], sizes = [7, 128], strides = [1, 1]} : vector<8x128xf32> to vector<7x128xf32>
    %359 = vector.extract_strided_slice %353 {offsets = [0, 0], sizes = [1, 128], strides = [1, 1]} : vector<8x128xf32> to vector<1x128xf32>
    %360 = tpu.concatenate %358, %359 in 0 : vector<7x128xf32>, vector<1x128xf32> -> vector<8x128xf32>
    %361 = vector.extract_strided_slice %357 {offsets = [1, 0], sizes = [7, 128], strides = [1, 1]} : vector<8x128xf32> to vector<7x128xf32>
    %362 = vector.extract_strided_slice %357 {offsets = [0, 0], sizes = [1, 128], strides = [1, 1]} : vector<8x128xf32> to vector<1x128xf32>
    %363 = tpu.concatenate %361, %362 in 0 : vector<7x128xf32>, vector<1x128xf32> -> vector<8x128xf32>
    %364 = arith.mulf %353, %363 : vector<8x128xf32>
    %365 = arith.mulf %360, %357 : vector<8x128xf32>
    %366 = arith.subf %364, %365 : vector<8x128xf32>
    %cst_51 = arith.constant dense<0.000000e+00> : vector<128xf32>
    %367 = vector.multi_reduction <add>, %366, %cst_51 [0] : vector<8x128xf32> to vector<128xf32>
    %368 = vector.shape_cast %367 : vector<128xf32> to vector<1x128xf32>
    %369 = math.absf %368 : vector<1x128xf32>
    %cst_52 = arith.constant 5.000000e-01 : f32
    %370 = vector.broadcast %cst_52 : f32 to vector<1x128xf32>
    %371 = arith.mulf %370, %369 : vector<1x128xf32>
    %c3_i32 = arith.constant 3 : i32
    %372 = vector.broadcast %c3_i32 : i32 to vector<1x128xi32>
    %373 = arith.cmpi sge, %247, %372 : vector<1x128xi32>
    %cst_53 = arith.constant 0.000000e+00 : f32
    %374 = vector.broadcast %cst_53 : f32 to vector<1x128xf32>
    %375 = arith.select %373, %371, %374 : vector<1x128xi1>, vector<1x128xf32>
    %376 = arith.addf %89, %90 : vector<1x128xf32>
    %377 = arith.subf %376, %375 : vector<1x128xf32>
    %cst_54 = arith.constant 9.99999971E-10 : f32
    %378 = vector.broadcast %cst_54 : f32 to vector<1x128xf32>
    %379 = arith.cmpf ogt, %377, %378 : vector<1x128xf32>
    %cst_55 = arith.constant 9.99999971E-10 : f32
    %380 = vector.broadcast %cst_55 : f32 to vector<1x128xf32>
    %381 = arith.maximumf %377, %380 : vector<1x128xf32>
    %382 = arith.divf %375, %381 : vector<1x128xf32>
    %cst_56 = arith.constant 0.000000e+00 : f32
    %383 = vector.broadcast %cst_56 : f32 to vector<1x128xf32>
    %384 = arith.select %379, %382, %383 : vector<1x128xi1>, vector<1x128xf32>
    %c0_57 = arith.constant 0 : index
    %c0_58 = arith.constant 0 : index
    %385 = vector.load %arg2[%c0_57, %c0_58] : memref<1x128xf32, #tpu.memory_space<vmem>>, vector<1x128xf32>
    tpu.vector_store %arg2[%c0_57, %c0_58], %384 {strides = array<i32>} : memref<1x128xf32, #tpu.memory_space<vmem>>, vector<1x128xf32>,
    return
  }
  func.func @transform_0(%arg0: i32) -> (i32, i32) {
    %c0_i32 = arith.constant 0 : i32
    %c0_i32_0 = arith.constant 0 : i32
    return %c0_i32, %arg0 : i32, i32
  }
  func.func @transform_1(%arg0: i32) -> (i32, i32) {
    %c0_i32 = arith.constant 0 : i32
    %c0_i32_0 = arith.constant 0 : i32
    return %c0_i32, %arg0 : i32, i32
  }
}

</mosaic_0001>

<llo_original>
// kernel: tpu_custom_call.1
$region0: #{tpu_custom_call.1}
  #allocation0 [shape = 'u32[]', space=smem, size = 0x4, offset = 0x4, fixed_abs, tag = 'smem constant byte address 0x4 - core index']
  #allocation1 [shape = 'u32[144,128]{1,0:T(1,128)}', space=vmem, size = 0x12000, scoped, tag = 'internal scratch']
  %s0 = inlined_call_operand.hbm [shape: f32[16,128], index: 0, kind: input, shape index: {}]
  %s1 = inlined_call_operand.hbm [shape: f32[1,128], index: 1, kind: output, shape index: {}]
  %s2 = sld [smem:[#allocation0]]
  $region18: #{tpu_custom_call.1} parent=0
    _
  %s4 = ssub.s32 1, %s2
  %s5 = scalar_select 0, %s4, %s2
  $region1: #{tpu_custom_call.1} parent=0
    #allocation2 [shape = 'u8[8192]{0}', space=vmem, size = 0x2000, scoped, tag = 'input window, operand 0, single buffered']
    #allocation3 [shape = 's32[1]{0}', space=sflag, size = 0x4, scoped, tag = 'scoped memory for tpu_custom_call.1']
    #allocation4 [shape = 's32[1]{0}', space=sflag, size = 0x4, scoped, tag = 'scoped memory for tpu_custom_call.1']
    #allocation5 [shape = 'u8[512]{0}', space=vmem, size = 0x400, scoped, tag = 'output window, operand 0, single buffered']
    %6 = vsyncpa [#allocation3], 0
    %7 = vsyncpa [#allocation4], 0
    // Predicated region
    $region2: #{tpu_custom_call.1} parent=1 // pred_check
      _
    $region3: #{tpu_custom_call.1} parent=1 // pred_check_branch
      %9 = sbr.rel (0) target = $region5
    $region4: #{tpu_custom_call.1} parent=1 // pred_region
      %s11 = ssub.s32 256, 256
      %12 = vsyncadd [#allocation3], %s11
      %s13 = sshll.u32 [#allocation2], 4
      %s14 = int_to_ptr.vmem [resolvable:$true] %s13
      %19 = dma.hbm_to_vmem [thread:$0]  %s0, 256, %s14, [#allocation3], 128, 128, 8
    $region5: #{tpu_custom_call.1} parent=1 // pred_fallthru
      _
    // Predicated region
    $region6: #{tpu_custom_call.1} parent=1 // pred_check
      _
    $region7: #{tpu_custom_call.1} parent=1 // pred_check_branch
      %21 = sbr.rel (0) target = $region9
    $region8: #{tpu_custom_call.1} parent=1 // pred_region
      %22 = dma.done [#allocation3], 256
    $region9: #{tpu_custom_call.1} parent=1 // pred_fallthru
      _
    %v23 = vld [vmem:[#allocation2] sm:$0xff]
    %v24 = vld [vmem:[#allocation2 + $0x8] sm:$0xff]
    %vm25 = vcmask 1043456
    %v26 = vsel %vm25, %v23, 0.0
    %v27 = vrot.slane %v26, 4
    %v28 = vadd.f32 %v26, %v27
    %v29 = vrot.slane %v28, 2
    %v30 = vadd.f32 %v28, %v29
    %v31 = vrot.slane %v30, 1
    %v32 = vadd.f32 %v30, %v31
    %v33 = vsel %vm25, %v24, 0.0
    %v34 = vrot.slane %v33, 4
    %v35 = vadd.f32 %v33, %v34
    %v36 = vrot.slane %v35, 2
    %v37 = vadd.f32 %v35, %v36
    %v38 = vrot.slane %v37, 1
    %v39 = vadd.f32 %v37, %v38
    %v40 = vrcp.pop 4.0
    %v41 = vmul.f32 %v32, %v40
    %v42 = vmul.f32 %v39, %v40
    %v45 = vrot.slane %v23, 4
    %v46 = vrot.slane %v24, 4
    %v49 = vsel %vm25, %v45, 0.0
    %v50 = vrot.slane %v49, 4
    %v51 = vadd.f32 %v49, %v50
    %v52 = vrot.slane %v51, 2
    %v53 = vadd.f32 %v51, %v52
    %v54 = vrot.slane %v53, 1
    %v55 = vadd.f32 %v53, %v54
    %v56 = vsel %vm25, %v46, 0.0
    %v57 = vrot.slane %v56, 4
    %v58 = vadd.f32 %v56, %v57
    %v59 = vrot.slane %v58, 2
    %v60 = vadd.f32 %v58, %v59
    %v61 = vrot.slane %v60, 1
    %v62 = vadd.f32 %v60, %v61
    %v63 = vmul.f32 %v55, %v40
    %v64 = vmul.f32 %v62, %v40
    %v65 = vsub.f32 %v23, %v41
    %v66 = vsub.f32 %v24, %v42
    %v67 = vsub.f32 %v23, %v63
    %v68 = vsub.f32 %v24, %v64
    %v69 = vand.u32 2147483647, %v65
    %v70 = vand.u32 2147483647, %v66
    %v71 = vand.u32 2147483647, %v67
    %v72 = vand.u32 2147483647, %v68
    %v75 = vrot.slane %v71, 4
    %v76 = vrot.slane %v72, 4
    %v79 = vadd.f32 %v69, %v75
    %v80 = vadd.f32 %v70, %v76
    %v81 = vmax.f32 %v79, 1e-07
    %v82 = vmax.f32 %v80, 1e-07
    %v83 = vrcp.pop %v81
    %v84 = vrcp.pop %v82
    %v87 = vrot.slane %v83, 4
    %v88 = vrot.slane %v84, 4
    %v91 = vmul.f32 %v67, %v87
    %v92 = vmul.f32 %v68, %v88
    %vm93 = vcmp.ge.f32.partialorder %v65, 0.0
    %vm94 = vcmp.ge.f32.partialorder %v66, 0.0
    %vm95 = vcmp.ge.f32.partialorder %v67, 0.0
    %vm96 = vcmp.ge.f32.partialorder %v68, 0.0
    %v97 = vsub.f32 2.0, %v91
    %v98 = vsub.f32 2.0, %v92
    %v99 = vsub.f32 -2.0, %v91
    %v100 = vsub.f32 -2.0, %v92
    %v101 = vsel %vm95, %v97, %v99
    %v102 = vsel %vm96, %v98, %v100
    %v105 = vrot.slane %v91, 4
    %v106 = vrot.slane %v92, 4
    %v111 = vrot.slane %v101, 4
    %v112 = vrot.slane %v102, 4
    %v115 = vsel %vm93, %v105, %v111
    %v116 = vsel %vm94, %v106, %v112
    %v117 = vlaneseq
    %v118 = vshrl.u32 %v117, 7
    %v121 = vcombine.low %v115, %v116
    %v123 = vunpack.c.l.s4 1966171168
    %v124 = vunpack.c.0.s8 %v123
    %v125 = vlaneseq
    %v126 = vshrl.u32 %v125, 7
    %v127 = vsub.s32 %v124, %v126
    %v128 = vrot.slane %v121, %v127
    %v129 = vcombine.high %v128, %v128
    %v131 = vunpack.c.l.s4 1966171168
    %v132 = vunpack.c.0.s8 %v131
    %v133 = vlaneseq
    %v134 = vshrl.u32 %v133, 7
    %v135 = vsub.s32 %v132, %v134
    %v136 = vrot.slane %v128, %v135
    %v138 = vunpack.c.l.s4 1966171168
    %v139 = vunpack.c.0.s8 %v138
    %v140 = vlaneseq
    %v141 = vshrl.u32 %v140, 7
    %v142 = vsub.s32 %v139, %v141
    %v143 = vrot.slane %v129, %v142
    %v144 = vcombine.high %v136, %v136
    %v145 = vcombine.high %v143, %v143
    %v146 = vlaneseq
    %v147 = vshrl.u32 %v146, 7
    %v148 = vsub.s32 0, %v147
    %v149 = vrot.slane %v118, %v148
    %v150 = vlaneseq
    %v151 = vshrl.u32 %v150, 7
    %v152 = vsub.s32 1, %v151
    %v153 = vrot.slane %v118, %v152
    %v154 = vlaneseq
    %v155 = vshrl.u32 %v154, 7
    %v156 = vsub.s32 2, %v155
    %v157 = vrot.slane %v118, %v156
    %v158 = vlaneseq
    %v159 = vshrl.u32 %v158, 7
    %v160 = vsub.s32 3, %v159
    %v161 = vrot.slane %v118, %v160
    %v162 = vlaneseq
    %v163 = vshrl.u32 %v162, 7
    %v164 = vsub.s32 0, %v163
    %v165 = vrot.slane %v136, %v164
    %v166 = vlaneseq
    %v167 = vshrl.u32 %v166, 7
    %v168 = vsub.s32 1, %v167
    %v169 = vrot.slane %v136, %v168
    %v170 = vlaneseq
    %v171 = vshrl.u32 %v170, 7
    %v172 = vsub.s32 0, %v171
    %v173 = vrot.slane %v143, %v172
    %v174 = vlaneseq
    %v175 = vshrl.u32 %v174, 7
    %v176 = vsub.s32 1, %v175
    %v177 = vrot.slane %v143, %v176
    %v178 = vlaneseq
    %v179 = vshrl.u32 %v178, 7
    %v180 = vsub.s32 0, %v179
    %v181 = vrot.slane %v144, %v180
    %v182 = vlaneseq
    %v183 = vshrl.u32 %v182, 7
    %v184 = vsub.s32 1, %v183
    %v185 = vrot.slane %v144, %v184
    %v186 = vlaneseq
    %v187 = vshrl.u32 %v186, 7
    %v188 = vsub.s32 0, %v187
    %v189 = vrot.slane %v145, %v188
    %v190 = vlaneseq
    %v191 = vshrl.u32 %v190, 7
    %v192 = vsub.s32 1, %v191
    %v193 = vrot.slane %v145, %v192
    %vm202 = vcmp.lt.f32.partialorder %v165, %v115
    %vm203 = vcmp.lt.f32.partialorder %v169, %v116
    %vm204 = vcmp.lt.f32.partialorder %v173, %v115
    %vm205 = vcmp.lt.f32.partialorder %v177, %v116
    %vm206 = vcmp.lt.f32.partialorder %v181, %v115
    %vm207 = vcmp.lt.f32.partialorder %v185, %v116
    %vm208 = vcmp.lt.f32.partialorder %v189, %v115
    %vm209 = vcmp.lt.f32.partialorder %v193, %v116
    %vm210 = vcmp.eq.f32.partialorder %v165, %v115
    %vm211 = vcmp.eq.f32.partialorder %v169, %v116
    %vm212 = vcmp.eq.f32.partialorder %v173, %v115
    %vm213 = vcmp.eq.f32.partialorder %v177, %v116
    %vm214 = vcmp.eq.f32.partialorder %v181, %v115
    %vm215 = vcmp.eq.f32.partialorder %v185, %v116
    %vm216 = vcmp.eq.f32.partialorder %v189, %v115
    %vm217 = vcmp.eq.f32.partialorder %v193, %v116
    %vm218 = vcmp.lt.s32.totalorder %v149, %v118
    %vm219 = vcmp.lt.s32.totalorder %v153, %v118
    %vm220 = vcmp.lt.s32.totalorder %v157, %v118
    %vm221 = vcmp.lt.s32.totalorder %v161, %v118
    %vm222 = vmand %vm210, %vm218
    %vm223 = vmand %vm211, %vm218
    %vm224 = vmand %vm212, %vm219
    %vm225 = vmand %vm213, %vm219
    %vm226 = vmand %vm214, %vm220
    %vm227 = vmand %vm215, %vm220
    %vm228 = vmand %vm216, %vm221
    %vm229 = vmand %vm217, %vm221
    %vm230 = vmor %vm202, %vm222
    %vm231 = vmor %vm203, %vm223
    %vm232 = vmor %vm204, %vm224
    %vm233 = vmor %vm205, %vm225
    %vm234 = vmor %vm206, %vm226
    %vm235 = vmor %vm207, %vm227
    %vm236 = vmor %vm208, %vm228
    %vm237 = vmor %vm209, %vm229
    %v238 = vsel %vm230, 1, 0
    %v239 = vsel %vm231, 1, 0
    %v240 = vsel %vm232, 1, 0
    %v241 = vsel %vm233, 1, 0
    %v242 = vsel %vm234, 1, 0
    %v243 = vsel %vm235, 1, 0
    %v244 = vsel %vm236, 1, 0
    %v245 = vsel %vm237, 1, 0
    %v246 = vsel %vm25, %v238, 0
    %v247 = vsel %vm25, %v240, 0
    %v248 = vsel %vm25, %v242, 0
    %v249 = vadd.s32 %v246, %v248
    %v250 = vsel %vm25, %v244, 0
    %v251 = vadd.s32 %v247, %v250
    %v252 = vadd.s32 %v249, %v251
    %v253 = vsel %vm25, %v239, 0
    %v254 = vsel %vm25, %v241, 0
    %v255 = vsel %vm25, %v243, 0
    %v256 = vadd.s32 %v253, %v255
    %v257 = vsel %vm25, %v245, 0
    %v258 = vadd.s32 %v254, %v257
    %v259 = vadd.s32 %v256, %v258
    %v260 = vcombine.low %v252, %v259
    %v262 = vunpack.c.l.s4 1966171168
    %v263 = vunpack.c.0.s8 %v262
    %v264 = vlaneseq
    %v265 = vshrl.u32 %v264, 7
    %v266 = vsub.s32 %v263, %v265
    %v267 = vrot.slane %v260, %v266
    %v268 = vcombine.high %v267, %v267
    %v270 = vunpack.c.l.s4 1966171168
    %v271 = vunpack.c.0.s8 %v270
    %v272 = vlaneseq
    %v273 = vshrl.u32 %v272, 7
    %v274 = vsub.s32 %v271, %v273
    %v275 = vrot.slane %v267, %v274
    %v277 = vunpack.c.l.s4 1966171168
    %v278 = vunpack.c.0.s8 %v277
    %v279 = vlaneseq
    %v280 = vshrl.u32 %v279, 7
    %v281 = vsub.s32 %v278, %v280
    %v282 = vrot.slane %v268, %v281
    %v283 = vcombine.high %v275, %v275
    %v284 = vcombine.high %v282, %v282
    %v285 = vlaneseq
    %v286 = vshrl.u32 %v285, 7
    %v287 = vsub.s32 0, %v286
    %v288 = vrot.slane %v275, %v287
    %v289 = vlaneseq
    %v290 = vshrl.u32 %v289, 7
    %v291 = vsub.s32 1, %v290
    %v292 = vrot.slane %v275, %v291
    %v293 = vlaneseq
    %v294 = vshrl.u32 %v293, 7
    %v295 = vsub.s32 0, %v294
    %v296 = vrot.slane %v282, %v295
    %v297 = vlaneseq
    %v298 = vshrl.u32 %v297, 7
    %v299 = vsub.s32 1, %v298
    %v300 = vrot.slane %v282, %v299
    %v301 = vlaneseq
    %v302 = vshrl.u32 %v301, 7
    %v303 = vsub.s32 0, %v302
    %v304 = vrot.slane %v283, %v303
    %v305 = vlaneseq
    %v306 = vshrl.u32 %v305, 7
    %v307 = vsub.s32 1, %v306
    %v308 = vrot.slane %v283, %v307
    %v309 = vlaneseq
    %v310 = vshrl.u32 %v309, 7
    %v311 = vsub.s32 0, %v310
    %v312 = vrot.slane %v284, %v311
    %v313 = vlaneseq
    %v314 = vshrl.u32 %v313, 7
    %v315 = vsub.s32 1, %v314
    %v316 = vrot.slane %v284, %v315
    %vm317 = vcmp.eq.s32.totalorder %v288, %v118
    %vm318 = vcmp.eq.s32.totalorder %v292, %v118
    %vm319 = vcmp.eq.s32.totalorder %v296, %v118
    %vm320 = vcmp.eq.s32.totalorder %v300, %v118
    %vm321 = vcmp.eq.s32.totalorder %v304, %v118
    %vm322 = vcmp.eq.s32.totalorder %v308, %v118
    %vm323 = vcmp.eq.s32.totalorder %v312, %v118
    %vm324 = vcmp.eq.s32.totalorder %v316, %v118
    %v325 = vcombine.low %v23, %v24
    %v327 = vunpack.c.l.s4 1966171168
    %v328 = vunpack.c.0.s8 %v327
    %v329 = vlaneseq
    %v330 = vshrl.u32 %v329, 7
    %v331 = vsub.s32 %v328, %v330
    %v332 = vrot.slane %v325, %v331
    %v333 = vcombine.high %v332, %v332
    %v335 = vunpack.c.l.s4 1966171168
    %v336 = vunpack.c.0.s8 %v335
    %v337 = vlaneseq
    %v338 = vshrl.u32 %v337, 7
    %v339 = vsub.s32 %v336, %v338
    %v340 = vrot.slane %v332, %v339
    %v342 = vunpack.c.l.s4 1966171168
    %v343 = vunpack.c.0.s8 %v342
    %v344 = vlaneseq
    %v345 = vshrl.u32 %v344, 7
    %v346 = vsub.s32 %v343, %v345
    %v347 = vrot.slane %v333, %v346
    %v348 = vcombine.high %v340, %v340
    %v349 = vcombine.high %v347, %v347
    %v350 = vlaneseq
    %v351 = vshrl.u32 %v350, 7
    %v352 = vsub.s32 0, %v351
    %v353 = vrot.slane %v340, %v352
    %v354 = vlaneseq
    %v355 = vshrl.u32 %v354, 7
    %v356 = vsub.s32 1, %v355
    %v357 = vrot.slane %v340, %v356
    %v358 = vlaneseq
    %v359 = vshrl.u32 %v358, 7
    %v360 = vsub.s32 0, %v359
    %v361 = vrot.slane %v347, %v360
    %v362 = vlaneseq
    %v363 = vshrl.u32 %v362, 7
    %v364 = vsub.s32 1, %v363
    %v365 = vrot.slane %v347, %v364
    %v366 = vlaneseq
    %v367 = vshrl.u32 %v366, 7
    %v368 = vsub.s32 0, %v367
    %v369 = vrot.slane %v348, %v368
    %v370 = vlaneseq
    %v371 = vshrl.u32 %v370, 7
    %v372 = vsub.s32 1, %v371
    %v373 = vrot.slane %v348, %v372
    %v374 = vlaneseq
    %v375 = vshrl.u32 %v374, 7
    %v376 = vsub.s32 0, %v375
    %v377 = vrot.slane %v349, %v376
    %v378 = vlaneseq
    %v379 = vshrl.u32 %v378, 7
    %v380 = vsub.s32 1, %v379
    %v381 = vrot.slane %v349, %v380
    %v390 = vsel %vm317, %v353, 0.0
    %v391 = vsel %vm318, %v357, 0.0
    %v392 = vsel %vm319, %v361, 0.0
    %v393 = vsel %vm320, %v365, 0.0
    %v394 = vsel %vm321, %v369, 0.0
    %v395 = vsel %vm322, %v373, 0.0
    %v396 = vsel %vm323, %v377, 0.0
    %v397 = vsel %vm324, %v381, 0.0
    %v398 = vsel %vm25, %v390, 0.0
    %v399 = vsel %vm25, %v392, 0.0
    %v400 = vadd.f32 %v398, %v399
    %v401 = vsel %vm25, %v394, 0.0
    %v402 = vadd.f32 %v400, %v401
    %v403 = vsel %vm25, %v396, 0.0
    %v404 = vadd.f32 %v402, %v403
    %v405 = vsel %vm25, %v391, 0.0
    %v406 = vsel %vm25, %v393, 0.0
    %v407 = vadd.f32 %v405, %v406
    %v408 = vsel %vm25, %v395, 0.0
    %v409 = vadd.f32 %v407, %v408
    %v410 = vsel %vm25, %v397, 0.0
    %v411 = vadd.f32 %v409, %v410
    %v412 = vcombine.high %v23, %v24
    %v414 = vunpack.c.l.s4 1966171168
    %v415 = vunpack.c.0.s8 %v414
    %v416 = vlaneseq
    %v417 = vshrl.u32 %v416, 7
    %v418 = vsub.s32 %v415, %v417
    %v419 = vrot.slane %v412, %v418
    %v420 = vcombine.high %v419, %v419
    %v422 = vunpack.c.l.s4 1966171168
    %v423 = vunpack.c.0.s8 %v422
    %v424 = vlaneseq
    %v425 = vshrl.u32 %v424, 7
    %v426 = vsub.s32 %v423, %v425
    %v427 = vrot.slane %v419, %v426
    %v429 = vunpack.c.l.s4 1966171168
    %v430 = vunpack.c.0.s8 %v429
    %v431 = vlaneseq
    %v432 = vshrl.u32 %v431, 7
    %v433 = vsub.s32 %v430, %v432
    %v434 = vrot.slane %v420, %v433
    %v435 = vcombine.high %v427, %v427
    %v436 = vcombine.high %v434, %v434
    %v437 = vlaneseq
    %v438 = vshrl.u32 %v437, 7
    %v439 = vsub.s32 0, %v438
    %v440 = vrot.slane %v427, %v439
    %v441 = vlaneseq
    %v442 = vshrl.u32 %v441, 7
    %v443 = vsub.s32 1, %v442
    %v444 = vrot.slane %v427, %v443
    %v445 = vlaneseq
    %v446 = vshrl.u32 %v445, 7
    %v447 = vsub.s32 0, %v446
    %v448 = vrot.slane %v434, %v447
    %v449 = vlaneseq
    %v450 = vshrl.u32 %v449, 7
    %v451 = vsub.s32 1, %v450
    %v452 = vrot.slane %v434, %v451
    %v453 = vlaneseq
    %v454 = vshrl.u32 %v453, 7
    %v455 = vsub.s32 0, %v454
    %v456 = vrot.slane %v435, %v455
    %v457 = vlaneseq
    %v458 = vshrl.u32 %v457, 7
    %v459 = vsub.s32 1, %v458
    %v460 = vrot.slane %v435, %v459
    %v461 = vlaneseq
    %v462 = vshrl.u32 %v461, 7
    %v463 = vsub.s32 0, %v462
    %v464 = vrot.slane %v436, %v463
    %v465 = vlaneseq
    %v466 = vshrl.u32 %v465, 7
    %v467 = vsub.s32 1, %v466
    %v468 = vrot.slane %v436, %v467
    %v477 = vsel %vm317, %v440, 0.0
    %v478 = vsel %vm318, %v444, 0.0
    %v479 = vsel %vm319, %v448, 0.0
    %v480 = vsel %vm320, %v452, 0.0
    %v481 = vsel %vm321, %v456, 0.0
    %v482 = vsel %vm322, %v460, 0.0
    %v483 = vsel %vm323, %v464, 0.0
    %v484 = vsel %vm324, %v468, 0.0
    %v485 = vsel %vm25, %v477, 0.0
    %v486 = vsel %vm25, %v479, 0.0
    %v487 = vadd.f32 %v485, %v486
    %v488 = vsel %vm25, %v481, 0.0
    %v489 = vadd.f32 %v487, %v488
    %v490 = vsel %vm25, %v483, 0.0
    %v491 = vadd.f32 %v489, %v490
    %v492 = vsel %vm25, %v478, 0.0
    %v493 = vsel %vm25, %v480, 0.0
    %v494 = vadd.f32 %v492, %v493
    %v495 = vsel %vm25, %v482, 0.0
    %v496 = vadd.f32 %v494, %v495
    %v497 = vsel %vm25, %v484, 0.0
    %v498 = vadd.f32 %v496, %v497
    %v501 = vrot.slane %v404, 1
    %v502 = vrot.slane %v411, 1
    %v505 = vrot.slane %v404, 5
    %v506 = vrot.slane %v411, 5
    %vm509 = vcmask 1042432
    %v510 = vsel %vm509, %v501, %v505
    %v511 = vsel %vm509, %v502, %v506
    %v514 = vrot.slane %v491, 1
    %v515 = vrot.slane %v498, 1
    %v518 = vrot.slane %v491, 5
    %v519 = vrot.slane %v498, 5
    %v522 = vsel %vm509, %v514, %v518
    %v523 = vsel %vm509, %v515, %v519
    %v524 = vmul.f32 %v404, %v522
    %v525 = vmul.f32 %v411, %v523
    %v526 = vmul.f32 %v510, %v491
    %v527 = vmul.f32 %v511, %v498
    %v528 = vsub.f32 %v524, %v526
    %v529 = vsub.f32 %v525, %v527
    %v530 = vsel %vm25, %v528, 0.0
    %v531 = vrot.slane %v530, 4
    %v532 = vadd.f32 %v530, %v531
    %v533 = vrot.slane %v532, 2
    %v534 = vadd.f32 %v532, %v533
    %v535 = vrot.slane %v534, 1
    %v536 = vadd.f32 %v534, %v535
    %v537 = vsel %vm25, %v529, 0.0
    %v538 = vrot.slane %v537, 4
    %v539 = vadd.f32 %v537, %v538
    %v540 = vrot.slane %v539, 2
    %v541 = vadd.f32 %v539, %v540
    %v542 = vrot.slane %v541, 1
    %v543 = vadd.f32 %v541, %v542
    %v544 = vand.u32 2147483647, %v536
    %v545 = vand.u32 2147483647, %v543
    %v546 = vmul.f32 %v544, 0.5
    %v547 = vmul.f32 %v545, 0.5
    %v548 = vsub.f32 %v511, %v411
    %v549 = vsub.f32 %v510, %v404
    %v552 = vcombine.low %v548, %v549
    %v554 = vunpack.c.l.s4 1966171168
    %v555 = vunpack.c.0.s8 %v554
    %v556 = vlaneseq
    %v557 = vshrl.u32 %v556, 7
    %v558 = vsub.s32 %v555, %v557
    %v559 = vrot.slane %v552, %v558
    %v560 = vcombine.high %v559, %v559
    %v562 = vunpack.c.l.s4 1966171168
    %v563 = vunpack.c.0.s8 %v562
    %v564 = vlaneseq
    %v565 = vshrl.u32 %v564, 7
    %v566 = vsub.s32 %v563, %v565
    %v567 = vrot.slane %v559, %v566
    %v569 = vunpack.c.l.s4 1966171168
    %v570 = vunpack.c.0.s8 %v569
    %v571 = vlaneseq
    %v572 = vshrl.u32 %v571, 7
    %v573 = vsub.s32 %v570, %v572
    %v574 = vrot.slane %v560, %v573
    %v575 = vcombine.high %v567, %v567
    %v576 = vcombine.high %v574, %v574
    %v577 = vsub.f32 %v523, %v498
    %v578 = vsub.f32 %v522, %v491
    %v581 = vcombine.low %v577, %v578
    %v583 = vunpack.c.l.s4 1966171168
    %v584 = vunpack.c.0.s8 %v583
    %v585 = vlaneseq
    %v586 = vshrl.u32 %v585, 7
    %v587 = vsub.s32 %v584, %v586
    %v588 = vrot.slane %v581, %v587
    %v589 = vcombine.high %v588, %v588
    %v591 = vunpack.c.l.s4 1966171168
    %v592 = vunpack.c.0.s8 %v591
    %v593 = vlaneseq
    %v594 = vshrl.u32 %v593, 7
    %v595 = vsub.s32 %v592, %v594
    %v596 = vrot.slane %v588, %v595
    %v598 = vunpack.c.l.s4 1966171168
    %v599 = vunpack.c.0.s8 %v598
    %v600 = vlaneseq
    %v601 = vshrl.u32 %v600, 7
    %v602 = vsub.s32 %v599, %v601
    %v603 = vrot.slane %v589, %v602
    %v604 = vcombine.high %v596, %v596
    %v605 = vcombine.high %v603, %v603
    %v606 = vcombine.low %v411, %v404
    %v608 = vunpack.c.l.s4 1966171168
    %v609 = vunpack.c.0.s8 %v608
    %v610 = vlaneseq
    %v611 = vshrl.u32 %v610, 7
    %v612 = vsub.s32 %v609, %v611
    %v613 = vrot.slane %v606, %v612
    %v614 = vcombine.high %v613, %v613
    %v616 = vunpack.c.l.s4 1966171168
    %v617 = vunpack.c.0.s8 %v616
    %v618 = vlaneseq
    %v619 = vshrl.u32 %v618, 7
    %v620 = vsub.s32 %v617, %v619
    %v621 = vrot.slane %v613, %v620
    %v623 = vunpack.c.l.s4 1966171168
    %v624 = vunpack.c.0.s8 %v623
    %v625 = vlaneseq
    %v626 = vshrl.u32 %v625, 7
    %v627 = vsub.s32 %v624, %v626
    %v628 = vrot.slane %v614, %v627
    %v629 = vcombine.high %v621, %v621
    %v630 = vcombine.high %v628, %v628
    %v631 = vlaneseq
    %v632 = vshrl.u32 %v631, 7
    %v633 = vsub.s32 0, %v632
    %v634 = vrot.slane %v621, %v633
    %v635 = vlaneseq
    %v636 = vshrl.u32 %v635, 7
    %v637 = vsub.s32 1, %v636
    %v638 = vrot.slane %v621, %v637
    %v639 = vlaneseq
    %v640 = vshrl.u32 %v639, 7
    %v641 = vsub.s32 0, %v640
    %v642 = vrot.slane %v628, %v641
    %v643 = vlaneseq
    %v644 = vshrl.u32 %v643, 7
    %v645 = vsub.s32 1, %v644
    %v646 = vrot.slane %v628, %v645
    %v647 = vlaneseq
    %v648 = vshrl.u32 %v647, 7
    %v649 = vsub.s32 0, %v648
    %v650 = vrot.slane %v629, %v649
    %v651 = vlaneseq
    %v652 = vshrl.u32 %v651, 7
    %v653 = vsub.s32 1, %v652
    %v654 = vrot.slane %v629, %v653
    %v655 = vlaneseq
    %v656 = vshrl.u32 %v655, 7
    %v657 = vsub.s32 0, %v656
    %v658 = vrot.slane %v630, %v657
    %v659 = vlaneseq
    %v660 = vshrl.u32 %v659, 7
    %v661 = vsub.s32 1, %v660
    %v662 = vrot.slane %v630, %v661
    %v671 = vsub.f32 %v404, %v634
    %v672 = vsub.f32 %v411, %v638
    %v673 = vsub.f32 %v404, %v642
    %v674 = vsub.f32 %v411, %v646
    %v675 = vsub.f32 %v404, %v650
    %v676 = vsub.f32 %v411, %v654
    %v677 = vsub.f32 %v404, %v658
    %v678 = vsub.f32 %v411, %v662
    %v679 = vcombine.low %v498, %v491
    %v681 = vunpack.c.l.s4 1966171168
    %v682 = vunpack.c.0.s8 %v681
    %v683 = vlaneseq
    %v684 = vshrl.u32 %v683, 7
    %v685 = vsub.s32 %v682, %v684
    %v686 = vrot.slane %v679, %v685
    %v687 = vcombine.high %v686, %v686
    %v689 = vunpack.c.l.s4 1966171168
    %v690 = vunpack.c.0.s8 %v689
    %v691 = vlaneseq
    %v692 = vshrl.u32 %v691, 7
    %v693 = vsub.s32 %v690, %v692
    %v694 = vrot.slane %v686, %v693
    %v696 = vunpack.c.l.s4 1966171168
    %v697 = vunpack.c.0.s8 %v696
    %v698 = vlaneseq
    %v699 = vshrl.u32 %v698, 7
    %v700 = vsub.s32 %v697, %v699
    %v701 = vrot.slane %v687, %v700
    %v702 = vcombine.high %v694, %v694
    %v703 = vcombine.high %v701, %v701
    %v704 = vlaneseq
    %v705 = vshrl.u32 %v704, 7
    %v706 = vsub.s32 0, %v705
    %v707 = vrot.slane %v694, %v706
    %v708 = vlaneseq
    %v709 = vshrl.u32 %v708, 7
    %v710 = vsub.s32 1, %v709
    %v711 = vrot.slane %v694, %v710
    %v712 = vlaneseq
    %v713 = vshrl.u32 %v712, 7
    %v714 = vsub.s32 0, %v713
    %v715 = vrot.slane %v701, %v714
    %v716 = vlaneseq
    %v717 = vshrl.u32 %v716, 7
    %v718 = vsub.s32 1, %v717
    %v719 = vrot.slane %v701, %v718
    %v720 = vlaneseq
    %v721 = vshrl.u32 %v720, 7
    %v722 = vsub.s32 0, %v721
    %v723 = vrot.slane %v702, %v722
    %v724 = vlaneseq
    %v725 = vshrl.u32 %v724, 7
    %v726 = vsub.s32 1, %v725
    %v727 = vrot.slane %v702, %v726
    %v728 = vlaneseq
    %v729 = vshrl.u32 %v728, 7
    %v730 = vsub.s32 0, %v729
    %v731 = vrot.slane %v703, %v730
    %v732 = vlaneseq
    %v733 = vshrl.u32 %v732, 7
    %v734 = vsub.s32 1, %v733
    %v735 = vrot.slane %v703, %v734
    %v744 = vsub.f32 %v491, %v707
    %v745 = vsub.f32 %v498, %v711
    %v746 = vsub.f32 %v491, %v715
    %v747 = vsub.f32 %v498, %v719
    %v748 = vsub.f32 %v491, %v723
    %v749 = vsub.f32 %v498, %v727
    %v750 = vsub.f32 %v491, %v731
    %v751 = vsub.f32 %v498, %v735
    %v752 = vlaneseq
    %v753 = vshrl.u32 %v752, 7
    %v754 = vsub.s32 0, %v753
    %v755 = vrot.slane %v567, %v754
    %v756 = vlaneseq
    %v757 = vshrl.u32 %v756, 7
    %v758 = vsub.s32 1, %v757
    %v759 = vrot.slane %v567, %v758
    %v760 = vlaneseq
    %v761 = vshrl.u32 %v760, 7
    %v762 = vsub.s32 0, %v761
    %v763 = vrot.slane %v574, %v762
    %v764 = vlaneseq
    %v765 = vshrl.u32 %v764, 7
    %v766 = vsub.s32 1, %v765
    %v767 = vrot.slane %v574, %v766
    %v768 = vlaneseq
    %v769 = vshrl.u32 %v768, 7
    %v770 = vsub.s32 0, %v769
    %v771 = vrot.slane %v575, %v770
    %v772 = vlaneseq
    %v773 = vshrl.u32 %v772, 7
    %v774 = vsub.s32 1, %v773
    %v775 = vrot.slane %v575, %v774
    %v776 = vlaneseq
    %v777 = vshrl.u32 %v776, 7
    %v778 = vsub.s32 0, %v777
    %v779 = vrot.slane %v576, %v778
    %v780 = vlaneseq
    %v781 = vshrl.u32 %v780, 7
    %v782 = vsub.s32 1, %v781
    %v783 = vrot.slane %v576, %v782
    %v792 = vmul.f32 %v755, %v744
    %v793 = vmul.f32 %v759, %v745
    %v794 = vmul.f32 %v763, %v746
    %v795 = vmul.f32 %v767, %v747
    %v796 = vmul.f32 %v771, %v748
    %v797 = vmul.f32 %v775, %v749
    %v798 = vmul.f32 %v779, %v750
    %v799 = vmul.f32 %v783, %v751
    %v800 = vlaneseq
    %v801 = vshrl.u32 %v800, 7
    %v802 = vsub.s32 0, %v801
    %v803 = vrot.slane %v596, %v802
    %v804 = vlaneseq
    %v805 = vshrl.u32 %v804, 7
    %v806 = vsub.s32 1, %v805
    %v807 = vrot.slane %v596, %v806
    %v808 = vlaneseq
    %v809 = vshrl.u32 %v808, 7
    %v810 = vsub.s32 0, %v809
    %v811 = vrot.slane %v603, %v810
    %v812 = vlaneseq
    %v813 = vshrl.u32 %v812, 7
    %v814 = vsub.s32 1, %v813
    %v815 = vrot.slane %v603, %v814
    %v816 = vlaneseq
    %v817 = vshrl.u32 %v816, 7
    %v818 = vsub.s32 0, %v817
    %v819 = vrot.slane %v604, %v818
    %v820 = vlaneseq
    %v821 = vshrl.u32 %v820, 7
    %v822 = vsub.s32 1, %v821
    %v823 = vrot.slane %v604, %v822
    %v824 = vlaneseq
    %v825 = vshrl.u32 %v824, 7
    %v826 = vsub.s32 0, %v825
    %v827 = vrot.slane %v605, %v826
    %v828 = vlaneseq
    %v829 = vshrl.u32 %v828, 7
    %v830 = vsub.s32 1, %v829
    %v831 = vrot.slane %v605, %v830
    %v840 = vmul.f32 %v803, %v671
    %v841 = vmul.f32 %v807, %v672
    %v842 = vmul.f32 %v811, %v673
    %v843 = vmul.f32 %v815, %v674
    %v844 = vmul.f32 %v819, %v675
    %v845 = vmul.f32 %v823, %v676
    %v846 = vmul.f32 %v827, %v677
    %v847 = vmul.f32 %v831, %v678
    %v848 = vsub.f32 %v792, %v840
    %v849 = vsub.f32 %v793, %v841
    %v850 = vsub.f32 %v794, %v842
    %v851 = vsub.f32 %v795, %v843
    %v852 = vsub.f32 %v796, %v844
    %v853 = vsub.f32 %v797, %v845
    %v854 = vsub.f32 %v798, %v846
    %v855 = vsub.f32 %v799, %v847
    %vm856 = vcmp.ge.f32.partialorder %v848, -1e-06
    %vm857 = vcmp.ge.f32.partialorder %v849, -1e-06
    %vm858 = vcmp.ge.f32.partialorder %v850, -1e-06
    %vm859 = vcmp.ge.f32.partialorder %v851, -1e-06
    %vm860 = vcmp.ge.f32.partialorder %v852, -1e-06
    %vm861 = vcmp.ge.f32.partialorder %v853, -1e-06
    %vm862 = vcmp.ge.f32.partialorder %v854, -1e-06
    %vm863 = vcmp.ge.f32.partialorder %v855, -1e-06
    %v864 = vsel %vm856, 1, 0
    %v865 = vsel %vm857, 1, 0
    %v866 = vsel %vm858, 1, 0
    %v867 = vsel %vm859, 1, 0
    %v868 = vsel %vm860, 1, 0
    %v869 = vsel %vm861, 1, 0
    %v870 = vsel %vm862, 1, 0
    %v871 = vsel %vm863, 1, 0
    %v872 = vsel %vm25, %v864, 0
    %v873 = vsel %vm25, %v866, 0
    %v874 = vsel %vm25, %v868, 0
    %v875 = vadd.s32 %v872, %v874
    %v876 = vsel %vm25, %v870, 0
    %v877 = vadd.s32 %v873, %v876
    %v878 = vadd.s32 %v875, %v877
    %v879 = vsel %vm25, %v865, 0
    %v880 = vsel %vm25, %v867, 0
    %v881 = vsel %vm25, %v869, 0
    %v882 = vadd.s32 %v879, %v881
    %v883 = vsel %vm25, %v871, 0
    %v884 = vadd.s32 %v880, %v883
    %v885 = vadd.s32 %v882, %v884
    %vm886 = vcmp.eq.s32.totalorder %v878, 4
    %v887 = vsel %vm886, 1, 0
    %vm888 = vcmp.eq.s32.totalorder %v885, 4
    %v889 = vsel %vm888, 1, 0
    %v891 = vunpack.c.l.s4 1966171168
    %v892 = vunpack.c.0.s8 %v891
    %v893 = vlaneseq
    %v894 = vshrl.u32 %v893, 7
    %v895 = vsub.s32 %v892, %v894
    %v896 = vrot.slane %v548, %v895
    %v897 = vcombine.high %v896, %v896
    %v899 = vunpack.c.l.s4 1966171168
    %v900 = vunpack.c.0.s8 %v899
    %v901 = vlaneseq
    %v902 = vshrl.u32 %v901, 7
    %v903 = vsub.s32 %v900, %v902
    %v904 = vrot.slane %v896, %v903
    %v906 = vunpack.c.l.s4 1966171168
    %v907 = vunpack.c.0.s8 %v906
    %v908 = vlaneseq
    %v909 = vshrl.u32 %v908, 7
    %v910 = vsub.s32 %v907, %v909
    %v911 = vrot.slane %v897, %v910
    %v912 = vcombine.high %v904, %v904
    %v913 = vcombine.high %v911, %v911
    %v915 = vunpack.c.l.s4 1966171168
    %v916 = vunpack.c.0.s8 %v915
    %v917 = vlaneseq
    %v918 = vshrl.u32 %v917, 7
    %v919 = vsub.s32 %v916, %v918
    %v920 = vrot.slane %v577, %v919
    %v921 = vcombine.high %v920, %v920
    %v923 = vunpack.c.l.s4 1966171168
    %v924 = vunpack.c.0.s8 %v923
    %v925 = vlaneseq
    %v926 = vshrl.u32 %v925, 7
    %v927 = vsub.s32 %v924, %v926
    %v928 = vrot.slane %v920, %v927
    %v930 = vunpack.c.l.s4 1966171168
    %v931 = vunpack.c.0.s8 %v930
    %v932 = vlaneseq
    %v933 = vshrl.u32 %v932, 7
    %v934 = vsub.s32 %v931, %v933
    %v935 = vrot.slane %v921, %v934
    %v936 = vcombine.high %v928, %v928
    %v937 = vcombine.high %v935, %v935
    %v939 = vunpack.c.l.s4 1966171168
    %v940 = vunpack.c.0.s8 %v939
    %v941 = vlaneseq
    %v942 = vshrl.u32 %v941, 7
    %v943 = vsub.s32 %v940, %v942
    %v944 = vrot.slane %v411, %v943
    %v945 = vcombine.high %v944, %v944
    %v947 = vunpack.c.l.s4 1966171168
    %v948 = vunpack.c.0.s8 %v947
    %v949 = vlaneseq
    %v950 = vshrl.u32 %v949, 7
    %v951 = vsub.s32 %v948, %v950
    %v952 = vrot.slane %v944, %v951
    %v954 = vunpack.c.l.s4 1966171168
    %v955 = vunpack.c.0.s8 %v954
    %v956 = vlaneseq
    %v957 = vshrl.u32 %v956, 7
    %v958 = vsub.s32 %v955, %v957
    %v959 = vrot.slane %v945, %v958
    %v960 = vcombine.high %v952, %v952
    %v961 = vcombine.high %v959, %v959
    %v962 = vlaneseq
    %v963 = vshrl.u32 %v962, 7
    %v964 = vsub.s32 0, %v963
    %v965 = vrot.slane %v952, %v964
    %v966 = vlaneseq
    %v967 = vshrl.u32 %v966, 7
    %v968 = vsub.s32 0, %v967
    %v969 = vrot.slane %v959, %v968
    %v970 = vlaneseq
    %v971 = vshrl.u32 %v970, 7
    %v972 = vsub.s32 0, %v971
    %v973 = vrot.slane %v960, %v972
    %v974 = vlaneseq
    %v975 = vshrl.u32 %v974, 7
    %v976 = vsub.s32 0, %v975
    %v977 = vrot.slane %v961, %v976
    %v982 = vsub.f32 %v965, %v404
    %v983 = vsub.f32 %v969, %v404
    %v984 = vsub.f32 %v973, %v404
    %v985 = vsub.f32 %v977, %v404
    %v987 = vunpack.c.l.s4 1966171168
    %v988 = vunpack.c.0.s8 %v987
    %v989 = vlaneseq
    %v990 = vshrl.u32 %v989, 7
    %v991 = vsub.s32 %v988, %v990
    %v992 = vrot.slane %v498, %v991
    %v993 = vcombine.high %v992, %v992
    %v995 = vunpack.c.l.s4 1966171168
    %v996 = vunpack.c.0.s8 %v995
    %v997 = vlaneseq
    %v998 = vshrl.u32 %v997, 7
    %v999 = vsub.s32 %v996, %v998
    %v1000 = vrot.slane %v992, %v999
    %v1002 = vunpack.c.l.s4 1966171168
    %v1003 = vunpack.c.0.s8 %v1002
    %v1004 = vlaneseq
    %v1005 = vshrl.u32 %v1004, 7
    %v1006 = vsub.s32 %v1003, %v1005
    %v1007 = vrot.slane %v993, %v1006
    %v1008 = vcombine.high %v1000, %v1000
    %v1009 = vcombine.high %v1007, %v1007
    %v1010 = vlaneseq
    %v1011 = vshrl.u32 %v1010, 7
    %v1012 = vsub.s32 0, %v1011
    %v1013 = vrot.slane %v1000, %v1012
    %v1014 = vlaneseq
    %v1015 = vshrl.u32 %v1014, 7
    %v1016 = vsub.s32 0, %v1015
    %v1017 = vrot.slane %v1007, %v1016
    %v1018 = vlaneseq
    %v1019 = vshrl.u32 %v1018, 7
    %v1020 = vsub.s32 0, %v1019
    %v1021 = vrot.slane %v1008, %v1020
    %v1022 = vlaneseq
    %v1023 = vshrl.u32 %v1022, 7
    %v1024 = vsub.s32 0, %v1023
    %v1025 = vrot.slane %v1009, %v1024
    %v1030 = vsub.f32 %v1013, %v491
    %v1031 = vsub.f32 %v1017, %v491
    %v1032 = vsub.f32 %v1021, %v491
    %v1033 = vsub.f32 %v1025, %v491
    %v1034 = vlaneseq
    %v1035 = vshrl.u32 %v1034, 7
    %v1036 = vsub.s32 0, %v1035
    %v1037 = vrot.slane %v928, %v1036
    %v1038 = vlaneseq
    %v1039 = vshrl.u32 %v1038, 7
    %v1040 = vsub.s32 0, %v1039
    %v1041 = vrot.slane %v935, %v1040
    %v1042 = vlaneseq
    %v1043 = vshrl.u32 %v1042, 7
    %v1044 = vsub.s32 0, %v1043
    %v1045 = vrot.slane %v936, %v1044
    %v1046 = vlaneseq
    %v1047 = vshrl.u32 %v1046, 7
    %v1048 = vsub.s32 0, %v1047
    %v1049 = vrot.slane %v937, %v1048
    %v1054 = vmul.f32 %v549, %v1037
    %v1055 = vmul.f32 %v549, %v1041
    %v1056 = vmul.f32 %v549, %v1045
    %v1057 = vmul.f32 %v549, %v1049
    %v1058 = vlaneseq
    %v1059 = vshrl.u32 %v1058, 7
    %v1060 = vsub.s32 0, %v1059
    %v1061 = vrot.slane %v904, %v1060
    %v1062 = vlaneseq
    %v1063 = vshrl.u32 %v1062, 7
    %v1064 = vsub.s32 0, %v1063
    %v1065 = vrot.slane %v911, %v1064
    %v1066 = vlaneseq
    %v1067 = vshrl.u32 %v1066, 7
    %v1068 = vsub.s32 0, %v1067
    %v1069 = vrot.slane %v912, %v1068
    %v1070 = vlaneseq
    %v1071 = vshrl.u32 %v1070, 7
    %v1072 = vsub.s32 0, %v1071
    %v1073 = vrot.slane %v913, %v1072
    %v1078 = vmul.f32 %v578, %v1061
    %v1079 = vmul.f32 %v578, %v1065
    %v1080 = vmul.f32 %v578, %v1069
    %v1081 = vmul.f32 %v578, %v1073
    %v1082 = vsub.f32 %v1054, %v1078
    %v1083 = vsub.f32 %v1055, %v1079
    %v1084 = vsub.f32 %v1056, %v1080
    %v1085 = vsub.f32 %v1057, %v1081
    %v1086 = vand.u32 2147483647, %v1082
    %v1087 = vand.u32 2147483647, %v1083
    %v1088 = vand.u32 2147483647, %v1084
    %v1089 = vand.u32 2147483647, %v1085
    %vm1090 = vcmp.lt.f32.partialorder %v1086, 1e-09
    %vm1091 = vcmp.lt.f32.partialorder %v1087, 1e-09
    %vm1092 = vcmp.lt.f32.partialorder %v1088, 1e-09
    %vm1093 = vcmp.lt.f32.partialorder %v1089, 1e-09
    %v1094 = vsel %vm1090, 1.0, %v1086
    %v1095 = vsel %vm1091, 1.0, %v1087
    %v1096 = vsel %vm1092, 1.0, %v1088
    %v1097 = vsel %vm1093, 1.0, %v1089
    %vm1098 = vcmp.ge.f32.partialorder %v1082, 0.0
    %vm1099 = vcmp.ge.f32.partialorder %v1083, 0.0
    %vm1100 = vcmp.ge.f32.partialorder %v1084, 0.0
    %vm1101 = vcmp.ge.f32.partialorder %v1085, 0.0
    %v1102 = vsel %vm1098, 1.0, -1.0
    %v1103 = vsel %vm1099, 1.0, -1.0
    %v1104 = vsel %vm1100, 1.0, -1.0
    %v1105 = vsel %vm1101, 1.0, -1.0
    %v1106 = vrcp.pop %v1094
    %v1107 = vrcp.pop %v1095
    %v1108 = vrcp.pop %v1096
    %v1109 = vrcp.pop %v1097
    %v1110 = vmul.f32 %v1094, %v1106
    %v1111 = vmul.f32 %v1095, %v1107
    %v1112 = vmul.f32 %v1096, %v1108
    %v1113 = vmul.f32 %v1097, %v1109
    %v1114 = vsub.f32 2.0, %v1110
    %v1115 = vsub.f32 2.0, %v1111
    %v1116 = vsub.f32 2.0, %v1112
    %v1117 = vsub.f32 2.0, %v1113
    %v1118 = vmul.f32 %v1106, %v1114
    %v1119 = vmul.f32 %v1107, %v1115
    %v1120 = vmul.f32 %v1108, %v1116
    %v1121 = vmul.f32 %v1109, %v1117
    %v1122 = vmul.f32 %v1118, %v1102
    %v1123 = vmul.f32 %v1119, %v1103
    %v1124 = vmul.f32 %v1120, %v1104
    %v1125 = vmul.f32 %v1121, %v1105
    %v1126 = vmul.f32 %v982, %v1037
    %v1127 = vmul.f32 %v983, %v1041
    %v1128 = vmul.f32 %v984, %v1045
    %v1129 = vmul.f32 %v985, %v1049
    %v1130 = vmul.f32 %v1030, %v1061
    %v1131 = vmul.f32 %v1031, %v1065
    %v1132 = vmul.f32 %v1032, %v1069
    %v1133 = vmul.f32 %v1033, %v1073
    %v1134 = vsub.f32 %v1126, %v1130
    %v1135 = vsub.f32 %v1127, %v1131
    %v1136 = vsub.f32 %v1128, %v1132
    %v1137 = vsub.f32 %v1129, %v1133
    %v1138 = vmul.f32 %v1134, %v1122
    %v1139 = vmul.f32 %v1135, %v1123
    %v1140 = vmul.f32 %v1136, %v1124
    %v1141 = vmul.f32 %v1137, %v1125
    %v1142 = vmul.f32 %v982, %v578
    %v1143 = vmul.f32 %v983, %v578
    %v1144 = vmul.f32 %v984, %v578
    %v1145 = vmul.f32 %v985, %v578
    %v1146 = vmul.f32 %v1030, %v549
    %v1147 = vmul.f32 %v1031, %v549
    %v1148 = vmul.f32 %v1032, %v549
    %v1149 = vmul.f32 %v1033, %v549
    %v1150 = vsub.f32 %v1142, %v1146
    %v1151 = vsub.f32 %v1143, %v1147
    %v1152 = vsub.f32 %v1144, %v1148
    %v1153 = vsub.f32 %v1145, %v1149
    %v1154 = vmul.f32 %v1150, %v1122
    %v1155 = vmul.f32 %v1151, %v1123
    %v1156 = vmul.f32 %v1152, %v1124
    %v1157 = vmul.f32 %v1153, %v1125
    %vm1158 = vmxor %vm1090, 1
    %vm1159 = vmxor %vm1091, 1
    %vm1160 = vmxor %vm1092, 1
    %vm1161 = vmxor %vm1093, 1
    %vm1162 = vcmp.ge.f32.partialorder %v1138, -1e-06
    %vm1163 = vcmp.ge.f32.partialorder %v1139, -1e-06
    %vm1164 = vcmp.ge.f32.partialorder %v1140, -1e-06
    %vm1165 = vcmp.ge.f32.partialorder %v1141, -1e-06
    %vm1166 = vmand %vm1158, %vm1162
    %vm1167 = vmand %vm1159, %vm1163
    %vm1168 = vmand %vm1160, %vm1164
    %vm1169 = vmand %vm1161, %vm1165
    %vm1170 = vcmp.le.f32.partialorder %v1138, 1.000001
    %vm1171 = vcmp.le.f32.partialorder %v1139, 1.000001
    %vm1172 = vcmp.le.f32.partialorder %v1140, 1.000001
    %vm1173 = vcmp.le.f32.partialorder %v1141, 1.000001
    %vm1174 = vmand %vm1166, %vm1170
    %vm1175 = vmand %vm1167, %vm1171
    %vm1176 = vmand %vm1168, %vm1172
    %vm1177 = vmand %vm1169, %vm1173
    %vm1178 = vcmp.ge.f32.partialorder %v1154, -1e-06
    %vm1179 = vcmp.ge.f32.partialorder %v1155, -1e-06
    %vm1180 = vcmp.ge.f32.partialorder %v1156, -1e-06
    %vm1181 = vcmp.ge.f32.partialorder %v1157, -1e-06
    %vm1182 = vmand %vm1174, %vm1178
    %vm1183 = vmand %vm1175, %vm1179
    %vm1184 = vmand %vm1176, %vm1180
    %vm1185 = vmand %vm1177, %vm1181
    %vm1186 = vcmp.le.f32.partialorder %v1154, 1.000001
    %vm1187 = vcmp.le.f32.partialorder %v1155, 1.000001
    %vm1188 = vcmp.le.f32.partialorder %v1156, 1.000001
    %vm1189 = vcmp.le.f32.partialorder %v1157, 1.000001
    %vm1190 = vmand %vm1182, %vm1186
    %vm1191 = vmand %vm1183, %vm1187
    %vm1192 = vmand %vm1184, %vm1188
    %vm1193 = vmand %vm1185, %vm1189
    %v1194 = vmul.f32 %v1138, %v549
    %v1195 = vmul.f32 %v1139, %v549
    %v1196 = vmul.f32 %v1140, %v549
    %v1197 = vmul.f32 %v1141, %v549
    %v1198 = vadd.f32 %v404, %v1194
    %v1199 = vadd.f32 %v404, %v1195
    %v1200 = vadd.f32 %v404, %v1196
    %v1201 = vadd.f32 %v404, %v1197
    %v1202 = vmul.f32 %v1138, %v578
    %v1203 = vmul.f32 %v1139, %v578
    %v1204 = vmul.f32 %v1140, %v578
    %v1205 = vmul.f32 %v1141, %v578
    %v1206 = vadd.f32 %v491, %v1202
    %v1207 = vadd.f32 %v491, %v1203
    %v1208 = vadd.f32 %v491, %v1204
    %v1209 = vadd.f32 %v491, %v1205
    %v1210 = vsel %vm1190, 1, 0
    %v1211 = vsel %vm1191, 1, 0
    %v1212 = vsel %vm1192, 1, 0
    %v1213 = vsel %vm1193, 1, 0
    %v1214 = vrot.slane %v411, 4
    %v1217 = vrot.slane %v1199, 4
    %v1220 = vrot.slane %v1201, 4
    %v1222 = vsel %vm25, %v404, %v1214
    %v1223 = vsel %vm25, %v1198, %v1217
    %v1224 = vsel %vm25, %v1200, %v1220
    %v1225 = vrot.slane %v498, 4
    %v1228 = vrot.slane %v1207, 4
    %v1231 = vrot.slane %v1209, 4
    %v1233 = vsel %vm25, %v491, %v1225
    %v1234 = vsel %vm25, %v1206, %v1228
    %v1235 = vsel %vm25, %v1208, %v1231
    %v1236 = vrot.slane %v889, 4
    %v1237 = vrot.slane %v1211, 4
    %v1238 = vrot.slane %v1213, 4
    %v1239 = vsel %vm25, %v887, %v1236
    %v1240 = vsel %vm25, %v1210, %v1237
    %v1241 = vsel %vm25, %v1212, %v1238
    %vm1242 = vcmp.gt.s32.totalorder %v1239, 0
    %vm1243 = vcmp.gt.s32.totalorder %v1240, 0
    %vm1244 = vcmp.gt.s32.totalorder %v1241, 0
    %v1245 = vadd.s32 %v1239, %v1240
    %v1246 = vadd.s32 %v1245, %v1241
    %v1247 = vrot.slane %v1246, 4
    %v1248 = vadd.s32 %v1246, %v1247
    %v1249 = vrot.slane %v1248, 2
    %v1250 = vadd.s32 %v1248, %v1249
    %v1251 = vrot.slane %v1250, 1
    %v1252 = vadd.s32 %v1250, %v1251
    %v1253 = vadd.s32 %v118, 8
    %v1254 = vadd.s32 %v118, 16
    %v1255 = vlaneseq
    %v1256 = vshrl.u32 %v1255, 7
    %v1257 = vsub.s32 4, %v1256
    %v1258 = vrot.slane %v118, %v1257
    %v1259 = vlaneseq
    %v1260 = vshrl.u32 %v1259, 7
    %v1261 = vsub.s32 5, %v1260
    %v1262 = vrot.slane %v118, %v1261
    %v1263 = vlaneseq
    %v1264 = vshrl.u32 %v1263, 7
    %v1265 = vsub.s32 6, %v1264
    %v1266 = vrot.slane %v118, %v1265
    %v1267 = vlaneseq
    %v1268 = vshrl.u32 %v1267, 7
    %v1269 = vsub.s32 7, %v1268
    %v1270 = vrot.slane %v118, %v1269
    %v1271 = vlaneseq
    %v1272 = vshrl.u32 %v1271, 7
    %v1273 = vsub.s32 0, %v1272
    %v1274 = vrot.slane %v1253, %v1273
    %v1275 = vlaneseq
    %v1276 = vshrl.u32 %v1275, 7
    %v1277 = vsub.s32 1, %v1276
    %v1278 = vrot.slane %v1253, %v1277
    %v1279 = vlaneseq
    %v1280 = vshrl.u32 %v1279, 7
    %v1281 = vsub.s32 2, %v1280
    %v1282 = vrot.slane %v1253, %v1281
    %v1283 = vlaneseq
    %v1284 = vshrl.u32 %v1283, 7
    %v1285 = vsub.s32 3, %v1284
    %v1286 = vrot.slane %v1253, %v1285
    %v1287 = vlaneseq
    %v1288 = vshrl.u32 %v1287, 7
    %v1289 = vsub.s32 4, %v1288
    %v1290 = vrot.slane %v1253, %v1289
    %v1291 = vlaneseq
    %v1292 = vshrl.u32 %v1291, 7
    %v1293 = vsub.s32 5, %v1292
    %v1294 = vrot.slane %v1253, %v1293
    %v1295 = vlaneseq
    %v1296 = vshrl.u32 %v1295, 7
    %v1297 = vsub.s32 6, %v1296
    %v1298 = vrot.slane %v1253, %v1297
    %v1299 = vlaneseq
    %v1300 = vshrl.u32 %v1299, 7
    %v1301 = vsub.s32 7, %v1300
    %v1302 = vrot.slane %v1253, %v1301
    %v1303 = vlaneseq
    %v1304 = vshrl.u32 %v1303, 7
    %v1305 = vsub.s32 0, %v1304
    %v1306 = vrot.slane %v1254, %v1305
    %v1307 = vlaneseq
    %v1308 = vshrl.u32 %v1307, 7
    %v1309 = vsub.s32 1, %v1308
    %v1310 = vrot.slane %v1254, %v1309
    %v1311 = vlaneseq
    %v1312 = vshrl.u32 %v1311, 7
    %v1313 = vsub.s32 2, %v1312
    %v1314 = vrot.slane %v1254, %v1313
    %v1315 = vlaneseq
    %v1316 = vshrl.u32 %v1315, 7
    %v1317 = vsub.s32 3, %v1316
    %v1318 = vrot.slane %v1254, %v1317
    %v1319 = vlaneseq
    %v1320 = vshrl.u32 %v1319, 7
    %v1321 = vsub.s32 4, %v1320
    %v1322 = vrot.slane %v1254, %v1321
    %v1323 = vlaneseq
    %v1324 = vshrl.u32 %v1323, 7
    %v1325 = vsub.s32 5, %v1324
    %v1326 = vrot.slane %v1254, %v1325
    %v1327 = vlaneseq
    %v1328 = vshrl.u32 %v1327, 7
    %v1329 = vsub.s32 6, %v1328
    %v1330 = vrot.slane %v1254, %v1329
    %v1331 = vlaneseq
    %v1332 = vshrl.u32 %v1331, 7
    %v1333 = vsub.s32 7, %v1332
    %v1334 = vrot.slane %v1254, %v1333
    %vm1335 = vcmp.lt.s32.totalorder %v149, %v1253
    %vm1336 = vcmp.lt.s32.totalorder %v149, %v1254
    %vm1337 = vcmp.lt.s32.totalorder %v153, %v1253
    %vm1338 = vcmp.lt.s32.totalorder %v153, %v1254
    %vm1339 = vcmp.lt.s32.totalorder %v157, %v1253
    %vm1340 = vcmp.lt.s32.totalorder %v157, %v1254
    %vm1341 = vcmp.lt.s32.totalorder %v161, %v1253
    %vm1342 = vcmp.lt.s32.totalorder %v161, %v1254
    %vm1343 = vcmp.lt.s32.totalorder %v1258, %v118
    %vm1344 = vcmp.lt.s32.totalorder %v1258, %v1253
    %vm1345 = vcmp.lt.s32.totalorder %v1258, %v1254
    %vm1346 = vcmp.lt.s32.totalorder %v1262, %v118
    %vm1347 = vcmp.lt.s32.totalorder %v1262, %v1253
    %vm1348 = vcmp.lt.s32.totalorder %v1262, %v1254
    %vm1349 = vcmp.lt.s32.totalorder %v1266, %v118
    %vm1350 = vcmp.lt.s32.totalorder %v1266, %v1253
    %vm1351 = vcmp.lt.s32.totalorder %v1266, %v1254
    %vm1352 = vcmp.lt.s32.totalorder %v1270, %v118
    %vm1353 = vcmp.lt.s32.totalorder %v1270, %v1253
    %vm1354 = vcmp.lt.s32.totalorder %v1270, %v1254
    %vm1355 = vcmp.lt.s32.totalorder %v1274, %v118
    %vm1356 = vcmp.lt.s32.totalorder %v1274, %v1253
    %vm1357 = vcmp.lt.s32.totalorder %v1274, %v1254
    %vm1358 = vcmp.lt.s32.totalorder %v1278, %v118
    %vm1359 = vcmp.lt.s32.totalorder %v1278, %v1253
    %vm1360 = vcmp.lt.s32.totalorder %v1278, %v1254
    %vm1361 = vcmp.lt.s32.totalorder %v1282, %v118
    %vm1362 = vcmp.lt.s32.totalorder %v1282, %v1253
    %vm1363 = vcmp.lt.s32.totalorder %v1282, %v1254
    %vm1364 = vcmp.lt.s32.totalorder %v1286, %v118
    %vm1365 = vcmp.lt.s32.totalorder %v1286, %v1253
    %vm1366 = vcmp.lt.s32.totalorder %v1286, %v1254
    %vm1367 = vcmp.lt.s32.totalorder %v1290, %v118
    %vm1368 = vcmp.lt.s32.totalorder %v1290, %v1253
    %vm1369 = vcmp.lt.s32.totalorder %v1290, %v1254
    %vm1370 = vcmp.lt.s32.totalorder %v1294, %v118
    %vm1371 = vcmp.lt.s32.totalorder %v1294, %v1253
    %vm1372 = vcmp.lt.s32.totalorder %v1294, %v1254
    %vm1373 = vcmp.lt.s32.totalorder %v1298, %v118
    %vm1374 = vcmp.lt.s32.totalorder %v1298, %v1253
    %vm1375 = vcmp.lt.s32.totalorder %v1298, %v1254
    %vm1376 = vcmp.lt.s32.totalorder %v1302, %v118
    %vm1377 = vcmp.lt.s32.totalorder %v1302, %v1253
    %vm1378 = vcmp.lt.s32.totalorder %v1302, %v1254
    %vm1379 = vcmp.lt.s32.totalorder %v1306, %v118
    %vm1380 = vcmp.lt.s32.totalorder %v1306, %v1253
    %vm1381 = vcmp.lt.s32.totalorder %v1306, %v1254
    %vm1382 = vcmp.lt.s32.totalorder %v1310, %v118
    %vm1383 = vcmp.lt.s32.totalorder %v1310, %v1253
    %vm1384 = vcmp.lt.s32.totalorder %v1310, %v1254
    %vm1385 = vcmp.lt.s32.totalorder %v1314, %v118
    %vm1386 = vcmp.lt.s32.totalorder %v1314, %v1253
    %vm1387 = vcmp.lt.s32.totalorder %v1314, %v1254
    %vm1388 = vcmp.lt.s32.totalorder %v1318, %v118
    %vm1389 = vcmp.lt.s32.totalorder %v1318, %v1253
    %vm1390 = vcmp.lt.s32.totalorder %v1318, %v1254
    %vm1391 = vcmp.lt.s32.totalorder %v1322, %v118
    %vm1392 = vcmp.lt.s32.totalorder %v1322, %v1253
    %vm1393 = vcmp.lt.s32.totalorder %v1322, %v1254
    %vm1394 = vcmp.lt.s32.totalorder %v1326, %v118
    %vm1395 = vcmp.lt.s32.totalorder %v1326, %v1253
    %vm1396 = vcmp.lt.s32.totalorder %v1326, %v1254
    %vm1397 = vcmp.lt.s32.totalorder %v1330, %v118
    %vm1398 = vcmp.lt.s32.totalorder %v1330, %v1253
    %vm1399 = vcmp.lt.s32.totalorder %v1330, %v1254
    %vm1400 = vcmp.lt.s32.totalorder %v1334, %v118
    %vm1401 = vcmp.lt.s32.totalorder %v1334, %v1253
    %vm1402 = vcmp.lt.s32.totalorder %v1334, %v1254
    %v1403 = vcombine.high %v1239, %v1239
    %v1405 = vunpack.c.l.s4 1966171168
    %v1406 = vunpack.c.0.s8 %v1405
    %v1407 = vlaneseq
    %v1408 = vshrl.u32 %v1407, 7
    %v1409 = vsub.s32 %v1406, %v1408
    %v1410 = vrot.slane %v1239, %v1409
    %v1412 = vunpack.c.l.s4 1966171168
    %v1413 = vunpack.c.0.s8 %v1412
    %v1414 = vlaneseq
    %v1415 = vshrl.u32 %v1414, 7
    %v1416 = vsub.s32 %v1413, %v1415
    %v1417 = vrot.slane %v1403, %v1416
    %v1418 = vcombine.high %v1410, %v1410
    %v1419 = vcombine.high %v1417, %v1417
    %v1421 = vunpack.c.l.s4 1966171168
    %v1422 = vunpack.c.0.s8 %v1421
    %v1423 = vlaneseq
    %v1424 = vshrl.u32 %v1423, 7
    %v1425 = vsub.s32 %v1422, %v1424
    %v1426 = vrot.slane %v1410, %v1425
    %v1428 = vunpack.c.l.s4 1966171168
    %v1429 = vunpack.c.0.s8 %v1428
    %v1430 = vlaneseq
    %v1431 = vshrl.u32 %v1430, 7
    %v1432 = vsub.s32 %v1429, %v1431
    %v1433 = vrot.slane %v1417, %v1432
    %v1435 = vunpack.c.l.s4 1966171168
    %v1436 = vunpack.c.0.s8 %v1435
    %v1437 = vlaneseq
    %v1438 = vshrl.u32 %v1437, 7
    %v1439 = vsub.s32 %v1436, %v1438
    %v1440 = vrot.slane %v1418, %v1439
    %v1442 = vunpack.c.l.s4 1966171168
    %v1443 = vunpack.c.0.s8 %v1442
    %v1444 = vlaneseq
    %v1445 = vshrl.u32 %v1444, 7
    %v1446 = vsub.s32 %v1443, %v1445
    %v1447 = vrot.slane %v1419, %v1446
    %v1448 = vcombine.high %v1426, %v1426
    %v1449 = vcombine.high %v1433, %v1433
    %v1450 = vcombine.high %v1440, %v1440
    %v1451 = vcombine.high %v1447, %v1447
    %v1452 = vcombine.high %v1240, %v1240
    %v1454 = vunpack.c.l.s4 1966171168
    %v1455 = vunpack.c.0.s8 %v1454
    %v1456 = vlaneseq
    %v1457 = vshrl.u32 %v1456, 7
    %v1458 = vsub.s32 %v1455, %v1457
    %v1459 = vrot.slane %v1240, %v1458
    %v1461 = vunpack.c.l.s4 1966171168
    %v1462 = vunpack.c.0.s8 %v1461
    %v1463 = vlaneseq
    %v1464 = vshrl.u32 %v1463, 7
    %v1465 = vsub.s32 %v1462, %v1464
    %v1466 = vrot.slane %v1452, %v1465
    %v1467 = vcombine.high %v1459, %v1459
    %v1468 = vcombine.high %v1466, %v1466
    %v1470 = vunpack.c.l.s4 1966171168
    %v1471 = vunpack.c.0.s8 %v1470
    %v1472 = vlaneseq
    %v1473 = vshrl.u32 %v1472, 7
    %v1474 = vsub.s32 %v1471, %v1473
    %v1475 = vrot.slane %v1459, %v1474
    %v1477 = vunpack.c.l.s4 1966171168
    %v1478 = vunpack.c.0.s8 %v1477
    %v1479 = vlaneseq
    %v1480 = vshrl.u32 %v1479, 7
    %v1481 = vsub.s32 %v1478, %v1480
    %v1482 = vrot.slane %v1466, %v1481
    %v1484 = vunpack.c.l.s4 1966171168
    %v1485 = vunpack.c.0.s8 %v1484
    %v1486 = vlaneseq
    %v1487 = vshrl.u32 %v1486, 7
    %v1488 = vsub.s32 %v1485, %v1487
    %v1489 = vrot.slane %v1467, %v1488
    %v1491 = vunpack.c.l.s4 1966171168
    %v1492 = vunpack.c.0.s8 %v1491
    %v1493 = vlaneseq
    %v1494 = vshrl.u32 %v1493, 7
    %v1495 = vsub.s32 %v1492, %v1494
    %v1496 = vrot.slane %v1468, %v1495
    %v1497 = vcombine.high %v1475, %v1475
    %v1498 = vcombine.high %v1482, %v1482
    %v1499 = vcombine.high %v1489, %v1489
    %v1500 = vcombine.high %v1496, %v1496
    %v1501 = vcombine.high %v1241, %v1241
    %v1503 = vunpack.c.l.s4 1966171168
    %v1504 = vunpack.c.0.s8 %v1503
    %v1505 = vlaneseq
    %v1506 = vshrl.u32 %v1505, 7
    %v1507 = vsub.s32 %v1504, %v1506
    %v1508 = vrot.slane %v1241, %v1507
    %v1510 = vunpack.c.l.s4 1966171168
    %v1511 = vunpack.c.0.s8 %v1510
    %v1512 = vlaneseq
    %v1513 = vshrl.u32 %v1512, 7
    %v1514 = vsub.s32 %v1511, %v1513
    %v1515 = vrot.slane %v1501, %v1514
    %v1516 = vcombine.high %v1508, %v1508
    %v1517 = vcombine.high %v1515, %v1515
    %v1519 = vunpack.c.l.s4 1966171168
    %v1520 = vunpack.c.0.s8 %v1519
    %v1521 = vlaneseq
    %v1522 = vshrl.u32 %v1521, 7
    %v1523 = vsub.s32 %v1520, %v1522
    %v1524 = vrot.slane %v1508, %v1523
    %v1526 = vunpack.c.l.s4 1966171168
    %v1527 = vunpack.c.0.s8 %v1526
    %v1528 = vlaneseq
    %v1529 = vshrl.u32 %v1528, 7
    %v1530 = vsub.s32 %v1527, %v1529
    %v1531 = vrot.slane %v1515, %v1530
    %v1533 = vunpack.c.l.s4 1966171168
    %v1534 = vunpack.c.0.s8 %v1533
    %v1535 = vlaneseq
    %v1536 = vshrl.u32 %v1535, 7
    %v1537 = vsub.s32 %v1534, %v1536
    %v1538 = vrot.slane %v1516, %v1537
    %v1540 = vunpack.c.l.s4 1966171168
    %v1541 = vunpack.c.0.s8 %v1540
    %v1542 = vlaneseq
    %v1543 = vshrl.u32 %v1542, 7
    %v1544 = vsub.s32 %v1541, %v1543
    %v1545 = vrot.slane %v1517, %v1544
    %v1546 = vcombine.high %v1524, %v1524
    %v1547 = vcombine.high %v1531, %v1531
    %v1548 = vcombine.high %v1538, %v1538
    %v1549 = vcombine.high %v1545, %v1545
    %v1550 = vlaneseq
    %v1551 = vshrl.u32 %v1550, 7
    %v1552 = vsub.s32 0, %v1551
    %v1553 = vrot.slane %v1426, %v1552
    %v1554 = vlaneseq
    %v1555 = vshrl.u32 %v1554, 7
    %v1556 = vsub.s32 0, %v1555
    %v1557 = vrot.slane %v1440, %v1556
    %v1558 = vlaneseq
    %v1559 = vshrl.u32 %v1558, 7
    %v1560 = vsub.s32 0, %v1559
    %v1561 = vrot.slane %v1448, %v1560
    %v1562 = vlaneseq
    %v1563 = vshrl.u32 %v1562, 7
    %v1564 = vsub.s32 0, %v1563
    %v1565 = vrot.slane %v1450, %v1564
    %v1566 = vlaneseq
    %v1567 = vshrl.u32 %v1566, 7
    %v1568 = vsub.s32 0, %v1567
    %v1569 = vrot.slane %v1433, %v1568
    %v1570 = vlaneseq
    %v1571 = vshrl.u32 %v1570, 7
    %v1572 = vsub.s32 0, %v1571
    %v1573 = vrot.slane %v1447, %v1572
    %v1574 = vlaneseq
    %v1575 = vshrl.u32 %v1574, 7
    %v1576 = vsub.s32 0, %v1575
    %v1577 = vrot.slane %v1449, %v1576
    %v1578 = vlaneseq
    %v1579 = vshrl.u32 %v1578, 7
    %v1580 = vsub.s32 0, %v1579
    %v1581 = vrot.slane %v1451, %v1580
    %v1582 = vlaneseq
    %v1583 = vshrl.u32 %v1582, 7
    %v1584 = vsub.s32 0, %v1583
    %v1585 = vrot.slane %v1475, %v1584
    %v1586 = vlaneseq
    %v1587 = vshrl.u32 %v1586, 7
    %v1588 = vsub.s32 0, %v1587
    %v1589 = vrot.slane %v1489, %v1588
    %v1590 = vlaneseq
    %v1591 = vshrl.u32 %v1590, 7
    %v1592 = vsub.s32 0, %v1591
    %v1593 = vrot.slane %v1497, %v1592
    %v1594 = vlaneseq
    %v1595 = vshrl.u32 %v1594, 7
    %v1596 = vsub.s32 0, %v1595
    %v1597 = vrot.slane %v1499, %v1596
    %v1598 = vlaneseq
    %v1599 = vshrl.u32 %v1598, 7
    %v1600 = vsub.s32 0, %v1599
    %v1601 = vrot.slane %v1482, %v1600
    %v1602 = vlaneseq
    %v1603 = vshrl.u32 %v1602, 7
    %v1604 = vsub.s32 0, %v1603
    %v1605 = vrot.slane %v1496, %v1604
    %v1606 = vlaneseq
    %v1607 = vshrl.u32 %v1606, 7
    %v1608 = vsub.s32 0, %v1607
    %v1609 = vrot.slane %v1498, %v1608
    %v1610 = vlaneseq
    %v1611 = vshrl.u32 %v1610, 7
    %v1612 = vsub.s32 0, %v1611
    %v1613 = vrot.slane %v1500, %v1612
    %v1614 = vlaneseq
    %v1615 = vshrl.u32 %v1614, 7
    %v1616 = vsub.s32 0, %v1615
    %v1617 = vrot.slane %v1524, %v1616
    %v1618 = vlaneseq
    %v1619 = vshrl.u32 %v1618, 7
    %v1620 = vsub.s32 0, %v1619
    %v1621 = vrot.slane %v1538, %v1620
    %v1622 = vlaneseq
    %v1623 = vshrl.u32 %v1622, 7
    %v1624 = vsub.s32 0, %v1623
    %v1625 = vrot.slane %v1546, %v1624
    %v1626 = vlaneseq
    %v1627 = vshrl.u32 %v1626, 7
    %v1628 = vsub.s32 0, %v1627
    %v1629 = vrot.slane %v1548, %v1628
    %v1630 = vlaneseq
    %v1631 = vshrl.u32 %v1630, 7
    %v1632 = vsub.s32 0, %v1631
    %v1633 = vrot.slane %v1531, %v1632
    %v1634 = vlaneseq
    %v1635 = vshrl.u32 %v1634, 7
    %v1636 = vsub.s32 0, %v1635
    %v1637 = vrot.slane %v1545, %v1636
    %v1638 = vlaneseq
    %v1639 = vshrl.u32 %v1638, 7
    %v1640 = vsub.s32 0, %v1639
    %v1641 = vrot.slane %v1547, %v1640
    %v1642 = vlaneseq
    %v1643 = vshrl.u32 %v1642, 7
    %v1644 = vsub.s32 0, %v1643
    %v1645 = vrot.slane %v1549, %v1644
    %v1646 = vsel %vm218, %v1553, 0
    %v1647 = vsel %vm1335, %v1553, 0
    %v1648 = vsel %vm1336, %v1553, 0
    %v1649 = vsel %vm219, %v1557, 0
    %v1650 = vsel %vm1337, %v1557, 0
    %v1651 = vsel %vm1338, %v1557, 0
    %v1652 = vsel %vm220, %v1561, 0
    %v1653 = vsel %vm1339, %v1561, 0
    %v1654 = vsel %vm1340, %v1561, 0
    %v1655 = vsel %vm221, %v1565, 0
    %v1656 = vsel %vm1341, %v1565, 0
    %v1657 = vsel %vm1342, %v1565, 0
    %v1658 = vsel %vm1343, %v1569, 0
    %v1659 = vsel %vm1344, %v1569, 0
    %v1660 = vsel %vm1345, %v1569, 0
    %v1661 = vsel %vm1346, %v1573, 0
    %v1662 = vsel %vm1347, %v1573, 0
    %v1663 = vsel %vm1348, %v1573, 0
    %v1664 = vsel %vm1349, %v1577, 0
    %v1665 = vsel %vm1350, %v1577, 0
    %v1666 = vsel %vm1351, %v1577, 0
    %v1667 = vsel %vm1352, %v1581, 0
    %v1668 = vsel %vm1353, %v1581, 0
    %v1669 = vsel %vm1354, %v1581, 0
    %v1670 = vsel %vm1355, %v1585, 0
    %v1671 = vsel %vm1356, %v1585, 0
    %v1672 = vsel %vm1357, %v1585, 0
    %v1673 = vsel %vm1358, %v1589, 0
    %v1674 = vsel %vm1359, %v1589, 0
    %v1675 = vsel %vm1360, %v1589, 0
    %v1676 = vsel %vm1361, %v1593, 0
    %v1677 = vsel %vm1362, %v1593, 0
    %v1678 = vsel %vm1363, %v1593, 0
    %v1679 = vsel %vm1364, %v1597, 0
    %v1680 = vsel %vm1365, %v1597, 0
    %v1681 = vsel %vm1366, %v1597, 0
    %v1682 = vsel %vm1367, %v1601, 0
    %v1683 = vsel %vm1368, %v1601, 0
    %v1684 = vsel %vm1369, %v1601, 0
    %v1685 = vsel %vm1370, %v1605, 0
    %v1686 = vsel %vm1371, %v1605, 0
    %v1687 = vsel %vm1372, %v1605, 0
    %v1688 = vsel %vm1373, %v1609, 0
    %v1689 = vsel %vm1374, %v1609, 0
    %v1690 = vsel %vm1375, %v1609, 0
    %v1691 = vsel %vm1376, %v1613, 0
    %v1692 = vsel %vm1377, %v1613, 0
    %v1693 = vsel %vm1378, %v1613, 0
    %v1694 = vsel %vm1379, %v1617, 0
    %v1695 = vsel %vm1380, %v1617, 0
    %v1696 = vsel %vm1381, %v1617, 0
    %v1697 = vsel %vm1382, %v1621, 0
    %v1698 = vsel %vm1383, %v1621, 0
    %v1699 = vsel %vm1384, %v1621, 0
    %v1700 = vsel %vm1385, %v1625, 0
    %v1701 = vsel %vm1386, %v1625, 0
    %v1702 = vsel %vm1387, %v1625, 0
    %v1703 = vsel %vm1388, %v1629, 0
    %v1704 = vsel %vm1389, %v1629, 0
    %v1705 = vsel %vm1390, %v1629, 0
    %v1706 = vsel %vm1391, %v1633, 0
    %v1707 = vsel %vm1392, %v1633, 0
    %v1708 = vsel %vm1393, %v1633, 0
    %v1709 = vsel %vm1394, %v1637, 0
    %v1710 = vsel %vm1395, %v1637, 0
    %v1711 = vsel %vm1396, %v1637, 0
    %v1712 = vsel %vm1397, %v1641, 0
    %v1713 = vsel %vm1398, %v1641, 0
    %v1714 = vsel %vm1399, %v1641, 0
    %v1715 = vsel %vm1400, %v1645, 0
    %v1716 = vsel %vm1401, %v1645, 0
    %v1717 = vsel %vm1402, %v1645, 0
    %v1718 = vadd.s32 %v1646, %v1652
    %v1719 = vadd.s32 %v1649, %v1655
    %v1720 = vadd.s32 %v1718, %v1658
    %v1721 = vadd.s32 %v1719, %v1661
    %v1722 = vadd.s32 %v1720, %v1664
    %v1723 = vadd.s32 %v1721, %v1667
    %v1724 = vadd.s32 %v1722, %v1670
    %v1725 = vadd.s32 %v1723, %v1673
    %v1726 = vadd.s32 %v1724, %v1676
    %v1727 = vadd.s32 %v1725, %v1679
    %v1728 = vadd.s32 %v1726, %v1682
    %v1729 = vadd.s32 %v1727, %v1685
    %v1730 = vadd.s32 %v1728, %v1688
    %v1731 = vadd.s32 %v1729, %v1691
    %v1732 = vadd.s32 %v1730, %v1694
    %v1733 = vadd.s32 %v1731, %v1697
    %v1734 = vadd.s32 %v1732, %v1700
    %v1735 = vadd.s32 %v1733, %v1703
    %v1736 = vadd.s32 %v1734, %v1706
    %v1737 = vadd.s32 %v1735, %v1709
    %v1738 = vadd.s32 %v1736, %v1712
    %v1739 = vadd.s32 %v1737, %v1715
    %v1740 = vadd.s32 %v1738, %v1739
    %v1741 = vadd.s32 %v1647, %v1653
    %v1742 = vadd.s32 %v1650, %v1656
    %v1743 = vadd.s32 %v1741, %v1659
    %v1744 = vadd.s32 %v1742, %v1662
    %v1745 = vadd.s32 %v1743, %v1665
    %v1746 = vadd.s32 %v1744, %v1668
    %v1747 = vadd.s32 %v1745, %v1671
    %v1748 = vadd.s32 %v1746, %v1674
    %v1749 = vadd.s32 %v1747, %v1677
    %v1750 = vadd.s32 %v1748, %v1680
    %v1751 = vadd.s32 %v1749, %v1683
    %v1752 = vadd.s32 %v1750, %v1686
    %v1753 = vadd.s32 %v1751, %v1689
    %v1754 = vadd.s32 %v1752, %v1692
    %v1755 = vadd.s32 %v1753, %v1695
    %v1756 = vadd.s32 %v1754, %v1698
    %v1757 = vadd.s32 %v1755, %v1701
    %v1758 = vadd.s32 %v1756, %v1704
    %v1759 = vadd.s32 %v1757, %v1707
    %v1760 = vadd.s32 %v1758, %v1710
    %v1761 = vadd.s32 %v1759, %v1713
    %v1762 = vadd.s32 %v1760, %v1716
    %v1763 = vadd.s32 %v1761, %v1762
    %v1764 = vadd.s32 %v1648, %v1654
    %v1765 = vadd.s32 %v1651, %v1657
    %v1766 = vadd.s32 %v1764, %v1660
    %v1767 = vadd.s32 %v1765, %v1663
    %v1768 = vadd.s32 %v1766, %v1666
    %v1769 = vadd.s32 %v1767, %v1669
    %v1770 = vadd.s32 %v1768, %v1672
    %v1771 = vadd.s32 %v1769, %v1675
    %v1772 = vadd.s32 %v1770, %v1678
    %v1773 = vadd.s32 %v1771, %v1681
    %v1774 = vadd.s32 %v1772, %v1684
    %v1775 = vadd.s32 %v1773, %v1687
    %v1776 = vadd.s32 %v1774, %v1690
    %v1777 = vadd.s32 %v1775, %v1693
    %v1778 = vadd.s32 %v1776, %v1696
    %v1779 = vadd.s32 %v1777, %v1699
    %v1780 = vadd.s32 %v1778, %v1702
    %v1781 = vadd.s32 %v1779, %v1705
    %v1782 = vadd.s32 %v1780, %v1708
    %v1783 = vadd.s32 %v1781, %v1711
    %v1784 = vadd.s32 %v1782, %v1714
    %v1785 = vadd.s32 %v1783, %v1717
    %v1786 = vadd.s32 %v1784, %v1785
    %v1787 = vsel %vm1242, %v1740, 24
    %v1788 = vsel %vm1243, %v1763, 24
    %v1789 = vsel %vm1244, %v1786, 24
    %v1790 = vcombine.high %v1787, %v1787
    %v1792 = vunpack.c.l.s4 1966171168
    %v1793 = vunpack.c.0.s8 %v1792
    %v1794 = vlaneseq
    %v1795 = vshrl.u32 %v1794, 7
    %v1796 = vsub.s32 %v1793, %v1795
    %v1797 = vrot.slane %v1787, %v1796
    %v1799 = vunpack.c.l.s4 1966171168
    %v1800 = vunpack.c.0.s8 %v1799
    %v1801 = vlaneseq
    %v1802 = vshrl.u32 %v1801, 7
    %v1803 = vsub.s32 %v1800, %v1802
    %v1804 = vrot.slane %v1790, %v1803
    %v1805 = vcombine.high %v1797, %v1797
    %v1806 = vcombine.high %v1804, %v1804
    %v1808 = vunpack.c.l.s4 1966171168
    %v1809 = vunpack.c.0.s8 %v1808
    %v1810 = vlaneseq
    %v1811 = vshrl.u32 %v1810, 7
    %v1812 = vsub.s32 %v1809, %v1811
    %v1813 = vrot.slane %v1797, %v1812
    %v1815 = vunpack.c.l.s4 1966171168
    %v1816 = vunpack.c.0.s8 %v1815
    %v1817 = vlaneseq
    %v1818 = vshrl.u32 %v1817, 7
    %v1819 = vsub.s32 %v1816, %v1818
    %v1820 = vrot.slane %v1804, %v1819
    %v1822 = vunpack.c.l.s4 1966171168
    %v1823 = vunpack.c.0.s8 %v1822
    %v1824 = vlaneseq
    %v1825 = vshrl.u32 %v1824, 7
    %v1826 = vsub.s32 %v1823, %v1825
    %v1827 = vrot.slane %v1805, %v1826
    %v1829 = vunpack.c.l.s4 1966171168
    %v1830 = vunpack.c.0.s8 %v1829
    %v1831 = vlaneseq
    %v1832 = vshrl.u32 %v1831, 7
    %v1833 = vsub.s32 %v1830, %v1832
    %v1834 = vrot.slane %v1806, %v1833
    %v1835 = vcombine.high %v1813, %v1813
    %v1836 = vcombine.high %v1820, %v1820
    %v1837 = vcombine.high %v1827, %v1827
    %v1838 = vcombine.high %v1834, %v1834
    %v1839 = vcombine.high %v1788, %v1788
    %v1841 = vunpack.c.l.s4 1966171168
    %v1842 = vunpack.c.0.s8 %v1841
    %v1843 = vlaneseq
    %v1844 = vshrl.u32 %v1843, 7
    %v1845 = vsub.s32 %v1842, %v1844
    %v1846 = vrot.slane %v1788, %v1845
    %v1848 = vunpack.c.l.s4 1966171168
    %v1849 = vunpack.c.0.s8 %v1848
    %v1850 = vlaneseq
    %v1851 = vshrl.u32 %v1850, 7
    %v1852 = vsub.s32 %v1849, %v1851
    %v1853 = vrot.slane %v1839, %v1852
    %v1854 = vcombine.high %v1846, %v1846
    %v1855 = vcombine.high %v1853, %v1853
    %v1857 = vunpack.c.l.s4 1966171168
    %v1858 = vunpack.c.0.s8 %v1857
    %v1859 = vlaneseq
    %v1860 = vshrl.u32 %v1859, 7
    %v1861 = vsub.s32 %v1858, %v1860
    %v1862 = vrot.slane %v1846, %v1861
    %v1864 = vunpack.c.l.s4 1966171168
    %v1865 = vunpack.c.0.s8 %v1864
    %v1866 = vlaneseq
    %v1867 = vshrl.u32 %v1866, 7
    %v1868 = vsub.s32 %v1865, %v1867
    %v1869 = vrot.slane %v1853, %v1868
    %v1871 = vunpack.c.l.s4 1966171168
    %v1872 = vunpack.c.0.s8 %v1871
    %v1873 = vlaneseq
    %v1874 = vshrl.u32 %v1873, 7
    %v1875 = vsub.s32 %v1872, %v1874
    %v1876 = vrot.slane %v1854, %v1875
    %v1878 = vunpack.c.l.s4 1966171168
    %v1879 = vunpack.c.0.s8 %v1878
    %v1880 = vlaneseq
    %v1881 = vshrl.u32 %v1880, 7
    %v1882 = vsub.s32 %v1879, %v1881
    %v1883 = vrot.slane %v1855, %v1882
    %v1884 = vcombine.high %v1862, %v1862
    %v1885 = vcombine.high %v1869, %v1869
    %v1886 = vcombine.high %v1876, %v1876
    %v1887 = vcombine.high %v1883, %v1883
    %v1888 = vcombine.high %v1789, %v1789
    %v1890 = vunpack.c.l.s4 1966171168
    %v1891 = vunpack.c.0.s8 %v1890
    %v1892 = vlaneseq
    %v1893 = vshrl.u32 %v1892, 7
    %v1894 = vsub.s32 %v1891, %v1893
    %v1895 = vrot.slane %v1789, %v1894
    %v1897 = vunpack.c.l.s4 1966171168
    %v1898 = vunpack.c.0.s8 %v1897
    %v1899 = vlaneseq
    %v1900 = vshrl.u32 %v1899, 7
    %v1901 = vsub.s32 %v1898, %v1900
    %v1902 = vrot.slane %v1888, %v1901
    %v1903 = vcombine.high %v1895, %v1895
    %v1904 = vcombine.high %v1902, %v1902
    %v1906 = vunpack.c.l.s4 1966171168
    %v1907 = vunpack.c.0.s8 %v1906
    %v1908 = vlaneseq
    %v1909 = vshrl.u32 %v1908, 7
    %v1910 = vsub.s32 %v1907, %v1909
    %v1911 = vrot.slane %v1895, %v1910
    %v1913 = vunpack.c.l.s4 1966171168
    %v1914 = vunpack.c.0.s8 %v1913
    %v1915 = vlaneseq
    %v1916 = vshrl.u32 %v1915, 7
    %v1917 = vsub.s32 %v1914, %v1916
    %v1918 = vrot.slane %v1902, %v1917
    %v1920 = vunpack.c.l.s4 1966171168
    %v1921 = vunpack.c.0.s8 %v1920
    %v1922 = vlaneseq
    %v1923 = vshrl.u32 %v1922, 7
    %v1924 = vsub.s32 %v1921, %v1923
    %v1925 = vrot.slane %v1903, %v1924
    %v1927 = vunpack.c.l.s4 1966171168
    %v1928 = vunpack.c.0.s8 %v1927
    %v1929 = vlaneseq
    %v1930 = vshrl.u32 %v1929, 7
    %v1931 = vsub.s32 %v1928, %v1930
    %v1932 = vrot.slane %v1904, %v1931
    %v1933 = vcombine.high %v1911, %v1911
    %v1934 = vcombine.high %v1918, %v1918
    %v1935 = vcombine.high %v1925, %v1925
    %v1936 = vcombine.high %v1932, %v1932
    %v1937 = vlaneseq
    %v1938 = vshrl.u32 %v1937, 7
    %v1939 = vsub.s32 0, %v1938
    %v1940 = vrot.slane %v1813, %v1939
    %v1941 = vlaneseq
    %v1942 = vshrl.u32 %v1941, 7
    %v1943 = vsub.s32 0, %v1942
    %v1944 = vrot.slane %v1827, %v1943
    %v1945 = vlaneseq
    %v1946 = vshrl.u32 %v1945, 7
    %v1947 = vsub.s32 0, %v1946
    %v1948 = vrot.slane %v1835, %v1947
    %v1949 = vlaneseq
    %v1950 = vshrl.u32 %v1949, 7
    %v1951 = vsub.s32 0, %v1950
    %v1952 = vrot.slane %v1837, %v1951
    %v1953 = vlaneseq
    %v1954 = vshrl.u32 %v1953, 7
    %v1955 = vsub.s32 0, %v1954
    %v1956 = vrot.slane %v1820, %v1955
    %v1957 = vlaneseq
    %v1958 = vshrl.u32 %v1957, 7
    %v1959 = vsub.s32 0, %v1958
    %v1960 = vrot.slane %v1834, %v1959
    %v1961 = vlaneseq
    %v1962 = vshrl.u32 %v1961, 7
    %v1963 = vsub.s32 0, %v1962
    %v1964 = vrot.slane %v1836, %v1963
    %v1965 = vlaneseq
    %v1966 = vshrl.u32 %v1965, 7
    %v1967 = vsub.s32 0, %v1966
    %v1968 = vrot.slane %v1838, %v1967
    %v1969 = vlaneseq
    %v1970 = vshrl.u32 %v1969, 7
    %v1971 = vsub.s32 0, %v1970
    %v1972 = vrot.slane %v1862, %v1971
    %v1973 = vlaneseq
    %v1974 = vshrl.u32 %v1973, 7
    %v1975 = vsub.s32 0, %v1974
    %v1976 = vrot.slane %v1876, %v1975
    %v1977 = vlaneseq
    %v1978 = vshrl.u32 %v1977, 7
    %v1979 = vsub.s32 0, %v1978
    %v1980 = vrot.slane %v1884, %v1979
    %v1981 = vlaneseq
    %v1982 = vshrl.u32 %v1981, 7
    %v1983 = vsub.s32 0, %v1982
    %v1984 = vrot.slane %v1886, %v1983
    %v1985 = vlaneseq
    %v1986 = vshrl.u32 %v1985, 7
    %v1987 = vsub.s32 0, %v1986
    %v1988 = vrot.slane %v1869, %v1987
    %v1989 = vlaneseq
    %v1990 = vshrl.u32 %v1989, 7
    %v1991 = vsub.s32 0, %v1990
    %v1992 = vrot.slane %v1883, %v1991
    %v1993 = vlaneseq
    %v1994 = vshrl.u32 %v1993, 7
    %v1995 = vsub.s32 0, %v1994
    %v1996 = vrot.slane %v1885, %v1995
    %v1997 = vlaneseq
    %v1998 = vshrl.u32 %v1997, 7
    %v1999 = vsub.s32 0, %v1998
    %v2000 = vrot.slane %v1887, %v1999
    %v2001 = vlaneseq
    %v2002 = vshrl.u32 %v2001, 7
    %v2003 = vsub.s32 0, %v2002
    %v2004 = vrot.slane %v1911, %v2003
    %v2005 = vlaneseq
    %v2006 = vshrl.u32 %v2005, 7
    %v2007 = vsub.s32 0, %v2006
    %v2008 = vrot.slane %v1925, %v2007
    %v2009 = vlaneseq
    %v2010 = vshrl.u32 %v2009, 7
    %v2011 = vsub.s32 0, %v2010
    %v2012 = vrot.slane %v1933, %v2011
    %v2013 = vlaneseq
    %v2014 = vshrl.u32 %v2013, 7
    %v2015 = vsub.s32 0, %v2014
    %v2016 = vrot.slane %v1935, %v2015
    %v2017 = vlaneseq
    %v2018 = vshrl.u32 %v2017, 7
    %v2019 = vsub.s32 0, %v2018
    %v2020 = vrot.slane %v1918, %v2019
    %v2021 = vlaneseq
    %v2022 = vshrl.u32 %v2021, 7
    %v2023 = vsub.s32 0, %v2022
    %v2024 = vrot.slane %v1932, %v2023
    %v2025 = vlaneseq
    %v2026 = vshrl.u32 %v2025, 7
    %v2027 = vsub.s32 0, %v2026
    %v2028 = vrot.slane %v1934, %v2027
    %v2029 = vlaneseq
    %v2030 = vshrl.u32 %v2029, 7
    %v2031 = vsub.s32 0, %v2030
    %v2032 = vrot.slane %v1936, %v2031
    %vm2033 = vcmp.eq.s32.totalorder %v1940, %v118
    %vm2034 = vcmp.eq.s32.totalorder %v1944, %v118
    %vm2035 = vcmp.eq.s32.totalorder %v1948, %v118
    %vm2036 = vcmp.eq.s32.totalorder %v1952, %v118
    %vm2037 = vcmp.eq.s32.totalorder %v1956, %v118
    %vm2038 = vcmp.eq.s32.totalorder %v1960, %v118
    %vm2039 = vcmp.eq.s32.totalorder %v1964, %v118
    %vm2040 = vcmp.eq.s32.totalorder %v1968, %v118
    %vm2041 = vcmp.eq.s32.totalorder %v1972, %v118
    %vm2042 = vcmp.eq.s32.totalorder %v1976, %v118
    %vm2043 = vcmp.eq.s32.totalorder %v1980, %v118
    %vm2044 = vcmp.eq.s32.totalorder %v1984, %v118
    %vm2045 = vcmp.eq.s32.totalorder %v1988, %v118
    %vm2046 = vcmp.eq.s32.totalorder %v1992, %v118
    %vm2047 = vcmp.eq.s32.totalorder %v1996, %v118
    %vm2048 = vcmp.eq.s32.totalorder %v2000, %v118
    %vm2049 = vcmp.eq.s32.totalorder %v2004, %v118
    %vm2050 = vcmp.eq.s32.totalorder %v2008, %v118
    %vm2051 = vcmp.eq.s32.totalorder %v2012, %v118
    %vm2052 = vcmp.eq.s32.totalorder %v2016, %v118
    %vm2053 = vcmp.eq.s32.totalorder %v2020, %v118
    %vm2054 = vcmp.eq.s32.totalorder %v2024, %v118
    %vm2055 = vcmp.eq.s32.totalorder %v2028, %v118
    %vm2056 = vcmp.eq.s32.totalorder %v2032, %v118
    %v2060 = vcombine.high %v1222, %v1222
    %v2062 = vunpack.c.l.s4 1966171168
    %v2063 = vunpack.c.0.s8 %v2062
    %v2064 = vlaneseq
    %v2065 = vshrl.u32 %v2064, 7
    %v2066 = vsub.s32 %v2063, %v2065
    %v2067 = vrot.slane %v1222, %v2066
    %v2069 = vunpack.c.l.s4 1966171168
    %v2070 = vunpack.c.0.s8 %v2069
    %v2071 = vlaneseq
    %v2072 = vshrl.u32 %v2071, 7
    %v2073 = vsub.s32 %v2070, %v2072
    %v2074 = vrot.slane %v2060, %v2073
    %v2075 = vcombine.high %v2067, %v2067
    %v2076 = vcombine.high %v2074, %v2074
    %v2078 = vunpack.c.l.s4 1966171168
    %v2079 = vunpack.c.0.s8 %v2078
    %v2080 = vlaneseq
    %v2081 = vshrl.u32 %v2080, 7
    %v2082 = vsub.s32 %v2079, %v2081
    %v2083 = vrot.slane %v2067, %v2082
    %v2085 = vunpack.c.l.s4 1966171168
    %v2086 = vunpack.c.0.s8 %v2085
    %v2087 = vlaneseq
    %v2088 = vshrl.u32 %v2087, 7
    %v2089 = vsub.s32 %v2086, %v2088
    %v2090 = vrot.slane %v2074, %v2089
    %v2092 = vunpack.c.l.s4 1966171168
    %v2093 = vunpack.c.0.s8 %v2092
    %v2094 = vlaneseq
    %v2095 = vshrl.u32 %v2094, 7
    %v2096 = vsub.s32 %v2093, %v2095
    %v2097 = vrot.slane %v2075, %v2096
    %v2099 = vunpack.c.l.s4 1966171168
    %v2100 = vunpack.c.0.s8 %v2099
    %v2101 = vlaneseq
    %v2102 = vshrl.u32 %v2101, 7
    %v2103 = vsub.s32 %v2100, %v2102
    %v2104 = vrot.slane %v2076, %v2103
    %v2105 = vcombine.high %v2083, %v2083
    %v2106 = vcombine.high %v2090, %v2090
    %v2107 = vcombine.high %v2097, %v2097
    %v2108 = vcombine.high %v2104, %v2104
    %v2109 = vcombine.high %v1223, %v1223
    %v2111 = vunpack.c.l.s4 1966171168
    %v2112 = vunpack.c.0.s8 %v2111
    %v2113 = vlaneseq
    %v2114 = vshrl.u32 %v2113, 7
    %v2115 = vsub.s32 %v2112, %v2114
    %v2116 = vrot.slane %v1223, %v2115
    %v2118 = vunpack.c.l.s4 1966171168
    %v2119 = vunpack.c.0.s8 %v2118
    %v2120 = vlaneseq
    %v2121 = vshrl.u32 %v2120, 7
    %v2122 = vsub.s32 %v2119, %v2121
    %v2123 = vrot.slane %v2109, %v2122
    %v2124 = vcombine.high %v2116, %v2116
    %v2125 = vcombine.high %v2123, %v2123
    %v2127 = vunpack.c.l.s4 1966171168
    %v2128 = vunpack.c.0.s8 %v2127
    %v2129 = vlaneseq
    %v2130 = vshrl.u32 %v2129, 7
    %v2131 = vsub.s32 %v2128, %v2130
    %v2132 = vrot.slane %v2116, %v2131
    %v2134 = vunpack.c.l.s4 1966171168
    %v2135 = vunpack.c.0.s8 %v2134
    %v2136 = vlaneseq
    %v2137 = vshrl.u32 %v2136, 7
    %v2138 = vsub.s32 %v2135, %v2137
    %v2139 = vrot.slane %v2123, %v2138
    %v2141 = vunpack.c.l.s4 1966171168
    %v2142 = vunpack.c.0.s8 %v2141
    %v2143 = vlaneseq
    %v2144 = vshrl.u32 %v2143, 7
    %v2145 = vsub.s32 %v2142, %v2144
    %v2146 = vrot.slane %v2124, %v2145
    %v2148 = vunpack.c.l.s4 1966171168
    %v2149 = vunpack.c.0.s8 %v2148
    %v2150 = vlaneseq
    %v2151 = vshrl.u32 %v2150, 7
    %v2152 = vsub.s32 %v2149, %v2151
    %v2153 = vrot.slane %v2125, %v2152
    %v2154 = vcombine.high %v2132, %v2132
    %v2155 = vcombine.high %v2139, %v2139
    %v2156 = vcombine.high %v2146, %v2146
    %v2157 = vcombine.high %v2153, %v2153
    %v2158 = vcombine.high %v1224, %v1224
    %v2160 = vunpack.c.l.s4 1966171168
    %v2161 = vunpack.c.0.s8 %v2160
    %v2162 = vlaneseq
    %v2163 = vshrl.u32 %v2162, 7
    %v2164 = vsub.s32 %v2161, %v2163
    %v2165 = vrot.slane %v1224, %v2164
    %v2167 = vunpack.c.l.s4 1966171168
    %v2168 = vunpack.c.0.s8 %v2167
    %v2169 = vlaneseq
    %v2170 = vshrl.u32 %v2169, 7
    %v2171 = vsub.s32 %v2168, %v2170
    %v2172 = vrot.slane %v2158, %v2171
    %v2173 = vcombine.high %v2165, %v2165
    %v2174 = vcombine.high %v2172, %v2172
    %v2176 = vunpack.c.l.s4 1966171168
    %v2177 = vunpack.c.0.s8 %v2176
    %v2178 = vlaneseq
    %v2179 = vshrl.u32 %v2178, 7
    %v2180 = vsub.s32 %v2177, %v2179
    %v2181 = vrot.slane %v2165, %v2180
    %v2183 = vunpack.c.l.s4 1966171168
    %v2184 = vunpack.c.0.s8 %v2183
    %v2185 = vlaneseq
    %v2186 = vshrl.u32 %v2185, 7
    %v2187 = vsub.s32 %v2184, %v2186
    %v2188 = vrot.slane %v2172, %v2187
    %v2190 = vunpack.c.l.s4 1966171168
    %v2191 = vunpack.c.0.s8 %v2190
    %v2192 = vlaneseq
    %v2193 = vshrl.u32 %v2192, 7
    %v2194 = vsub.s32 %v2191, %v2193
    %v2195 = vrot.slane %v2173, %v2194
    %v2197 = vunpack.c.l.s4 1966171168
    %v2198 = vunpack.c.0.s8 %v2197
    %v2199 = vlaneseq
    %v2200 = vshrl.u32 %v2199, 7
    %v2201 = vsub.s32 %v2198, %v2200
    %v2202 = vrot.slane %v2174, %v2201
    %v2203 = vcombine.high %v2181, %v2181
    %v2204 = vcombine.high %v2188, %v2188
    %v2205 = vcombine.high %v2195, %v2195
    %v2206 = vcombine.high %v2202, %v2202
    %v2207 = vlaneseq
    %v2208 = vshrl.u32 %v2207, 7
    %v2209 = vsub.s32 0, %v2208
    %v2210 = vrot.slane %v2083, %v2209
    %v2211 = vlaneseq
    %v2212 = vshrl.u32 %v2211, 7
    %v2213 = vsub.s32 0, %v2212
    %v2214 = vrot.slane %v2097, %v2213
    %v2215 = vlaneseq
    %v2216 = vshrl.u32 %v2215, 7
    %v2217 = vsub.s32 0, %v2216
    %v2218 = vrot.slane %v2105, %v2217
    %v2219 = vlaneseq
    %v2220 = vshrl.u32 %v2219, 7
    %v2221 = vsub.s32 0, %v2220
    %v2222 = vrot.slane %v2107, %v2221
    %v2223 = vlaneseq
    %v2224 = vshrl.u32 %v2223, 7
    %v2225 = vsub.s32 0, %v2224
    %v2226 = vrot.slane %v2090, %v2225
    %v2227 = vlaneseq
    %v2228 = vshrl.u32 %v2227, 7
    %v2229 = vsub.s32 0, %v2228
    %v2230 = vrot.slane %v2104, %v2229
    %v2231 = vlaneseq
    %v2232 = vshrl.u32 %v2231, 7
    %v2233 = vsub.s32 0, %v2232
    %v2234 = vrot.slane %v2106, %v2233
    %v2235 = vlaneseq
    %v2236 = vshrl.u32 %v2235, 7
    %v2237 = vsub.s32 0, %v2236
    %v2238 = vrot.slane %v2108, %v2237
    %v2239 = vlaneseq
    %v2240 = vshrl.u32 %v2239, 7
    %v2241 = vsub.s32 0, %v2240
    %v2242 = vrot.slane %v2132, %v2241
    %v2243 = vlaneseq
    %v2244 = vshrl.u32 %v2243, 7
    %v2245 = vsub.s32 0, %v2244
    %v2246 = vrot.slane %v2146, %v2245
    %v2247 = vlaneseq
    %v2248 = vshrl.u32 %v2247, 7
    %v2249 = vsub.s32 0, %v2248
    %v2250 = vrot.slane %v2154, %v2249
    %v2251 = vlaneseq
    %v2252 = vshrl.u32 %v2251, 7
    %v2253 = vsub.s32 0, %v2252
    %v2254 = vrot.slane %v2156, %v2253
    %v2255 = vlaneseq
    %v2256 = vshrl.u32 %v2255, 7
    %v2257 = vsub.s32 0, %v2256
    %v2258 = vrot.slane %v2139, %v2257
    %v2259 = vlaneseq
    %v2260 = vshrl.u32 %v2259, 7
    %v2261 = vsub.s32 0, %v2260
    %v2262 = vrot.slane %v2153, %v2261
    %v2263 = vlaneseq
    %v2264 = vshrl.u32 %v2263, 7
    %v2265 = vsub.s32 0, %v2264
    %v2266 = vrot.slane %v2155, %v2265
    %v2267 = vlaneseq
    %v2268 = vshrl.u32 %v2267, 7
    %v2269 = vsub.s32 0, %v2268
    %v2270 = vrot.slane %v2157, %v2269
    %v2271 = vlaneseq
    %v2272 = vshrl.u32 %v2271, 7
    %v2273 = vsub.s32 0, %v2272
    %v2274 = vrot.slane %v2181, %v2273
    %v2275 = vlaneseq
    %v2276 = vshrl.u32 %v2275, 7
    %v2277 = vsub.s32 0, %v2276
    %v2278 = vrot.slane %v2195, %v2277
    %v2279 = vlaneseq
    %v2280 = vshrl.u32 %v2279, 7
    %v2281 = vsub.s32 0, %v2280
    %v2282 = vrot.slane %v2203, %v2281
    %v2283 = vlaneseq
    %v2284 = vshrl.u32 %v2283, 7
    %v2285 = vsub.s32 0, %v2284
    %v2286 = vrot.slane %v2205, %v2285
    %v2287 = vlaneseq
    %v2288 = vshrl.u32 %v2287, 7
    %v2289 = vsub.s32 0, %v2288
    %v2290 = vrot.slane %v2188, %v2289
    %v2291 = vlaneseq
    %v2292 = vshrl.u32 %v2291, 7
    %v2293 = vsub.s32 0, %v2292
    %v2294 = vrot.slane %v2202, %v2293
    %v2295 = vlaneseq
    %v2296 = vshrl.u32 %v2295, 7
    %v2297 = vsub.s32 0, %v2296
    %v2298 = vrot.slane %v2204, %v2297
    %v2299 = vlaneseq
    %v2300 = vshrl.u32 %v2299, 7
    %v2301 = vsub.s32 0, %v2300
    %v2302 = vrot.slane %v2206, %v2301
    %v2327 = vsel %vm2033, %v2210, 0.0
    %v2328 = vsel %vm2034, %v2214, 0.0
    %v2329 = vsel %vm2035, %v2218, 0.0
    %v2330 = vsel %vm2036, %v2222, 0.0
    %v2331 = vsel %vm2037, %v2226, 0.0
    %v2332 = vsel %vm2038, %v2230, 0.0
    %v2333 = vsel %vm2039, %v2234, 0.0
    %v2334 = vsel %vm2040, %v2238, 0.0
    %v2335 = vsel %vm2041, %v2242, 0.0
    %v2336 = vsel %vm2042, %v2246, 0.0
    %v2337 = vsel %vm2043, %v2250, 0.0
    %v2338 = vsel %vm2044, %v2254, 0.0
    %v2339 = vsel %vm2045, %v2258, 0.0
    %v2340 = vsel %vm2046, %v2262, 0.0
    %v2341 = vsel %vm2047, %v2266, 0.0
    %v2342 = vsel %vm2048, %v2270, 0.0
    %v2343 = vsel %vm2049, %v2274, 0.0
    %v2344 = vsel %vm2050, %v2278, 0.0
    %v2345 = vsel %vm2051, %v2282, 0.0
    %v2346 = vsel %vm2052, %v2286, 0.0
    %v2347 = vsel %vm2053, %v2290, 0.0
    %v2348 = vsel %vm2054, %v2294, 0.0
    %v2349 = vsel %vm2055, %v2298, 0.0
    %v2350 = vsel %vm2056, %v2302, 0.0
    %v2351 = vadd.f32 %v2327, %v2328
    %v2352 = vadd.f32 %v2351, %v2329
    %v2353 = vadd.f32 %v2352, %v2330
    %v2354 = vadd.f32 %v2353, %v2331
    %v2355 = vadd.f32 %v2354, %v2332
    %v2356 = vadd.f32 %v2355, %v2333
    %v2357 = vadd.f32 %v2356, %v2334
    %v2358 = vadd.f32 %v2357, %v2335
    %v2359 = vadd.f32 %v2358, %v2336
    %v2360 = vadd.f32 %v2359, %v2337
    %v2361 = vadd.f32 %v2360, %v2338
    %v2362 = vadd.f32 %v2361, %v2339
    %v2363 = vadd.f32 %v2362, %v2340
    %v2364 = vadd.f32 %v2363, %v2341
    %v2365 = vadd.f32 %v2364, %v2342
    %v2366 = vadd.f32 %v2365, %v2343
    %v2367 = vadd.f32 %v2366, %v2344
    %v2368 = vadd.f32 %v2367, %v2345
    %v2369 = vadd.f32 %v2368, %v2346
    %v2370 = vadd.f32 %v2369, %v2347
    %v2371 = vadd.f32 %v2370, %v2348
    %v2372 = vadd.f32 %v2371, %v2349
    %v2373 = vadd.f32 %v2372, %v2350
    %v2377 = vcombine.high %v1233, %v1233
    %v2379 = vunpack.c.l.s4 1966171168
    %v2380 = vunpack.c.0.s8 %v2379
    %v2381 = vlaneseq
    %v2382 = vshrl.u32 %v2381, 7
    %v2383 = vsub.s32 %v2380, %v2382
    %v2384 = vrot.slane %v1233, %v2383
    %v2386 = vunpack.c.l.s4 1966171168
    %v2387 = vunpack.c.0.s8 %v2386
    %v2388 = vlaneseq
    %v2389 = vshrl.u32 %v2388, 7
    %v2390 = vsub.s32 %v2387, %v2389
    %v2391 = vrot.slane %v2377, %v2390
    %v2392 = vcombine.high %v2384, %v2384
    %v2393 = vcombine.high %v2391, %v2391
    %v2395 = vunpack.c.l.s4 1966171168
    %v2396 = vunpack.c.0.s8 %v2395
    %v2397 = vlaneseq
    %v2398 = vshrl.u32 %v2397, 7
    %v2399 = vsub.s32 %v2396, %v2398
    %v2400 = vrot.slane %v2384, %v2399
    %v2402 = vunpack.c.l.s4 1966171168
    %v2403 = vunpack.c.0.s8 %v2402
    %v2404 = vlaneseq
    %v2405 = vshrl.u32 %v2404, 7
    %v2406 = vsub.s32 %v2403, %v2405
    %v2407 = vrot.slane %v2391, %v2406
    %v2409 = vunpack.c.l.s4 1966171168
    %v2410 = vunpack.c.0.s8 %v2409
    %v2411 = vlaneseq
    %v2412 = vshrl.u32 %v2411, 7
    %v2413 = vsub.s32 %v2410, %v2412
    %v2414 = vrot.slane %v2392, %v2413
    %v2416 = vunpack.c.l.s4 1966171168
    %v2417 = vunpack.c.0.s8 %v2416
    %v2418 = vlaneseq
    %v2419 = vshrl.u32 %v2418, 7
    %v2420 = vsub.s32 %v2417, %v2419
    %v2421 = vrot.slane %v2393, %v2420
    %v2422 = vcombine.high %v2400, %v2400
    %v2423 = vcombine.high %v2407, %v2407
    %v2424 = vcombine.high %v2414, %v2414
    %v2425 = vcombine.high %v2421, %v2421
    %v2426 = vcombine.high %v1234, %v1234
    %v2428 = vunpack.c.l.s4 1966171168
    %v2429 = vunpack.c.0.s8 %v2428
    %v2430 = vlaneseq
    %v2431 = vshrl.u32 %v2430, 7
    %v2432 = vsub.s32 %v2429, %v2431
    %v2433 = vrot.slane %v1234, %v2432
    %v2435 = vunpack.c.l.s4 1966171168
    %v2436 = vunpack.c.0.s8 %v2435
    %v2437 = vlaneseq
    %v2438 = vshrl.u32 %v2437, 7
    %v2439 = vsub.s32 %v2436, %v2438
    %v2440 = vrot.slane %v2426, %v2439
    %v2441 = vcombine.high %v2433, %v2433
    %v2442 = vcombine.high %v2440, %v2440
    %v2444 = vunpack.c.l.s4 1966171168
    %v2445 = vunpack.c.0.s8 %v2444
    %v2446 = vlaneseq
    %v2447 = vshrl.u32 %v2446, 7
    %v2448 = vsub.s32 %v2445, %v2447
    %v2449 = vrot.slane %v2433, %v2448
    %v2451 = vunpack.c.l.s4 1966171168
    %v2452 = vunpack.c.0.s8 %v2451
    %v2453 = vlaneseq
    %v2454 = vshrl.u32 %v2453, 7
    %v2455 = vsub.s32 %v2452, %v2454
    %v2456 = vrot.slane %v2440, %v2455
    %v2458 = vunpack.c.l.s4 1966171168
    %v2459 = vunpack.c.0.s8 %v2458
    %v2460 = vlaneseq
    %v2461 = vshrl.u32 %v2460, 7
    %v2462 = vsub.s32 %v2459, %v2461
    %v2463 = vrot.slane %v2441, %v2462
    %v2465 = vunpack.c.l.s4 1966171168
    %v2466 = vunpack.c.0.s8 %v2465
    %v2467 = vlaneseq
    %v2468 = vshrl.u32 %v2467, 7
    %v2469 = vsub.s32 %v2466, %v2468
    %v2470 = vrot.slane %v2442, %v2469
    %v2471 = vcombine.high %v2449, %v2449
    %v2472 = vcombine.high %v2456, %v2456
    %v2473 = vcombine.high %v2463, %v2463
    %v2474 = vcombine.high %v2470, %v2470
    %v2475 = vcombine.high %v1235, %v1235
    %v2477 = vunpack.c.l.s4 1966171168
    %v2478 = vunpack.c.0.s8 %v2477
    %v2479 = vlaneseq
    %v2480 = vshrl.u32 %v2479, 7
    %v2481 = vsub.s32 %v2478, %v2480
    %v2482 = vrot.slane %v1235, %v2481
    %v2484 = vunpack.c.l.s4 1966171168
    %v2485 = vunpack.c.0.s8 %v2484
    %v2486 = vlaneseq
    %v2487 = vshrl.u32 %v2486, 7
    %v2488 = vsub.s32 %v2485, %v2487
    %v2489 = vrot.slane %v2475, %v2488
    %v2490 = vcombine.high %v2482, %v2482
    %v2491 = vcombine.high %v2489, %v2489
    %v2493 = vunpack.c.l.s4 1966171168
    %v2494 = vunpack.c.0.s8 %v2493
    %v2495 = vlaneseq
    %v2496 = vshrl.u32 %v2495, 7
    %v2497 = vsub.s32 %v2494, %v2496
    %v2498 = vrot.slane %v2482, %v2497
    %v2500 = vunpack.c.l.s4 1966171168
    %v2501 = vunpack.c.0.s8 %v2500
    %v2502 = vlaneseq
    %v2503 = vshrl.u32 %v2502, 7
    %v2504 = vsub.s32 %v2501, %v2503
    %v2505 = vrot.slane %v2489, %v2504
    %v2507 = vunpack.c.l.s4 1966171168
    %v2508 = vunpack.c.0.s8 %v2507
    %v2509 = vlaneseq
    %v2510 = vshrl.u32 %v2509, 7
    %v2511 = vsub.s32 %v2508, %v2510
    %v2512 = vrot.slane %v2490, %v2511
    %v2514 = vunpack.c.l.s4 1966171168
    %v2515 = vunpack.c.0.s8 %v2514
    %v2516 = vlaneseq
    %v2517 = vshrl.u32 %v2516, 7
    %v2518 = vsub.s32 %v2515, %v2517
    %v2519 = vrot.slane %v2491, %v2518
    %v2520 = vcombine.high %v2498, %v2498
    %v2521 = vcombine.high %v2505, %v2505
    %v2522 = vcombine.high %v2512, %v2512
    %v2523 = vcombine.high %v2519, %v2519
    %v2524 = vlaneseq
    %v2525 = vshrl.u32 %v2524, 7
    %v2526 = vsub.s32 0, %v2525
    %v2527 = vrot.slane %v2400, %v2526
    %v2528 = vlaneseq
    %v2529 = vshrl.u32 %v2528, 7
    %v2530 = vsub.s32 0, %v2529
    %v2531 = vrot.slane %v2414, %v2530
    %v2532 = vlaneseq
    %v2533 = vshrl.u32 %v2532, 7
    %v2534 = vsub.s32 0, %v2533
    %v2535 = vrot.slane %v2422, %v2534
    %v2536 = vlaneseq
    %v2537 = vshrl.u32 %v2536, 7
    %v2538 = vsub.s32 0, %v2537
    %v2539 = vrot.slane %v2424, %v2538
    %v2540 = vlaneseq
    %v2541 = vshrl.u32 %v2540, 7
    %v2542 = vsub.s32 0, %v2541
    %v2543 = vrot.slane %v2407, %v2542
    %v2544 = vlaneseq
    %v2545 = vshrl.u32 %v2544, 7
    %v2546 = vsub.s32 0, %v2545
    %v2547 = vrot.slane %v2421, %v2546
    %v2548 = vlaneseq
    %v2549 = vshrl.u32 %v2548, 7
    %v2550 = vsub.s32 0, %v2549
    %v2551 = vrot.slane %v2423, %v2550
    %v2552 = vlaneseq
    %v2553 = vshrl.u32 %v2552, 7
    %v2554 = vsub.s32 0, %v2553
    %v2555 = vrot.slane %v2425, %v2554
    %v2556 = vlaneseq
    %v2557 = vshrl.u32 %v2556, 7
    %v2558 = vsub.s32 0, %v2557
    %v2559 = vrot.slane %v2449, %v2558
    %v2560 = vlaneseq
    %v2561 = vshrl.u32 %v2560, 7
    %v2562 = vsub.s32 0, %v2561
    %v2563 = vrot.slane %v2463, %v2562
    %v2564 = vlaneseq
    %v2565 = vshrl.u32 %v2564, 7
    %v2566 = vsub.s32 0, %v2565
    %v2567 = vrot.slane %v2471, %v2566
    %v2568 = vlaneseq
    %v2569 = vshrl.u32 %v2568, 7
    %v2570 = vsub.s32 0, %v2569
    %v2571 = vrot.slane %v2473, %v2570
    %v2572 = vlaneseq
    %v2573 = vshrl.u32 %v2572, 7
    %v2574 = vsub.s32 0, %v2573
    %v2575 = vrot.slane %v2456, %v2574
    %v2576 = vlaneseq
    %v2577 = vshrl.u32 %v2576, 7
    %v2578 = vsub.s32 0, %v2577
    %v2579 = vrot.slane %v2470, %v2578
    %v2580 = vlaneseq
    %v2581 = vshrl.u32 %v2580, 7
    %v2582 = vsub.s32 0, %v2581
    %v2583 = vrot.slane %v2472, %v2582
    %v2584 = vlaneseq
    %v2585 = vshrl.u32 %v2584, 7
    %v2586 = vsub.s32 0, %v2585
    %v2587 = vrot.slane %v2474, %v2586
    %v2588 = vlaneseq
    %v2589 = vshrl.u32 %v2588, 7
    %v2590 = vsub.s32 0, %v2589
    %v2591 = vrot.slane %v2498, %v2590
    %v2592 = vlaneseq
    %v2593 = vshrl.u32 %v2592, 7
    %v2594 = vsub.s32 0, %v2593
    %v2595 = vrot.slane %v2512, %v2594
    %v2596 = vlaneseq
    %v2597 = vshrl.u32 %v2596, 7
    %v2598 = vsub.s32 0, %v2597
    %v2599 = vrot.slane %v2520, %v2598
    %v2600 = vlaneseq
    %v2601 = vshrl.u32 %v2600, 7
    %v2602 = vsub.s32 0, %v2601
    %v2603 = vrot.slane %v2522, %v2602
    %v2604 = vlaneseq
    %v2605 = vshrl.u32 %v2604, 7
    %v2606 = vsub.s32 0, %v2605
    %v2607 = vrot.slane %v2505, %v2606
    %v2608 = vlaneseq
    %v2609 = vshrl.u32 %v2608, 7
    %v2610 = vsub.s32 0, %v2609
    %v2611 = vrot.slane %v2519, %v2610
    %v2612 = vlaneseq
    %v2613 = vshrl.u32 %v2612, 7
    %v2614 = vsub.s32 0, %v2613
    %v2615 = vrot.slane %v2521, %v2614
    %v2616 = vlaneseq
    %v2617 = vshrl.u32 %v2616, 7
    %v2618 = vsub.s32 0, %v2617
    %v2619 = vrot.slane %v2523, %v2618
    %v2644 = vsel %vm2033, %v2527, 0.0
    %v2645 = vsel %vm2034, %v2531, 0.0
    %v2646 = vsel %vm2035, %v2535, 0.0
    %v2647 = vsel %vm2036, %v2539, 0.0
    %v2648 = vsel %vm2037, %v2543, 0.0
    %v2649 = vsel %vm2038, %v2547, 0.0
    %v2650 = vsel %vm2039, %v2551, 0.0
    %v2651 = vsel %vm2040, %v2555, 0.0
    %v2652 = vsel %vm2041, %v2559, 0.0
    %v2653 = vsel %vm2042, %v2563, 0.0
    %v2654 = vsel %vm2043, %v2567, 0.0
    %v2655 = vsel %vm2044, %v2571, 0.0
    %v2656 = vsel %vm2045, %v2575, 0.0
    %v2657 = vsel %vm2046, %v2579, 0.0
    %v2658 = vsel %vm2047, %v2583, 0.0
    %v2659 = vsel %vm2048, %v2587, 0.0
    %v2660 = vsel %vm2049, %v2591, 0.0
    %v2661 = vsel %vm2050, %v2595, 0.0
    %v2662 = vsel %vm2051, %v2599, 0.0
    %v2663 = vsel %vm2052, %v2603, 0.0
    %v2664 = vsel %vm2053, %v2607, 0.0
    %v2665 = vsel %vm2054, %v2611, 0.0
    %v2666 = vsel %vm2055, %v2615, 0.0
    %v2667 = vsel %vm2056, %v2619, 0.0
    %v2668 = vadd.f32 %v2644, %v2645
    %v2669 = vadd.f32 %v2668, %v2646
    %v2670 = vadd.f32 %v2669, %v2647
    %v2671 = vadd.f32 %v2670, %v2648
    %v2672 = vadd.f32 %v2671, %v2649
    %v2673 = vadd.f32 %v2672, %v2650
    %v2674 = vadd.f32 %v2673, %v2651
    %v2675 = vadd.f32 %v2674, %v2652
    %v2676 = vadd.f32 %v2675, %v2653
    %v2677 = vadd.f32 %v2676, %v2654
    %v2678 = vadd.f32 %v2677, %v2655
    %v2679 = vadd.f32 %v2678, %v2656
    %v2680 = vadd.f32 %v2679, %v2657
    %v2681 = vadd.f32 %v2680, %v2658
    %v2682 = vadd.f32 %v2681, %v2659
    %v2683 = vadd.f32 %v2682, %v2660
    %v2684 = vadd.f32 %v2683, %v2661
    %v2685 = vadd.f32 %v2684, %v2662
    %v2686 = vadd.f32 %v2685, %v2663
    %v2687 = vadd.f32 %v2686, %v2664
    %v2688 = vadd.f32 %v2687, %v2665
    %v2689 = vadd.f32 %v2688, %v2666
    %v2690 = vadd.f32 %v2689, %v2667
    %v2691 = vcvt.s32.f32 %v1252
    %v2692 = vmax.f32 %v2691, 1.0
    %v2693 = vrcp.pop %v2692
    %v2694 = vrot.slane %v2373, 4
    %v2695 = vadd.f32 %v2373, %v2694
    %v2696 = vrot.slane %v2695, 2
    %v2697 = vadd.f32 %v2695, %v2696
    %v2698 = vrot.slane %v2697, 1
    %v2699 = vadd.f32 %v2697, %v2698
    %v2700 = vmul.f32 %v2699, %v2693
    %v2701 = vrot.slane %v2690, 4
    %v2702 = vadd.f32 %v2690, %v2701
    %v2703 = vrot.slane %v2702, 2
    %v2704 = vadd.f32 %v2702, %v2703
    %v2705 = vrot.slane %v2704, 1
    %v2706 = vadd.f32 %v2704, %v2705
    %v2707 = vmul.f32 %v2706, %v2693
    %vm2708 = vcmp.lt.s32.totalorder %v118, %v1252
    %v2709 = vsub.f32 %v2373, %v2700
    %v2710 = vsub.f32 %v2690, %v2707
    %v2711 = vand.u32 2147483647, %v2709
    %v2712 = vand.u32 2147483647, %v2710
    %v2713 = vadd.f32 %v2711, %v2712
    %v2714 = vmax.f32 %v2713, 1e-07
    %v2715 = vrcp.pop %v2714
    %v2716 = vmul.f32 %v2710, %v2715
    %vm2717 = vcmp.ge.f32.partialorder %v2709, 0.0
    %vm2718 = vcmp.ge.f32.partialorder %v2710, 0.0
    %v2719 = vsub.f32 2.0, %v2716
    %v2720 = vsub.f32 -2.0, %v2716
    %v2721 = vsel %vm2718, %v2719, %v2720
    %v2722 = vsel %vm2717, %v2716, %v2721
    %v2723 = vsel %vm2708, %v2722, 1e+09
    %v2725 = vcombine.high %v2723, %v2723
    %v2727 = vunpack.c.l.s4 1966171168
    %v2728 = vunpack.c.0.s8 %v2727
    %v2729 = vlaneseq
    %v2730 = vshrl.u32 %v2729, 7
    %v2731 = vsub.s32 %v2728, %v2730
    %v2732 = vrot.slane %v2723, %v2731
    %v2734 = vunpack.c.l.s4 1966171168
    %v2735 = vunpack.c.0.s8 %v2734
    %v2736 = vlaneseq
    %v2737 = vshrl.u32 %v2736, 7
    %v2738 = vsub.s32 %v2735, %v2737
    %v2739 = vrot.slane %v2725, %v2738
    %v2740 = vcombine.high %v2732, %v2732
    %v2741 = vcombine.high %v2739, %v2739
    %v2743 = vunpack.c.l.s4 1966171168
    %v2744 = vunpack.c.0.s8 %v2743
    %v2745 = vlaneseq
    %v2746 = vshrl.u32 %v2745, 7
    %v2747 = vsub.s32 %v2744, %v2746
    %v2748 = vrot.slane %v2732, %v2747
    %v2750 = vunpack.c.l.s4 1966171168
    %v2751 = vunpack.c.0.s8 %v2750
    %v2752 = vlaneseq
    %v2753 = vshrl.u32 %v2752, 7
    %v2754 = vsub.s32 %v2751, %v2753
    %v2755 = vrot.slane %v2739, %v2754
    %v2757 = vunpack.c.l.s4 1966171168
    %v2758 = vunpack.c.0.s8 %v2757
    %v2759 = vlaneseq
    %v2760 = vshrl.u32 %v2759, 7
    %v2761 = vsub.s32 %v2758, %v2760
    %v2762 = vrot.slane %v2740, %v2761
    %v2764 = vunpack.c.l.s4 1966171168
    %v2765 = vunpack.c.0.s8 %v2764
    %v2766 = vlaneseq
    %v2767 = vshrl.u32 %v2766, 7
    %v2768 = vsub.s32 %v2765, %v2767
    %v2769 = vrot.slane %v2741, %v2768
    %v2770 = vcombine.high %v2748, %v2748
    %v2771 = vcombine.high %v2755, %v2755
    %v2772 = vcombine.high %v2762, %v2762
    %v2773 = vcombine.high %v2769, %v2769
    %v2774 = vlaneseq
    %v2775 = vshrl.u32 %v2774, 7
    %v2776 = vsub.s32 0, %v2775
    %v2777 = vrot.slane %v2748, %v2776
    %v2778 = vlaneseq
    %v2779 = vshrl.u32 %v2778, 7
    %v2780 = vsub.s32 0, %v2779
    %v2781 = vrot.slane %v2762, %v2780
    %v2782 = vlaneseq
    %v2783 = vshrl.u32 %v2782, 7
    %v2784 = vsub.s32 0, %v2783
    %v2785 = vrot.slane %v2770, %v2784
    %v2786 = vlaneseq
    %v2787 = vshrl.u32 %v2786, 7
    %v2788 = vsub.s32 0, %v2787
    %v2789 = vrot.slane %v2772, %v2788
    %v2790 = vlaneseq
    %v2791 = vshrl.u32 %v2790, 7
    %v2792 = vsub.s32 0, %v2791
    %v2793 = vrot.slane %v2755, %v2792
    %v2794 = vlaneseq
    %v2795 = vshrl.u32 %v2794, 7
    %v2796 = vsub.s32 0, %v2795
    %v2797 = vrot.slane %v2769, %v2796
    %v2798 = vlaneseq
    %v2799 = vshrl.u32 %v2798, 7
    %v2800 = vsub.s32 0, %v2799
    %v2801 = vrot.slane %v2771, %v2800
    %v2802 = vlaneseq
    %v2803 = vshrl.u32 %v2802, 7
    %v2804 = vsub.s32 0, %v2803
    %v2805 = vrot.slane %v2773, %v2804
    %vm2814 = vcmp.lt.f32.partialorder %v2777, %v2723
    %vm2815 = vcmp.lt.f32.partialorder %v2781, %v2723
    %vm2816 = vcmp.lt.f32.partialorder %v2785, %v2723
    %vm2817 = vcmp.lt.f32.partialorder %v2789, %v2723
    %vm2818 = vcmp.lt.f32.partialorder %v2793, %v2723
    %vm2819 = vcmp.lt.f32.partialorder %v2797, %v2723
    %vm2820 = vcmp.lt.f32.partialorder %v2801, %v2723
    %vm2821 = vcmp.lt.f32.partialorder %v2805, %v2723
    %vm2822 = vcmp.eq.f32.partialorder %v2777, %v2723
    %vm2823 = vcmp.eq.f32.partialorder %v2781, %v2723
    %vm2824 = vcmp.eq.f32.partialorder %v2785, %v2723
    %vm2825 = vcmp.eq.f32.partialorder %v2789, %v2723
    %vm2826 = vcmp.eq.f32.partialorder %v2793, %v2723
    %vm2827 = vcmp.eq.f32.partialorder %v2797, %v2723
    %vm2828 = vcmp.eq.f32.partialorder %v2801, %v2723
    %vm2829 = vcmp.eq.f32.partialorder %v2805, %v2723
    %vm2830 = vmand %vm2822, %vm218
    %vm2831 = vmand %vm2823, %vm219
    %vm2832 = vmand %vm2824, %vm220
    %vm2833 = vmand %vm2825, %vm221
    %vm2834 = vmand %vm2826, %vm1343
    %vm2835 = vmand %vm2827, %vm1346
    %vm2836 = vmand %vm2828, %vm1349
    %vm2837 = vmand %vm2829, %vm1352
    %vm2838 = vmor %vm2814, %vm2830
    %vm2839 = vmor %vm2815, %vm2831
    %vm2840 = vmor %vm2816, %vm2832
    %vm2841 = vmor %vm2817, %vm2833
    %vm2842 = vmor %vm2818, %vm2834
    %vm2843 = vmor %vm2819, %vm2835
    %vm2844 = vmor %vm2820, %vm2836
    %vm2845 = vmor %vm2821, %vm2837
    %v2846 = vsel %vm2838, 1, 0
    %v2847 = vsel %vm2839, 1, 0
    %v2848 = vsel %vm2840, 1, 0
    %v2849 = vsel %vm2841, 1, 0
    %v2850 = vsel %vm2842, 1, 0
    %v2851 = vsel %vm2843, 1, 0
    %v2852 = vsel %vm2844, 1, 0
    %v2853 = vsel %vm2845, 1, 0
    %v2854 = vadd.s32 %v2846, %v2850
    %v2855 = vadd.s32 %v2847, %v2851
    %v2856 = vadd.s32 %v2848, %v2852
    %v2857 = vadd.s32 %v2849, %v2853
    %v2858 = vadd.s32 %v2854, %v2855
    %v2859 = vadd.s32 %v2856, %v2857
    %v2860 = vadd.s32 %v2858, %v2859
    %v2861 = vcombine.high %v2860, %v2860
    %v2863 = vunpack.c.l.s4 1966171168
    %v2864 = vunpack.c.0.s8 %v2863
    %v2865 = vlaneseq
    %v2866 = vshrl.u32 %v2865, 7
    %v2867 = vsub.s32 %v2864, %v2866
    %v2868 = vrot.slane %v2860, %v2867
    %v2870 = vunpack.c.l.s4 1966171168
    %v2871 = vunpack.c.0.s8 %v2870
    %v2872 = vlaneseq
    %v2873 = vshrl.u32 %v2872, 7
    %v2874 = vsub.s32 %v2871, %v2873
    %v2875 = vrot.slane %v2861, %v2874
    %v2876 = vcombine.high %v2868, %v2868
    %v2877 = vcombine.high %v2875, %v2875
    %v2879 = vunpack.c.l.s4 1966171168
    %v2880 = vunpack.c.0.s8 %v2879
    %v2881 = vlaneseq
    %v2882 = vshrl.u32 %v2881, 7
    %v2883 = vsub.s32 %v2880, %v2882
    %v2884 = vrot.slane %v2868, %v2883
    %v2886 = vunpack.c.l.s4 1966171168
    %v2887 = vunpack.c.0.s8 %v2886
    %v2888 = vlaneseq
    %v2889 = vshrl.u32 %v2888, 7
    %v2890 = vsub.s32 %v2887, %v2889
    %v2891 = vrot.slane %v2875, %v2890
    %v2893 = vunpack.c.l.s4 1966171168
    %v2894 = vunpack.c.0.s8 %v2893
    %v2895 = vlaneseq
    %v2896 = vshrl.u32 %v2895, 7
    %v2897 = vsub.s32 %v2894, %v2896
    %v2898 = vrot.slane %v2876, %v2897
    %v2900 = vunpack.c.l.s4 1966171168
    %v2901 = vunpack.c.0.s8 %v2900
    %v2902 = vlaneseq
    %v2903 = vshrl.u32 %v2902, 7
    %v2904 = vsub.s32 %v2901, %v2903
    %v2905 = vrot.slane %v2877, %v2904
    %v2906 = vcombine.high %v2884, %v2884
    %v2907 = vcombine.high %v2891, %v2891
    %v2908 = vcombine.high %v2898, %v2898
    %v2909 = vcombine.high %v2905, %v2905
    %v2910 = vlaneseq
    %v2911 = vshrl.u32 %v2910, 7
    %v2912 = vsub.s32 0, %v2911
    %v2913 = vrot.slane %v2884, %v2912
    %v2914 = vlaneseq
    %v2915 = vshrl.u32 %v2914, 7
    %v2916 = vsub.s32 0, %v2915
    %v2917 = vrot.slane %v2898, %v2916
    %v2918 = vlaneseq
    %v2919 = vshrl.u32 %v2918, 7
    %v2920 = vsub.s32 0, %v2919
    %v2921 = vrot.slane %v2906, %v2920
    %v2922 = vlaneseq
    %v2923 = vshrl.u32 %v2922, 7
    %v2924 = vsub.s32 0, %v2923
    %v2925 = vrot.slane %v2908, %v2924
    %v2926 = vlaneseq
    %v2927 = vshrl.u32 %v2926, 7
    %v2928 = vsub.s32 0, %v2927
    %v2929 = vrot.slane %v2891, %v2928
    %v2930 = vlaneseq
    %v2931 = vshrl.u32 %v2930, 7
    %v2932 = vsub.s32 0, %v2931
    %v2933 = vrot.slane %v2905, %v2932
    %v2934 = vlaneseq
    %v2935 = vshrl.u32 %v2934, 7
    %v2936 = vsub.s32 0, %v2935
    %v2937 = vrot.slane %v2907, %v2936
    %v2938 = vlaneseq
    %v2939 = vshrl.u32 %v2938, 7
    %v2940 = vsub.s32 0, %v2939
    %v2941 = vrot.slane %v2909, %v2940
    %vm2942 = vcmp.eq.s32.totalorder %v2913, %v118
    %vm2943 = vcmp.eq.s32.totalorder %v2917, %v118
    %vm2944 = vcmp.eq.s32.totalorder %v2921, %v118
    %vm2945 = vcmp.eq.s32.totalorder %v2925, %v118
    %vm2946 = vcmp.eq.s32.totalorder %v2929, %v118
    %vm2947 = vcmp.eq.s32.totalorder %v2933, %v118
    %vm2948 = vcmp.eq.s32.totalorder %v2937, %v118
    %vm2949 = vcmp.eq.s32.totalorder %v2941, %v118
    %v2951 = vcombine.high %v2373, %v2373
    %v2953 = vunpack.c.l.s4 1966171168
    %v2954 = vunpack.c.0.s8 %v2953
    %v2955 = vlaneseq
    %v2956 = vshrl.u32 %v2955, 7
    %v2957 = vsub.s32 %v2954, %v2956
    %v2958 = vrot.slane %v2373, %v2957
    %v2960 = vunpack.c.l.s4 1966171168
    %v2961 = vunpack.c.0.s8 %v2960
    %v2962 = vlaneseq
    %v2963 = vshrl.u32 %v2962, 7
    %v2964 = vsub.s32 %v2961, %v2963
    %v2965 = vrot.slane %v2951, %v2964
    %v2966 = vcombine.high %v2958, %v2958
    %v2967 = vcombine.high %v2965, %v2965
    %v2969 = vunpack.c.l.s4 1966171168
    %v2970 = vunpack.c.0.s8 %v2969
    %v2971 = vlaneseq
    %v2972 = vshrl.u32 %v2971, 7
    %v2973 = vsub.s32 %v2970, %v2972
    %v2974 = vrot.slane %v2958, %v2973
    %v2976 = vunpack.c.l.s4 1966171168
    %v2977 = vunpack.c.0.s8 %v2976
    %v2978 = vlaneseq
    %v2979 = vshrl.u32 %v2978, 7
    %v2980 = vsub.s32 %v2977, %v2979
    %v2981 = vrot.slane %v2965, %v2980
    %v2983 = vunpack.c.l.s4 1966171168
    %v2984 = vunpack.c.0.s8 %v2983
    %v2985 = vlaneseq
    %v2986 = vshrl.u32 %v2985, 7
    %v2987 = vsub.s32 %v2984, %v2986
    %v2988 = vrot.slane %v2966, %v2987
    %v2990 = vunpack.c.l.s4 1966171168
    %v2991 = vunpack.c.0.s8 %v2990
    %v2992 = vlaneseq
    %v2993 = vshrl.u32 %v2992, 7
    %v2994 = vsub.s32 %v2991, %v2993
    %v2995 = vrot.slane %v2967, %v2994
    %v2996 = vcombine.high %v2974, %v2974
    %v2997 = vcombine.high %v2981, %v2981
    %v2998 = vcombine.high %v2988, %v2988
    %v2999 = vcombine.high %v2995, %v2995
    %v3000 = vlaneseq
    %v3001 = vshrl.u32 %v3000, 7
    %v3002 = vsub.s32 0, %v3001
    %v3003 = vrot.slane %v2974, %v3002
    %v3004 = vlaneseq
    %v3005 = vshrl.u32 %v3004, 7
    %v3006 = vsub.s32 0, %v3005
    %v3007 = vrot.slane %v2988, %v3006
    %v3008 = vlaneseq
    %v3009 = vshrl.u32 %v3008, 7
    %v3010 = vsub.s32 0, %v3009
    %v3011 = vrot.slane %v2996, %v3010
    %v3012 = vlaneseq
    %v3013 = vshrl.u32 %v3012, 7
    %v3014 = vsub.s32 0, %v3013
    %v3015 = vrot.slane %v2998, %v3014
    %v3016 = vlaneseq
    %v3017 = vshrl.u32 %v3016, 7
    %v3018 = vsub.s32 0, %v3017
    %v3019 = vrot.slane %v2981, %v3018
    %v3020 = vlaneseq
    %v3021 = vshrl.u32 %v3020, 7
    %v3022 = vsub.s32 0, %v3021
    %v3023 = vrot.slane %v2995, %v3022
    %v3024 = vlaneseq
    %v3025 = vshrl.u32 %v3024, 7
    %v3026 = vsub.s32 0, %v3025
    %v3027 = vrot.slane %v2997, %v3026
    %v3028 = vlaneseq
    %v3029 = vshrl.u32 %v3028, 7
    %v3030 = vsub.s32 0, %v3029
    %v3031 = vrot.slane %v2999, %v3030
    %v3040 = vsel %vm2942, %v3003, 0.0
    %v3041 = vsel %vm2943, %v3007, 0.0
    %v3042 = vsel %vm2944, %v3011, 0.0
    %v3043 = vsel %vm2945, %v3015, 0.0
    %v3044 = vsel %vm2946, %v3019, 0.0
    %v3045 = vsel %vm2947, %v3023, 0.0
    %v3046 = vsel %vm2948, %v3027, 0.0
    %v3047 = vsel %vm2949, %v3031, 0.0
    %v3048 = vadd.f32 %v3040, %v3041
    %v3049 = vadd.f32 %v3048, %v3042
    %v3050 = vadd.f32 %v3049, %v3043
    %v3051 = vadd.f32 %v3050, %v3044
    %v3052 = vadd.f32 %v3051, %v3045
    %v3053 = vadd.f32 %v3052, %v3046
    %v3054 = vadd.f32 %v3053, %v3047
    %v3056 = vcombine.high %v2690, %v2690
    %v3058 = vunpack.c.l.s4 1966171168
    %v3059 = vunpack.c.0.s8 %v3058
    %v3060 = vlaneseq
    %v3061 = vshrl.u32 %v3060, 7
    %v3062 = vsub.s32 %v3059, %v3061
    %v3063 = vrot.slane %v2690, %v3062
    %v3065 = vunpack.c.l.s4 1966171168
    %v3066 = vunpack.c.0.s8 %v3065
    %v3067 = vlaneseq
    %v3068 = vshrl.u32 %v3067, 7
    %v3069 = vsub.s32 %v3066, %v3068
    %v3070 = vrot.slane %v3056, %v3069
    %v3071 = vcombine.high %v3063, %v3063
    %v3072 = vcombine.high %v3070, %v3070
    %v3074 = vunpack.c.l.s4 1966171168
    %v3075 = vunpack.c.0.s8 %v3074
    %v3076 = vlaneseq
    %v3077 = vshrl.u32 %v3076, 7
    %v3078 = vsub.s32 %v3075, %v3077
    %v3079 = vrot.slane %v3063, %v3078
    %v3081 = vunpack.c.l.s4 1966171168
    %v3082 = vunpack.c.0.s8 %v3081
    %v3083 = vlaneseq
    %v3084 = vshrl.u32 %v3083, 7
    %v3085 = vsub.s32 %v3082, %v3084
    %v3086 = vrot.slane %v3070, %v3085
    %v3088 = vunpack.c.l.s4 1966171168
    %v3089 = vunpack.c.0.s8 %v3088
    %v3090 = vlaneseq
    %v3091 = vshrl.u32 %v3090, 7
    %v3092 = vsub.s32 %v3089, %v3091
    %v3093 = vrot.slane %v3071, %v3092
    %v3095 = vunpack.c.l.s4 1966171168
    %v3096 = vunpack.c.0.s8 %v3095
    %v3097 = vlaneseq
    %v3098 = vshrl.u32 %v3097, 7
    %v3099 = vsub.s32 %v3096, %v3098
    %v3100 = vrot.slane %v3072, %v3099
    %v3101 = vcombine.high %v3079, %v3079
    %v3102 = vcombine.high %v3086, %v3086
    %v3103 = vcombine.high %v3093, %v3093
    %v3104 = vcombine.high %v3100, %v3100
    %v3105 = vlaneseq
    %v3106 = vshrl.u32 %v3105, 7
    %v3107 = vsub.s32 0, %v3106
    %v3108 = vrot.slane %v3079, %v3107
    %v3109 = vlaneseq
    %v3110 = vshrl.u32 %v3109, 7
    %v3111 = vsub.s32 0, %v3110
    %v3112 = vrot.slane %v3093, %v3111
    %v3113 = vlaneseq
    %v3114 = vshrl.u32 %v3113, 7
    %v3115 = vsub.s32 0, %v3114
    %v3116 = vrot.slane %v3101, %v3115
    %v3117 = vlaneseq
    %v3118 = vshrl.u32 %v3117, 7
    %v3119 = vsub.s32 0, %v3118
    %v3120 = vrot.slane %v3103, %v3119
    %v3121 = vlaneseq
    %v3122 = vshrl.u32 %v3121, 7
    %v3123 = vsub.s32 0, %v3122
    %v3124 = vrot.slane %v3086, %v3123
    %v3125 = vlaneseq
    %v3126 = vshrl.u32 %v3125, 7
    %v3127 = vsub.s32 0, %v3126
    %v3128 = vrot.slane %v3100, %v3127
    %v3129 = vlaneseq
    %v3130 = vshrl.u32 %v3129, 7
    %v3131 = vsub.s32 0, %v3130
    %v3132 = vrot.slane %v3102, %v3131
    %v3133 = vlaneseq
    %v3134 = vshrl.u32 %v3133, 7
    %v3135 = vsub.s32 0, %v3134
    %v3136 = vrot.slane %v3104, %v3135
    %v3145 = vsel %vm2942, %v3108, 0.0
    %v3146 = vsel %vm2943, %v3112, 0.0
    %v3147 = vsel %vm2944, %v3116, 0.0
    %v3148 = vsel %vm2945, %v3120, 0.0
    %v3149 = vsel %vm2946, %v3124, 0.0
    %v3150 = vsel %vm2947, %v3128, 0.0
    %v3151 = vsel %vm2948, %v3132, 0.0
    %v3152 = vsel %vm2949, %v3136, 0.0
    %v3153 = vadd.f32 %v3145, %v3146
    %v3154 = vadd.f32 %v3153, %v3147
    %v3155 = vadd.f32 %v3154, %v3148
    %v3156 = vadd.f32 %v3155, %v3149
    %v3157 = vadd.f32 %v3156, %v3150
    %v3158 = vadd.f32 %v3157, %v3151
    %v3159 = vadd.f32 %v3158, %v3152
    %v3160 = vlaneseq
    %v3161 = vshrl.u32 %v3160, 7
    %v3162 = vsub.s32 0, %v3161
    %v3163 = vrot.slane %v3054, %v3162
    %v3164 = vsel %vm2708, %v3054, %v3163
    %v3165 = vlaneseq
    %v3166 = vshrl.u32 %v3165, 7
    %v3167 = vsub.s32 0, %v3166
    %v3168 = vrot.slane %v3159, %v3167
    %v3169 = vsel %vm2708, %v3159, %v3168
    %v3171 = vrot.slane %v3164, 1
    %vm3173 = vcmask 1046528
    %v3174 = vsel %vm3173, %v3171, %v3171
    %v3176 = vrot.slane %v3169, 1
    %v3178 = vsel %vm3173, %v3176, %v3176
    %v3179 = vmul.f32 %v3164, %v3178
    %v3180 = vmul.f32 %v3174, %v3169
    %v3181 = vsub.f32 %v3179, %v3180
    %v3182 = vrot.slane %v3181, 4
    %v3183 = vadd.f32 %v3181, %v3182
    %v3184 = vrot.slane %v3183, 2
    %v3185 = vadd.f32 %v3183, %v3184
    %v3186 = vrot.slane %v3185, 1
    %v3187 = vadd.f32 %v3185, %v3186
    %v3188 = vand.u32 2147483647, %v3187
    %v3189 = vmul.f32 %v3188, 0.5
    %vm3190 = vcmp.ge.s32.totalorder %v1252, 3
    %v3191 = vsel %vm3190, %v3189, 0.0
    %v3192 = vadd.f32 %v546, %v547
    %v3193 = vsub.f32 %v3192, %v3191
    %vm3194 = vcmp.gt.f32.partialorder %v3193, 1e-09
    %v3195 = vmax.f32 %v3193, 1e-09
    %v3196 = vrcp.pop %v3195
    %v3197 = vmul.f32 %v3191, %v3196
    %v3198 = vsel %vm3194, %v3197, 0.0
    %3199 = vst [vmem:[#allocation5] sm:$0x1] %v3198
    // Predicated region
    $region10: #{tpu_custom_call.1} parent=1 // pred_check
      _
    $region11: #{tpu_custom_call.1} parent=1 // pred_check_branch
      %3201 = sbr.rel (0) target = $region13
    $region12: #{tpu_custom_call.1} parent=1 // pred_region
      %s3203 = ssub.s32 16, 16
      %3204 = vsyncadd [#allocation4], %s3203
      %s3206 = sshll.u32 [#allocation5], 4
      %s3207 = int_to_ptr.vmem [resolvable:$true] %s3206
      %3209 = dma.vmem_to_hbm [thread:$0]  %s3207, 16, %s1, [#allocation4]
    $region13: #{tpu_custom_call.1} parent=1 // pred_fallthru
      _
    // Predicated region
    $region14: #{tpu_custom_call.1} parent=1 // pred_check
      _
    $region15: #{tpu_custom_call.1} parent=1 // pred_check_branch
      %3211 = sbr.rel (0) target = $region17
    $region16: #{tpu_custom_call.1} parent=1 // pred_region
      %3212 = dma.done [#allocation4], 16
    $region17: #{tpu_custom_call.1} parent=1 // pred_fallthru
      _
    %3213 = vsyncpa [#allocation3], 1
    %3214 = vsyncpa [#allocation4], 1

</llo_original>
